<compile_context>
chip_gen: v7x
topology: tpu7x:2x2x1
jax: 0.10.0
libtpu: 0.0.40
codegen_flags: <defaults>
</compile_context>

<pallas_src>
from functools import partial

import jax
import jax.numpy as jnp
from jax.experimental import pallas as pl
from jax.experimental.pallas import tpu as pltpu


def embed_pool_linear_kernel(xT_ref, g_ref, b_ref, out_ref):
    # xT_ref : (S, TB)  int32  — token ids, batch on lanes (lane-dense tile)
    # g_ref  : (S, O_pad, V_pad) f32 — folded params W[o,s] * table_mean[v] (resident)
    # b_ref  : (O_pad, 1) f32  — bias (resident)
    # out_ref: (O_pad, TB) f32 — lane-dense output tile (unmasked stores)
    seq_len, tb = xT_ref.shape
    v_pad = g_ref.shape[-1]

    # Bias broadcast hoisted out of the loop (JAX does not CSE broadcast_in_dim).
    acc = jnp.broadcast_to(b_ref[...], out_ref.shape)          # (O_pad, TB)

    for s in range(seq_len):  # S = 8, fully unrolled at trace time
        ids = xT_ref[pl.ds(s, 1), :]                            # (1, TB) int32
        # One-hot over the (128-entry) vocab: VPU compares, V on sublanes.
        onehot = (
            jax.lax.broadcasted_iota(jnp.int32, (v_pad, tb), 0) == ids
        ).astype(jnp.float32)                                   # (V_pad, TB)
        # Gather + pool + linear for position s in one MXU matmul
        # (K = V_pad = 128 deep, N = TB lanes — a reasonable MXU shape).
        acc = acc + jnp.dot(
            g_ref[s], onehot,
            preferred_element_type=jnp.float32,
            precision=jax.lax.Precision.HIGHEST,
        )
    out_ref[...] = acc


def prepare_params(emb_table, w, b):
    """One-time parameter transform (outside the hot path).

    Folds AvgPool2d((1, D)) into the embedding table (mean over D) and folds
    that table with the linear weight into G[s, o, v] = W[o, s] * table_mean[v],
    padded to sublane/lane-aligned shapes.
    """
    out_dim, seq_len = w.shape
    vocab = emb_table.shape[0]
    o_pad = pl.cdiv(out_dim, 8) * 8          # sublane-aligned output rows (4 -> 8)
    v_pad = pl.cdiv(vocab, 128) * 128        # lane-aligned vocab (50 -> 128)

    table_mean = jnp.mean(emb_table.astype(jnp.float32), axis=1)              # (V,)
    tbl = jnp.zeros((v_pad,), jnp.float32).at[:vocab].set(table_mean)          # (V_pad,)
    w_pad = jnp.zeros((o_pad, seq_len), jnp.float32).at[:out_dim].set(
        w.astype(jnp.float32))                                                 # (O_pad, S)

    g = w_pad.T[:, :, None] * tbl[None, None, :]                               # (S, O_pad, V_pad)
    b_pad = jnp.zeros((o_pad, 1), jnp.float32).at[:out_dim, 0].set(
        b.astype(jnp.float32))                                                 # (O_pad, 1)
    return g, b_pad


@partial(jax.jit, static_argnums=(3,))
def linear_forward(x_idx, g, b_pad, out_dim):
    """x_idx: (B, S) int32 token indices. Returns (B, out_dim) f32."""
    B, S = x_idx.shape
    assert g.shape[0] == S
    o_pad, v_pad = g.shape[1], g.shape[2]

    LANE = 128
    # Lane-aligned batch tile, up to 1024 rows per grid step (review: 512-2048),
    # chosen so the grid has >=2 steps once B exceeds one lane-tile (v7x has two
    # TensorCores and only shards "parallel" axes).
    block_b = min(1024, max(LANE, pl.cdiv(B, 2 * LANE) * LANE))
    b_padded = pl.cdiv(B, block_b) * block_b

    # Single cheap layout op: transpose + zero-pad token ids so batch sits on
    # lanes (padded columns use id 0 — a valid index; results are sliced off).
    xT = jnp.zeros((S, b_padded), jnp.int32).at[:, :B].set(x_idx.T.astype(jnp.int32))

    out_t = pl.pallas_call(
        embed_pool_linear_kernel,
        out_shape=jax.ShapeDtypeStruct((o_pad, b_padded), jnp.float32),
        grid_spec=pltpu.PrefetchScalarGridSpec(
            num_scalar_prefetch=0,
            grid=(b_padded // block_b,),
            in_specs=[
                pl.BlockSpec((S, block_b), lambda i: (0, i)),      # token ids, lane-dense
                pl.BlockSpec(g.shape, lambda i: (0, 0, 0)),        # folded params, resident
                pl.BlockSpec(b_pad.shape, lambda i: (0, 0)),       # bias, resident
            ],
            out_specs=pl.BlockSpec((o_pad, block_b), lambda i: (0, i)),
        ),
        compiler_params=pltpu.CompilerParams(
            dimension_semantics=("parallel",),   # batch tiles shard across TCs on v7x
        ),
    )(xT, g, b_pad)

    # Tiny layout plumbing outside the kernel: (O_pad, B_pad) -> (B, out_dim).
    return out_t[:out_dim, :B].T


if __name__ == "__main__":
    # Small shapes consistent with the module's forward.
    vocab_size = 50
    embedding_dim = 32
    seq_length = 8
    output_dim = 4
    batch = 2

    key = jax.random.PRNGKey(0)
    k_emb, k_w, k_b, k_x = jax.random.split(key, 4)

    # Deterministic parameter init (shapes per module __init__).
    emb_table = jax.random.normal(k_emb, (vocab_size, embedding_dim), dtype=jnp.float32)
    bound = 1.0 / (seq_length ** 0.5)
    w = jax.random.uniform(k_w, (output_dim, seq_length), minval=-bound, maxval=bound,
                           dtype=jnp.float32)
    b = jax.random.uniform(k_b, (output_dim,), minval=-bound, maxval=bound,
                           dtype=jnp.float32)

    # Token indices.
    x = jax.random.randint(k_x, (batch, seq_length), 0, vocab_size, dtype=jnp.int32)

    # One-time parameter prep (outside the hot path).
    g, b_pad = prepare_params(emb_table, w, b)

    out = linear_forward(x, g, b_pad, output_dim)
    out = jax.block_until_ready(out)

    # Reference: exact semantics of the PyTorch module (eval-mode dropout = identity),
    # computed fully elementwise in f32 to avoid any MXU-precision ambiguity.
    pooled_ref = jnp.mean(jnp.take(emb_table, x, axis=0), axis=-1)             # (B, S)
    ref = jnp.sum(pooled_ref[:, None, :] * w[None, :, :], axis=-1) + b          # (B, O)

    assert out.shape == (batch, output_dim)
    assert jnp.allclose(out, ref, atol=1e-5, rtol=1e-5), (out, ref)

    print("KERNEL_OK")
</pallas_src>

<mosaic_0001>
module attributes {stable_mosaic.version = 11 : i64} {
  func.func @embed_pool_linear_kernel(%arg0: i32, %arg1: memref<8x128xi32, #tpu.memory_space<vmem>>, %arg2: memref<8x8x128xf32, #tpu.memory_space<vmem>>, %arg3: memref<8x1xf32, #tpu.memory_space<vmem>>, %arg4: memref<8x128xf32, #tpu.memory_space<vmem>>) attributes {dimension_semantics = [#tpu.dimension_semantics<parallel>], iteration_bounds = array<i64: 1>, scalar_prefetch = 0 : i64, scratch_operands = 0 : i64, tpu.core_type = #tpu.core_type<tc>, window_params = [{transform_indices = @transform_0, window_bounds = array<i64: 8, 128>}, {pipeline_mode = #tpu.pipeline_mode<synchronous>, transform_indices = @transform_1, window_bounds = array<i64: 8, 8, 128>}, {pipeline_mode = #tpu.pipeline_mode<synchronous>, transform_indices = @transform_2, window_bounds = array<i64: 8, 1>}, {transform_indices = @transform_3, window_bounds = array<i64: 8, 128>}]} {
    %c0 = arith.constant 0 : index
    %c0_0 = arith.constant 0 : index
    %0 = vector.load %arg3[%c0, %c0_0] : memref<8x1xf32, #tpu.memory_space<vmem>>, vector<8x1xf32>
    %1 = vector.shape_cast %0 : vector<8x1xf32> to vector<8x1xf32>
    %2 = vector.broadcast %1 : vector<8x1xf32> to vector<8x128xf32>
    %c0_1 = arith.constant 0 : index
    %c0_2 = arith.constant 0 : index
    %3 = vector.load %arg1[%c0_1, %c0_2] : memref<8x128xi32, #tpu.memory_space<vmem>>, vector<1x128xi32>
    %4 = tpu.iota {dimensions = array<i32: 0>} : vector<128x128xi32>
    %5 = vector.broadcast %3 : vector<1x128xi32> to vector<128x128xi32>
    %6 = arith.cmpi eq, %4, %5 : vector<128x128xi32>
    %7 = arith.extui %6 : vector<128x128xi1> to vector<128x128xi32>
    %8 = arith.sitofp %7 : vector<128x128xi32> to vector<128x128xf32>
    %c0_3 = arith.constant 0 : index
    %c0_4 = arith.constant 0 : index
    %c0_5 = arith.constant 0 : index
    %9 = vector.load %arg2[%c0_3, %c0_4, %c0_5] : memref<8x8x128xf32, #tpu.memory_space<vmem>>, vector<1x8x128xf32>
    %10 = vector.shape_cast %9 : vector<1x8x128xf32> to vector<8x128xf32>
    %cst = arith.constant dense<0.000000e+00> : vector<8x128xf32>
    %11 = tpu.matmul %10, %8, %cst {dimension_numbers = #tpu.dot_dimension_numbers<[1], [0], [0], [1], [0, 0, 1, 1], [], []>, precision = #tpu.contract_precision<fp32>} : vector<8x128xf32>, vector<128x128xf32>, vector<8x128xf32> -> vector<8x128xf32>
    %12 = arith.addf %2, %11 : vector<8x128xf32>
    %c1 = arith.constant 1 : index
    %c0_6 = arith.constant 0 : index
    %13 = vector.load %arg1[%c1, %c0_6] : memref<8x128xi32, #tpu.memory_space<vmem>>, vector<1x128xi32>
    %14 = tpu.iota {dimensions = array<i32: 0>} : vector<128x128xi32>
    %15 = vector.broadcast %13 : vector<1x128xi32> to vector<128x128xi32>
    %16 = arith.cmpi eq, %14, %15 : vector<128x128xi32>
    %17 = arith.extui %16 : vector<128x128xi1> to vector<128x128xi32>
    %18 = arith.sitofp %17 : vector<128x128xi32> to vector<128x128xf32>
    %c1_7 = arith.constant 1 : index
    %c0_8 = arith.constant 0 : index
    %c0_9 = arith.constant 0 : index
    %19 = vector.load %arg2[%c1_7, %c0_8, %c0_9] : memref<8x8x128xf32, #tpu.memory_space<vmem>>, vector<1x8x128xf32>
    %20 = vector.shape_cast %19 : vector<1x8x128xf32> to vector<8x128xf32>
    %cst_10 = arith.constant dense<0.000000e+00> : vector<8x128xf32>
    %21 = tpu.matmul %20, %18, %cst_10 {dimension_numbers = #tpu.dot_dimension_numbers<[1], [0], [0], [1], [0, 0, 1, 1], [], []>, precision = #tpu.contract_precision<fp32>} : vector<8x128xf32>, vector<128x128xf32>, vector<8x128xf32> -> vector<8x128xf32>
    %22 = arith.addf %12, %21 : vector<8x128xf32>
    %c2 = arith.constant 2 : index
    %c0_11 = arith.constant 0 : index
    %23 = vector.load %arg1[%c2, %c0_11] : memref<8x128xi32, #tpu.memory_space<vmem>>, vector<1x128xi32>
    %24 = tpu.iota {dimensions = array<i32: 0>} : vector<128x128xi32>
    %25 = vector.broadcast %23 : vector<1x128xi32> to vector<128x128xi32>
    %26 = arith.cmpi eq, %24, %25 : vector<128x128xi32>
    %27 = arith.extui %26 : vector<128x128xi1> to vector<128x128xi32>
    %28 = arith.sitofp %27 : vector<128x128xi32> to vector<128x128xf32>
    %c2_12 = arith.constant 2 : index
    %c0_13 = arith.constant 0 : index
    %c0_14 = arith.constant 0 : index
    %29 = vector.load %arg2[%c2_12, %c0_13, %c0_14] : memref<8x8x128xf32, #tpu.memory_space<vmem>>, vector<1x8x128xf32>
    %30 = vector.shape_cast %29 : vector<1x8x128xf32> to vector<8x128xf32>
    %cst_15 = arith.constant dense<0.000000e+00> : vector<8x128xf32>
    %31 = tpu.matmul %30, %28, %cst_15 {dimension_numbers = #tpu.dot_dimension_numbers<[1], [0], [0], [1], [0, 0, 1, 1], [], []>, precision = #tpu.contract_precision<fp32>} : vector<8x128xf32>, vector<128x128xf32>, vector<8x128xf32> -> vector<8x128xf32>
    %32 = arith.addf %22, %31 : vector<8x128xf32>
    %c3 = arith.constant 3 : index
    %c0_16 = arith.constant 0 : index
    %33 = vector.load %arg1[%c3, %c0_16] : memref<8x128xi32, #tpu.memory_space<vmem>>, vector<1x128xi32>
    %34 = tpu.iota {dimensions = array<i32: 0>} : vector<128x128xi32>
    %35 = vector.broadcast %33 : vector<1x128xi32> to vector<128x128xi32>
    %36 = arith.cmpi eq, %34, %35 : vector<128x128xi32>
    %37 = arith.extui %36 : vector<128x128xi1> to vector<128x128xi32>
    %38 = arith.sitofp %37 : vector<128x128xi32> to vector<128x128xf32>
    %c3_17 = arith.constant 3 : index
    %c0_18 = arith.constant 0 : index
    %c0_19 = arith.constant 0 : index
    %39 = vector.load %arg2[%c3_17, %c0_18, %c0_19] : memref<8x8x128xf32, #tpu.memory_space<vmem>>, vector<1x8x128xf32>
    %40 = vector.shape_cast %39 : vector<1x8x128xf32> to vector<8x128xf32>
    %cst_20 = arith.constant dense<0.000000e+00> : vector<8x128xf32>
    %41 = tpu.matmul %40, %38, %cst_20 {dimension_numbers = #tpu.dot_dimension_numbers<[1], [0], [0], [1], [0, 0, 1, 1], [], []>, precision = #tpu.contract_precision<fp32>} : vector<8x128xf32>, vector<128x128xf32>, vector<8x128xf32> -> vector<8x128xf32>
    %42 = arith.addf %32, %41 : vector<8x128xf32>
    %c4 = arith.constant 4 : index
    %c0_21 = arith.constant 0 : index
    %43 = vector.load %arg1[%c4, %c0_21] : memref<8x128xi32, #tpu.memory_space<vmem>>, vector<1x128xi32>
    %44 = tpu.iota {dimensions = array<i32: 0>} : vector<128x128xi32>
    %45 = vector.broadcast %43 : vector<1x128xi32> to vector<128x128xi32>
    %46 = arith.cmpi eq, %44, %45 : vector<128x128xi32>
    %47 = arith.extui %46 : vector<128x128xi1> to vector<128x128xi32>
    %48 = arith.sitofp %47 : vector<128x128xi32> to vector<128x128xf32>
    %c4_22 = arith.constant 4 : index
    %c0_23 = arith.constant 0 : index
    %c0_24 = arith.constant 0 : index
    %49 = vector.load %arg2[%c4_22, %c0_23, %c0_24] : memref<8x8x128xf32, #tpu.memory_space<vmem>>, vector<1x8x128xf32>
    %50 = vector.shape_cast %49 : vector<1x8x128xf32> to vector<8x128xf32>
    %cst_25 = arith.constant dense<0.000000e+00> : vector<8x128xf32>
    %51 = tpu.matmul %50, %48, %cst_25 {dimension_numbers = #tpu.dot_dimension_numbers<[1], [0], [0], [1], [0, 0, 1, 1], [], []>, precision = #tpu.contract_precision<fp32>} : vector<8x128xf32>, vector<128x128xf32>, vector<8x128xf32> -> vector<8x128xf32>
    %52 = arith.addf %42, %51 : vector<8x128xf32>
    %c5 = arith.constant 5 : index
    %c0_26 = arith.constant 0 : index
    %53 = vector.load %arg1[%c5, %c0_26] : memref<8x128xi32, #tpu.memory_space<vmem>>, vector<1x128xi32>
    %54 = tpu.iota {dimensions = array<i32: 0>} : vector<128x128xi32>
    %55 = vector.broadcast %53 : vector<1x128xi32> to vector<128x128xi32>
    %56 = arith.cmpi eq, %54, %55 : vector<128x128xi32>
    %57 = arith.extui %56 : vector<128x128xi1> to vector<128x128xi32>
    %58 = arith.sitofp %57 : vector<128x128xi32> to vector<128x128xf32>
    %c5_27 = arith.constant 5 : index
    %c0_28 = arith.constant 0 : index
    %c0_29 = arith.constant 0 : index
    %59 = vector.load %arg2[%c5_27, %c0_28, %c0_29] : memref<8x8x128xf32, #tpu.memory_space<vmem>>, vector<1x8x128xf32>
    %60 = vector.shape_cast %59 : vector<1x8x128xf32> to vector<8x128xf32>
    %cst_30 = arith.constant dense<0.000000e+00> : vector<8x128xf32>
    %61 = tpu.matmul %60, %58, %cst_30 {dimension_numbers = #tpu.dot_dimension_numbers<[1], [0], [0], [1], [0, 0, 1, 1], [], []>, precision = #tpu.contract_precision<fp32>} : vector<8x128xf32>, vector<128x128xf32>, vector<8x128xf32> -> vector<8x128xf32>
    %62 = arith.addf %52, %61 : vector<8x128xf32>
    %c6 = arith.constant 6 : index
    %c0_31 = arith.constant 0 : index
    %63 = vector.load %arg1[%c6, %c0_31] : memref<8x128xi32, #tpu.memory_space<vmem>>, vector<1x128xi32>
    %64 = tpu.iota {dimensions = array<i32: 0>} : vector<128x128xi32>
    %65 = vector.broadcast %63 : vector<1x128xi32> to vector<128x128xi32>
    %66 = arith.cmpi eq, %64, %65 : vector<128x128xi32>
    %67 = arith.extui %66 : vector<128x128xi1> to vector<128x128xi32>
    %68 = arith.sitofp %67 : vector<128x128xi32> to vector<128x128xf32>
    %c6_32 = arith.constant 6 : index
    %c0_33 = arith.constant 0 : index
    %c0_34 = arith.constant 0 : index
    %69 = vector.load %arg2[%c6_32, %c0_33, %c0_34] : memref<8x8x128xf32, #tpu.memory_space<vmem>>, vector<1x8x128xf32>
    %70 = vector.shape_cast %69 : vector<1x8x128xf32> to vector<8x128xf32>
    %cst_35 = arith.constant dense<0.000000e+00> : vector<8x128xf32>
    %71 = tpu.matmul %70, %68, %cst_35 {dimension_numbers = #tpu.dot_dimension_numbers<[1], [0], [0], [1], [0, 0, 1, 1], [], []>, precision = #tpu.contract_precision<fp32>} : vector<8x128xf32>, vector<128x128xf32>, vector<8x128xf32> -> vector<8x128xf32>
    %72 = arith.addf %62, %71 : vector<8x128xf32>
    %c7 = arith.constant 7 : index
    %c0_36 = arith.constant 0 : index
    %73 = vector.load %arg1[%c7, %c0_36] : memref<8x128xi32, #tpu.memory_space<vmem>>, vector<1x128xi32>
    %74 = tpu.iota {dimensions = array<i32: 0>} : vector<128x128xi32>
    %75 = vector.broadcast %73 : vector<1x128xi32> to vector<128x128xi32>
    %76 = arith.cmpi eq, %74, %75 : vector<128x128xi32>
    %77 = arith.extui %76 : vector<128x128xi1> to vector<128x128xi32>
    %78 = arith.sitofp %77 : vector<128x128xi32> to vector<128x128xf32>
    %c7_37 = arith.constant 7 : index
    %c0_38 = arith.constant 0 : index
    %c0_39 = arith.constant 0 : index
    %79 = vector.load %arg2[%c7_37, %c0_38, %c0_39] : memref<8x8x128xf32, #tpu.memory_space<vmem>>, vector<1x8x128xf32>
    %80 = vector.shape_cast %79 : vector<1x8x128xf32> to vector<8x128xf32>
    %cst_40 = arith.constant dense<0.000000e+00> : vector<8x128xf32>
    %81 = tpu.matmul %80, %78, %cst_40 {dimension_numbers = #tpu.dot_dimension_numbers<[1], [0], [0], [1], [0, 0, 1, 1], [], []>, precision = #tpu.contract_precision<fp32>} : vector<8x128xf32>, vector<128x128xf32>, vector<8x128xf32> -> vector<8x128xf32>
    %82 = arith.addf %72, %81 : vector<8x128xf32>
    %c0_41 = arith.constant 0 : index
    %c0_42 = arith.constant 0 : index
    %83 = vector.load %arg4[%c0_41, %c0_42] : memref<8x128xf32, #tpu.memory_space<vmem>>, vector<8x128xf32>
    tpu.vector_store %arg4[%c0_41, %c0_42], %82 {strides = array<i32>} : memref<8x128xf32, #tpu.memory_space<vmem>>, vector<8x128xf32>,
    return
  }
  func.func @transform_0(%arg0: i32) -> (i32, i32) {
    %c0_i32 = arith.constant 0 : i32
    %c0_i32_0 = arith.constant 0 : i32
    return %c0_i32, %arg0 : i32, i32
  }
  func.func @transform_1(%arg0: i32) -> (i32, i32, i32) {
    %c0_i32 = arith.constant 0 : i32
    %c0_i32_0 = arith.constant 0 : i32
    %c0_i32_1 = arith.constant 0 : i32
    %c0_i32_2 = arith.constant 0 : i32
    return %c0_i32, %c0_i32_0, %c0_i32_1 : i32, i32, i32
  }
  func.func @transform_2(%arg0: i32) -> (i32, i32) {
    %c0_i32 = arith.constant 0 : i32
    %c0_i32_0 = arith.constant 0 : i32
    %c0_i32_1 = arith.constant 0 : i32
    return %c0_i32, %c0_i32_0 : i32, i32
  }
  func.func @transform_3(%arg0: i32) -> (i32, i32) {
    %c0_i32 = arith.constant 0 : i32
    %c0_i32_0 = arith.constant 0 : i32
    return %c0_i32, %arg0 : i32, i32
  }
}

</mosaic_0001>

<llo_original>
// kernel: linear_forward.1
$region0: #{linear_forward.1}
  #allocation0 [shape = 'u32[]', space=smem, size = 0x4, offset = 0x4, fixed_abs, tag = 'smem constant byte address 0x4 - core index']
  #allocation1 [shape = 'u32[144,128]{1,0:T(1,128)}', space=vmem, size = 0x12000, scoped, tag = 'internal scratch']
  %s0 = inlined_call_operand.vmem [shape: s32[8,128], index: 0, kind: input, shape index: {}]
  %s1 = inlined_call_operand.hbm [shape: f32[8,8,128], index: 1, kind: input, shape index: {}]
  %s2 = inlined_call_operand.vmem [shape: f32[8,1], index: 2, kind: input, shape index: {}]
  %s3 = inlined_call_operand.vmem [shape: f32[8,128], index: 3, kind: output, shape index: {}]
  %s4 = sld [smem:[#allocation0]]
  $region26: #{linear_forward.1} parent=0
    _
  %s6 = ssub.s32 1, %s4
  %s7 = scalar_select 0, %s6, %s4
  $region1: #{linear_forward.1} parent=0
    #allocation2 [shape = 'u8[32768]{0}', space=vmem, size = 0x8000, scoped, tag = 'input window, operand 1, single buffered']
    #allocation3 [shape = 's32[1]{0}', space=sflag, size = 0x4, scoped, tag = 'scoped memory for linear_forward.1']
    %8 = vsyncpa [#allocation3], 0
    // Predicated region
    $region2: #{linear_forward.1} parent=1 // pred_check
      _
    $region3: #{linear_forward.1} parent=1 // pred_check_branch
      %10 = sbr.rel (0) target = $region5
    $region4: #{linear_forward.1} parent=1 // pred_region
      _
    $region5: #{linear_forward.1} parent=1 // pred_fallthru
      _
    // Predicated region
    $region6: #{linear_forward.1} parent=1 // pred_check
      _
    $region7: #{linear_forward.1} parent=1 // pred_check_branch
      %12 = sbr.rel (0) target = $region9
    $region8: #{linear_forward.1} parent=1 // pred_region
      %s14 = ssub.s32 1024, 1024
      %15 = vsyncadd [#allocation3], %s14
      %s16 = sshll.u32 [#allocation2], 4
      %s17 = int_to_ptr.vmem [resolvable:$true] %s16
      %22 = dma.hbm_to_vmem [thread:$0]  %s1, 1024, %s17, [#allocation3], 128, 128, 8
    $region9: #{linear_forward.1} parent=1 // pred_fallthru
      _
    // Predicated region
    $region10: #{linear_forward.1} parent=1 // pred_check
      _
    $region11: #{linear_forward.1} parent=1 // pred_check_branch
      %24 = sbr.rel (0) target = $region13
    $region12: #{linear_forward.1} parent=1 // pred_region
      _
    $region13: #{linear_forward.1} parent=1 // pred_fallthru
      _
    // Predicated region
    $region14: #{linear_forward.1} parent=1 // pred_check
      _
    $region15: #{linear_forward.1} parent=1 // pred_check_branch
      %26 = sbr.rel (0) target = $region17
    $region16: #{linear_forward.1} parent=1 // pred_region
      %27 = dma.done [#allocation3], 1024
    $region17: #{linear_forward.1} parent=1 // pred_fallthru
      _
    %v28 = vld [vmem:[%s2] sm:$0xff]
    %30 = vset.pattern.permute.xlu0 0
    %31 = vperm.xlu0 %30, %v28
    %v32 = vpop.permute.xlu0 %31
    %v34 = vld [vmem:[%s0] sm:$0x1]
    %v35 = vlaneseq
    %v36 = vshrl.u32 %v35, 7
    %v37 = vadd.s32 %v36, 8
    %v38 = vadd.s32 %v36, 16
    %v39 = vadd.s32 %v36, 24
    %v40 = vadd.s32 %v36, 32
    %v41 = vadd.s32 %v36, 40
    %v42 = vadd.s32 %v36, 48
    %v43 = vadd.s32 %v36, 56
    %v44 = vadd.s32 %v36, 64
    %v45 = vadd.s32 %v36, 72
    %v46 = vadd.s32 %v36, 80
    %v47 = vadd.s32 %v36, 88
    %v48 = vadd.s32 %v36, 96
    %v49 = vadd.s32 %v36, 104
    %v50 = vadd.s32 %v36, 112
    %v51 = vadd.s32 %v36, 120
    %v52 = vlaneseq
    %v53 = vshrl.u32 %v52, 7
    %v54 = vsub.s32 0, %v53
    %v55 = vrot.slane %v34, %v54
    %vm56 = vcmp.eq.s32.totalorder %v36, %v55
    %vm57 = vcmp.eq.s32.totalorder %v37, %v55
    %vm58 = vcmp.eq.s32.totalorder %v38, %v55
    %vm59 = vcmp.eq.s32.totalorder %v39, %v55
    %vm60 = vcmp.eq.s32.totalorder %v40, %v55
    %vm61 = vcmp.eq.s32.totalorder %v41, %v55
    %vm62 = vcmp.eq.s32.totalorder %v42, %v55
    %vm63 = vcmp.eq.s32.totalorder %v43, %v55
    %vm64 = vcmp.eq.s32.totalorder %v44, %v55
    %vm65 = vcmp.eq.s32.totalorder %v45, %v55
    %vm66 = vcmp.eq.s32.totalorder %v46, %v55
    %vm67 = vcmp.eq.s32.totalorder %v47, %v55
    %vm68 = vcmp.eq.s32.totalorder %v48, %v55
    %vm69 = vcmp.eq.s32.totalorder %v49, %v55
    %vm70 = vcmp.eq.s32.totalorder %v50, %v55
    %vm71 = vcmp.eq.s32.totalorder %v51, %v55
    %v72 = vsel %vm56, 1, 0
    %v73 = vsel %vm57, 1, 0
    %v74 = vsel %vm58, 1, 0
    %v75 = vsel %vm59, 1, 0
    %v76 = vsel %vm60, 1, 0
    %v77 = vsel %vm61, 1, 0
    %v78 = vsel %vm62, 1, 0
    %v79 = vsel %vm63, 1, 0
    %v80 = vsel %vm64, 1, 0
    %v81 = vsel %vm65, 1, 0
    %v82 = vsel %vm66, 1, 0
    %v83 = vsel %vm67, 1, 0
    %v84 = vsel %vm68, 1, 0
    %v85 = vsel %vm69, 1, 0
    %v86 = vsel %vm70, 1, 0
    %v87 = vsel %vm71, 1, 0
    %v88 = vcvt.s32.f32 %v72
    %v89 = vcvt.s32.f32 %v73
    %v90 = vcvt.s32.f32 %v74
    %v91 = vcvt.s32.f32 %v75
    %v92 = vcvt.s32.f32 %v76
    %v93 = vcvt.s32.f32 %v77
    %v94 = vcvt.s32.f32 %v78
    %v95 = vcvt.s32.f32 %v79
    %v96 = vcvt.s32.f32 %v80
    %v97 = vcvt.s32.f32 %v81
    %v98 = vcvt.s32.f32 %v82
    %v99 = vcvt.s32.f32 %v83
    %v100 = vcvt.s32.f32 %v84
    %v101 = vcvt.s32.f32 %v85
    %v102 = vcvt.s32.f32 %v86
    %v103 = vcvt.s32.f32 %v87
    %v104 = vld [vmem:[#allocation2] sm:$0xff]
    %105 = vmatprep.subr.mxu0 0.0
    %v106 = vand.u32 %v88, 4294901760
    %107 = vmatpush1.msra.mxu0 %v106
    %108 = vmatprep.subr.mxu0 0.0
    %v109 = vand.u32 %v89, 4294901760
    %110 = vmatpush1.msra.mxu0 %v109
    %111 = vmatprep.subr.mxu0 0.0
    %v112 = vand.u32 %v90, 4294901760
    %113 = vmatpush1.msra.mxu0 %v112
    %114 = vmatprep.subr.mxu0 0.0
    %v115 = vand.u32 %v91, 4294901760
    %116 = vmatpush1.msra.mxu0 %v115
    %117 = vmatprep.subr.mxu0 0.0
    %v118 = vand.u32 %v92, 4294901760
    %119 = vmatpush1.msra.mxu0 %v118
    %120 = vmatprep.subr.mxu0 0.0
    %v121 = vand.u32 %v93, 4294901760
    %122 = vmatpush1.msra.mxu0 %v121
    %123 = vmatprep.subr.mxu0 0.0
    %v124 = vand.u32 %v94, 4294901760
    %125 = vmatpush1.msra.mxu0 %v124
    %126 = vmatprep.subr.mxu0 0.0
    %v127 = vand.u32 %v95, 4294901760
    %128 = vmatpush1.msra.mxu0 %v127
    %129 = vmatprep.subr.mxu0 0.0
    %v130 = vand.u32 %v96, 4294901760
    %131 = vmatpush1.msra.mxu0 %v130
    %132 = vmatprep.subr.mxu0 0.0
    %v133 = vand.u32 %v97, 4294901760
    %134 = vmatpush1.msra.mxu0 %v133
    %135 = vmatprep.subr.mxu0 0.0
    %v136 = vand.u32 %v98, 4294901760
    %137 = vmatpush1.msra.mxu0 %v136
    %138 = vmatprep.subr.mxu0 0.0
    %v139 = vand.u32 %v99, 4294901760
    %140 = vmatpush1.msra.mxu0 %v139
    %141 = vmatprep.subr.mxu0 0.0
    %v142 = vand.u32 %v100, 4294901760
    %143 = vmatpush1.msra.mxu0 %v142
    %144 = vmatprep.subr.mxu0 0.0
    %v145 = vand.u32 %v101, 4294901760
    %146 = vmatpush1.msra.mxu0 %v145
    %147 = vmatprep.subr.mxu0 0.0
    %v148 = vand.u32 %v102, 4294901760
    %149 = vmatpush1.msra.mxu0 %v148
    %150 = vmatprep.subr.mxu0 0.0
    %v151 = vand.u32 %v103, 4294901760
    %152 = vmatpush1.msra.mxu0 %v151
    %153 = vmatprep.subr.mxu0 0.0
    %154 = vmatpush1.msra.mxu0 0.0
    %155 = vmatprep.subr.mxu0 0.0
    %156 = vmatpush1.msra.mxu0 0.0
    %157 = vmatprep.subr.mxu0 0.0
    %158 = vmatpush1.msra.mxu0 0.0
    %159 = vmatprep.subr.mxu0 0.0
    %160 = vmatpush1.msra.mxu0 0.0
    %161 = vmatprep.subr.mxu0 0.0
    %162 = vmatpush1.msra.mxu0 0.0
    %163 = vmatprep.subr.mxu0 0.0
    %164 = vmatpush1.msra.mxu0 0.0
    %165 = vmatprep.subr.mxu0 0.0
    %166 = vmatpush1.msra.mxu0 0.0
    %167 = vmatprep.subr.mxu0 0.0
    %168 = vmatpush1.msra.mxu0 0.0
    %169 = vmatprep.subr.mxu0 0.0
    %170 = vmatpush1.msra.mxu0 0.0
    %171 = vmatprep.subr.mxu0 0.0
    %172 = vmatpush1.msra.mxu0 0.0
    %173 = vmatprep.subr.mxu0 0.0
    %174 = vmatpush1.msra.mxu0 0.0
    %175 = vmatprep.subr.mxu0 0.0
    %176 = vmatpush1.msra.mxu0 0.0
    %177 = vmatprep.subr.mxu0 0.0
    %178 = vmatpush1.msra.mxu0 0.0
    %179 = vmatprep.subr.mxu0 0.0
    %180 = vmatpush1.msra.mxu0 0.0
    %181 = vmatprep.subr.mxu0 0.0
    %182 = vmatpush1.msra.mxu0 0.0
    %183 = vmatprep.subr.mxu0 0.0
    %184 = vmatpush1.msra.mxu0 0.0
    %185 = vmatprep.mubr.f32.mxu0 0.0
    %v186 = vand.u32 %v104, 4294901760
    %v187 = vsub.f32 %v104, %v186
    %v188 = vand.u32 %v187, 4294901760
    %v189 = vsub.f32 %v187, %v188
    %v190 = vand.u32 %v189, 4294901760
    %191 = vmatmul.mubr.f32.gmra.mrb[0].mxu0 %v190
    %v192 = vpop.f32.mrb[0].mxu0
    %v193 = vadd.f32 0.0, %v192
    %v194 = vpop.f32.mrb[0].mxu0
    %195 = vdwg.mxu0
    %196 = vmatprep.subr.mxu0 0.0
    %v197 = vand.u32 %v88, 4294901760
    %v198 = vsub.f32 %v88, %v197
    %v199 = vand.u32 %v198, 4294901760
    %v200 = vsub.f32 %v198, %v199
    %v201 = vand.u32 %v200, 4294901760
    %202 = vmatpush1.msra.mxu0 %v201
    %203 = vmatprep.subr.mxu0 0.0
    %v204 = vand.u32 %v89, 4294901760
    %v205 = vsub.f32 %v89, %v204
    %v206 = vand.u32 %v205, 4294901760
    %v207 = vsub.f32 %v205, %v206
    %v208 = vand.u32 %v207, 4294901760
    %209 = vmatpush1.msra.mxu0 %v208
    %210 = vmatprep.subr.mxu0 0.0
    %v211 = vand.u32 %v90, 4294901760
    %v212 = vsub.f32 %v90, %v211
    %v213 = vand.u32 %v212, 4294901760
    %v214 = vsub.f32 %v212, %v213
    %v215 = vand.u32 %v214, 4294901760
    %216 = vmatpush1.msra.mxu0 %v215
    %217 = vmatprep.subr.mxu0 0.0
    %v218 = vand.u32 %v91, 4294901760
    %v219 = vsub.f32 %v91, %v218
    %v220 = vand.u32 %v219, 4294901760
    %v221 = vsub.f32 %v219, %v220
    %v222 = vand.u32 %v221, 4294901760
    %223 = vmatpush1.msra.mxu0 %v222
    %224 = vmatprep.subr.mxu0 0.0
    %v225 = vand.u32 %v92, 4294901760
    %v226 = vsub.f32 %v92, %v225
    %v227 = vand.u32 %v226, 4294901760
    %v228 = vsub.f32 %v226, %v227
    %v229 = vand.u32 %v228, 4294901760
    %230 = vmatpush1.msra.mxu0 %v229
    %231 = vmatprep.subr.mxu0 0.0
    %v232 = vand.u32 %v93, 4294901760
    %v233 = vsub.f32 %v93, %v232
    %v234 = vand.u32 %v233, 4294901760
    %v235 = vsub.f32 %v233, %v234
    %v236 = vand.u32 %v235, 4294901760
    %237 = vmatpush1.msra.mxu0 %v236
    %238 = vmatprep.subr.mxu0 0.0
    %v239 = vand.u32 %v94, 4294901760
    %v240 = vsub.f32 %v94, %v239
    %v241 = vand.u32 %v240, 4294901760
    %v242 = vsub.f32 %v240, %v241
    %v243 = vand.u32 %v242, 4294901760
    %244 = vmatpush1.msra.mxu0 %v243
    %245 = vmatprep.subr.mxu0 0.0
    %v246 = vand.u32 %v95, 4294901760
    %v247 = vsub.f32 %v95, %v246
    %v248 = vand.u32 %v247, 4294901760
    %v249 = vsub.f32 %v247, %v248
    %v250 = vand.u32 %v249, 4294901760
    %251 = vmatpush1.msra.mxu0 %v250
    %252 = vmatprep.subr.mxu0 0.0
    %v253 = vand.u32 %v96, 4294901760
    %v254 = vsub.f32 %v96, %v253
    %v255 = vand.u32 %v254, 4294901760
    %v256 = vsub.f32 %v254, %v255
    %v257 = vand.u32 %v256, 4294901760
    %258 = vmatpush1.msra.mxu0 %v257
    %259 = vmatprep.subr.mxu0 0.0
    %v260 = vand.u32 %v97, 4294901760
    %v261 = vsub.f32 %v97, %v260
    %v262 = vand.u32 %v261, 4294901760
    %v263 = vsub.f32 %v261, %v262
    %v264 = vand.u32 %v263, 4294901760
    %265 = vmatpush1.msra.mxu0 %v264
    %266 = vmatprep.subr.mxu0 0.0
    %v267 = vand.u32 %v98, 4294901760
    %v268 = vsub.f32 %v98, %v267
    %v269 = vand.u32 %v268, 4294901760
    %v270 = vsub.f32 %v268, %v269
    %v271 = vand.u32 %v270, 4294901760
    %272 = vmatpush1.msra.mxu0 %v271
    %273 = vmatprep.subr.mxu0 0.0
    %v274 = vand.u32 %v99, 4294901760
    %v275 = vsub.f32 %v99, %v274
    %v276 = vand.u32 %v275, 4294901760
    %v277 = vsub.f32 %v275, %v276
    %v278 = vand.u32 %v277, 4294901760
    %279 = vmatpush1.msra.mxu0 %v278
    %280 = vmatprep.subr.mxu0 0.0
    %v281 = vand.u32 %v100, 4294901760
    %v282 = vsub.f32 %v100, %v281
    %v283 = vand.u32 %v282, 4294901760
    %v284 = vsub.f32 %v282, %v283
    %v285 = vand.u32 %v284, 4294901760
    %286 = vmatpush1.msra.mxu0 %v285
    %287 = vmatprep.subr.mxu0 0.0
    %v288 = vand.u32 %v101, 4294901760
    %v289 = vsub.f32 %v101, %v288
    %v290 = vand.u32 %v289, 4294901760
    %v291 = vsub.f32 %v289, %v290
    %v292 = vand.u32 %v291, 4294901760
    %293 = vmatpush1.msra.mxu0 %v292
    %294 = vmatprep.subr.mxu0 0.0
    %v295 = vand.u32 %v102, 4294901760
    %v296 = vsub.f32 %v102, %v295
    %v297 = vand.u32 %v296, 4294901760
    %v298 = vsub.f32 %v296, %v297
    %v299 = vand.u32 %v298, 4294901760
    %300 = vmatpush1.msra.mxu0 %v299
    %301 = vmatprep.subr.mxu0 0.0
    %v302 = vand.u32 %v103, 4294901760
    %v303 = vsub.f32 %v103, %v302
    %v304 = vand.u32 %v303, 4294901760
    %v305 = vsub.f32 %v303, %v304
    %v306 = vand.u32 %v305, 4294901760
    %307 = vmatpush1.msra.mxu0 %v306
    %308 = vmatprep.subr.mxu0 0.0
    %309 = vmatpush1.msra.mxu0 0.0
    %310 = vmatprep.subr.mxu0 0.0
    %311 = vmatpush1.msra.mxu0 0.0
    %312 = vmatprep.subr.mxu0 0.0
    %313 = vmatpush1.msra.mxu0 0.0
    %314 = vmatprep.subr.mxu0 0.0
    %315 = vmatpush1.msra.mxu0 0.0
    %316 = vmatprep.subr.mxu0 0.0
    %317 = vmatpush1.msra.mxu0 0.0
    %318 = vmatprep.subr.mxu0 0.0
    %319 = vmatpush1.msra.mxu0 0.0
    %320 = vmatprep.subr.mxu0 0.0
    %321 = vmatpush1.msra.mxu0 0.0
    %322 = vmatprep.subr.mxu0 0.0
    %323 = vmatpush1.msra.mxu0 0.0
    %324 = vmatprep.subr.mxu0 0.0
    %325 = vmatpush1.msra.mxu0 0.0
    %326 = vmatprep.subr.mxu0 0.0
    %327 = vmatpush1.msra.mxu0 0.0
    %328 = vmatprep.subr.mxu0 0.0
    %329 = vmatpush1.msra.mxu0 0.0
    %330 = vmatprep.subr.mxu0 0.0
    %331 = vmatpush1.msra.mxu0 0.0
    %332 = vmatprep.subr.mxu0 0.0
    %333 = vmatpush1.msra.mxu0 0.0
    %334 = vmatprep.subr.mxu0 0.0
    %335 = vmatpush1.msra.mxu0 0.0
    %336 = vmatprep.subr.mxu0 0.0
    %337 = vmatpush1.msra.mxu0 0.0
    %338 = vmatprep.subr.mxu0 0.0
    %339 = vmatpush1.msra.mxu0 0.0
    %340 = vmatprep.mubr.f32.mxu0 0.0
    %v341 = vand.u32 %v104, 4294901760
    %342 = vmatmul.mubr.f32.gmra.mrb[0].mxu0 %v341
    %v343 = vpop.f32.mrb[0].mxu0
    %v344 = vadd.f32 %v193, %v343
    %v345 = vpop.f32.mrb[0].mxu0
    %346 = vdwg.mxu0
    %347 = vmatprep.subr.mxu0 0.0
    %v348 = vand.u32 %v88, 4294901760
    %v349 = vsub.f32 %v88, %v348
    %350 = vmatpush1.msra.mxu0 %v349
    %351 = vmatprep.subr.mxu0 0.0
    %v352 = vand.u32 %v89, 4294901760
    %v353 = vsub.f32 %v89, %v352
    %354 = vmatpush1.msra.mxu0 %v353
    %355 = vmatprep.subr.mxu0 0.0
    %v356 = vand.u32 %v90, 4294901760
    %v357 = vsub.f32 %v90, %v356
    %358 = vmatpush1.msra.mxu0 %v357
    %359 = vmatprep.subr.mxu0 0.0
    %v360 = vand.u32 %v91, 4294901760
    %v361 = vsub.f32 %v91, %v360
    %362 = vmatpush1.msra.mxu0 %v361
    %363 = vmatprep.subr.mxu0 0.0
    %v364 = vand.u32 %v92, 4294901760
    %v365 = vsub.f32 %v92, %v364
    %366 = vmatpush1.msra.mxu0 %v365
    %367 = vmatprep.subr.mxu0 0.0
    %v368 = vand.u32 %v93, 4294901760
    %v369 = vsub.f32 %v93, %v368
    %370 = vmatpush1.msra.mxu0 %v369
    %371 = vmatprep.subr.mxu0 0.0
    %v372 = vand.u32 %v94, 4294901760
    %v373 = vsub.f32 %v94, %v372
    %374 = vmatpush1.msra.mxu0 %v373
    %375 = vmatprep.subr.mxu0 0.0
    %v376 = vand.u32 %v95, 4294901760
    %v377 = vsub.f32 %v95, %v376
    %378 = vmatpush1.msra.mxu0 %v377
    %379 = vmatprep.subr.mxu0 0.0
    %v380 = vand.u32 %v96, 4294901760
    %v381 = vsub.f32 %v96, %v380
    %382 = vmatpush1.msra.mxu0 %v381
    %383 = vmatprep.subr.mxu0 0.0
    %v384 = vand.u32 %v97, 4294901760
    %v385 = vsub.f32 %v97, %v384
    %386 = vmatpush1.msra.mxu0 %v385
    %387 = vmatprep.subr.mxu0 0.0
    %v388 = vand.u32 %v98, 4294901760
    %v389 = vsub.f32 %v98, %v388
    %390 = vmatpush1.msra.mxu0 %v389
    %391 = vmatprep.subr.mxu0 0.0
    %v392 = vand.u32 %v99, 4294901760
    %v393 = vsub.f32 %v99, %v392
    %394 = vmatpush1.msra.mxu0 %v393
    %395 = vmatprep.subr.mxu0 0.0
    %v396 = vand.u32 %v100, 4294901760
    %v397 = vsub.f32 %v100, %v396
    %398 = vmatpush1.msra.mxu0 %v397
    %399 = vmatprep.subr.mxu0 0.0
    %v400 = vand.u32 %v101, 4294901760
    %v401 = vsub.f32 %v101, %v400
    %402 = vmatpush1.msra.mxu0 %v401
    %403 = vmatprep.subr.mxu0 0.0
    %v404 = vand.u32 %v102, 4294901760
    %v405 = vsub.f32 %v102, %v404
    %406 = vmatpush1.msra.mxu0 %v405
    %407 = vmatprep.subr.mxu0 0.0
    %v408 = vand.u32 %v103, 4294901760
    %v409 = vsub.f32 %v103, %v408
    %410 = vmatpush1.msra.mxu0 %v409
    %411 = vmatprep.subr.mxu0 0.0
    %412 = vmatpush1.msra.mxu0 0.0
    %413 = vmatprep.subr.mxu0 0.0
    %414 = vmatpush1.msra.mxu0 0.0
    %415 = vmatprep.subr.mxu0 0.0
    %416 = vmatpush1.msra.mxu0 0.0
    %417 = vmatprep.subr.mxu0 0.0
    %418 = vmatpush1.msra.mxu0 0.0
    %419 = vmatprep.subr.mxu0 0.0
    %420 = vmatpush1.msra.mxu0 0.0
    %421 = vmatprep.subr.mxu0 0.0
    %422 = vmatpush1.msra.mxu0 0.0
    %423 = vmatprep.subr.mxu0 0.0
    %424 = vmatpush1.msra.mxu0 0.0
    %425 = vmatprep.subr.mxu0 0.0
    %426 = vmatpush1.msra.mxu0 0.0
    %427 = vmatprep.subr.mxu0 0.0
    %428 = vmatpush1.msra.mxu0 0.0
    %429 = vmatprep.subr.mxu0 0.0
    %430 = vmatpush1.msra.mxu0 0.0
    %431 = vmatprep.subr.mxu0 0.0
    %432 = vmatpush1.msra.mxu0 0.0
    %433 = vmatprep.subr.mxu0 0.0
    %434 = vmatpush1.msra.mxu0 0.0
    %435 = vmatprep.subr.mxu0 0.0
    %436 = vmatpush1.msra.mxu0 0.0
    %437 = vmatprep.subr.mxu0 0.0
    %438 = vmatpush1.msra.mxu0 0.0
    %439 = vmatprep.subr.mxu0 0.0
    %440 = vmatpush1.msra.mxu0 0.0
    %441 = vmatprep.subr.mxu0 0.0
    %442 = vmatpush1.msra.mxu0 0.0
    %443 = vmatprep.mubr.f32.mxu0 0.0
    %v444 = vand.u32 %v104, 4294901760
    %v445 = vsub.f32 %v104, %v444
    %446 = vmatmul.mubr.f32.gmra.mrb[0].mxu0 %v445
    %v447 = vpop.f32.mrb[0].mxu0
    %v448 = vadd.f32 %v344, %v447
    %v449 = vpop.f32.mrb[0].mxu0
    %450 = vdwg.mxu0
    %451 = vmatprep.subr.mxu0 0.0
    %v452 = vand.u32 %v88, 4294901760
    %453 = vmatpush1.msra.mxu0 %v452
    %454 = vmatprep.subr.mxu0 0.0
    %v455 = vand.u32 %v89, 4294901760
    %456 = vmatpush1.msra.mxu0 %v455
    %457 = vmatprep.subr.mxu0 0.0
    %v458 = vand.u32 %v90, 4294901760
    %459 = vmatpush1.msra.mxu0 %v458
    %460 = vmatprep.subr.mxu0 0.0
    %v461 = vand.u32 %v91, 4294901760
    %462 = vmatpush1.msra.mxu0 %v461
    %463 = vmatprep.subr.mxu0 0.0
    %v464 = vand.u32 %v92, 4294901760
    %465 = vmatpush1.msra.mxu0 %v464
    %466 = vmatprep.subr.mxu0 0.0
    %v467 = vand.u32 %v93, 4294901760
    %468 = vmatpush1.msra.mxu0 %v467
    %469 = vmatprep.subr.mxu0 0.0
    %v470 = vand.u32 %v94, 4294901760
    %471 = vmatpush1.msra.mxu0 %v470
    %472 = vmatprep.subr.mxu0 0.0
    %v473 = vand.u32 %v95, 4294901760
    %474 = vmatpush1.msra.mxu0 %v473
    %475 = vmatprep.subr.mxu0 0.0
    %v476 = vand.u32 %v96, 4294901760
    %477 = vmatpush1.msra.mxu0 %v476
    %478 = vmatprep.subr.mxu0 0.0
    %v479 = vand.u32 %v97, 4294901760
    %480 = vmatpush1.msra.mxu0 %v479
    %481 = vmatprep.subr.mxu0 0.0
    %v482 = vand.u32 %v98, 4294901760
    %483 = vmatpush1.msra.mxu0 %v482
    %484 = vmatprep.subr.mxu0 0.0
    %v485 = vand.u32 %v99, 4294901760
    %486 = vmatpush1.msra.mxu0 %v485
    %487 = vmatprep.subr.mxu0 0.0
    %v488 = vand.u32 %v100, 4294901760
    %489 = vmatpush1.msra.mxu0 %v488
    %490 = vmatprep.subr.mxu0 0.0
    %v491 = vand.u32 %v101, 4294901760
    %492 = vmatpush1.msra.mxu0 %v491
    %493 = vmatprep.subr.mxu0 0.0
    %v494 = vand.u32 %v102, 4294901760
    %495 = vmatpush1.msra.mxu0 %v494
    %496 = vmatprep.subr.mxu0 0.0
    %v497 = vand.u32 %v103, 4294901760
    %498 = vmatpush1.msra.mxu0 %v497
    %499 = vmatprep.subr.mxu0 0.0
    %500 = vmatpush1.msra.mxu0 0.0
    %501 = vmatprep.subr.mxu0 0.0
    %502 = vmatpush1.msra.mxu0 0.0
    %503 = vmatprep.subr.mxu0 0.0
    %504 = vmatpush1.msra.mxu0 0.0
    %505 = vmatprep.subr.mxu0 0.0
    %506 = vmatpush1.msra.mxu0 0.0
    %507 = vmatprep.subr.mxu0 0.0
    %508 = vmatpush1.msra.mxu0 0.0
    %509 = vmatprep.subr.mxu0 0.0
    %510 = vmatpush1.msra.mxu0 0.0
    %511 = vmatprep.subr.mxu0 0.0
    %512 = vmatpush1.msra.mxu0 0.0
    %513 = vmatprep.subr.mxu0 0.0
    %514 = vmatpush1.msra.mxu0 0.0
    %515 = vmatprep.subr.mxu0 0.0
    %516 = vmatpush1.msra.mxu0 0.0
    %517 = vmatprep.subr.mxu0 0.0
    %518 = vmatpush1.msra.mxu0 0.0
    %519 = vmatprep.subr.mxu0 0.0
    %520 = vmatpush1.msra.mxu0 0.0
    %521 = vmatprep.subr.mxu0 0.0
    %522 = vmatpush1.msra.mxu0 0.0
    %523 = vmatprep.subr.mxu0 0.0
    %524 = vmatpush1.msra.mxu0 0.0
    %525 = vmatprep.subr.mxu0 0.0
    %526 = vmatpush1.msra.mxu0 0.0
    %527 = vmatprep.subr.mxu0 0.0
    %528 = vmatpush1.msra.mxu0 0.0
    %529 = vmatprep.subr.mxu0 0.0
    %530 = vmatpush1.msra.mxu0 0.0
    %531 = vmatprep.mubr.f32.mxu0 0.0
    %v532 = vand.u32 %v104, 4294901760
    %v533 = vsub.f32 %v104, %v532
    %v534 = vand.u32 %v533, 4294901760
    %535 = vmatmul.mubr.f32.gmra.mrb[0].mxu0 %v534
    %v536 = vpop.f32.mrb[0].mxu0
    %v537 = vadd.f32 %v448, %v536
    %v538 = vpop.f32.mrb[0].mxu0
    %539 = vdwg.mxu0
    %540 = vmatprep.subr.mxu0 0.0
    %v541 = vand.u32 %v88, 4294901760
    %v542 = vsub.f32 %v88, %v541
    %v543 = vand.u32 %v542, 4294901760
    %544 = vmatpush1.msra.mxu0 %v543
    %545 = vmatprep.subr.mxu0 0.0
    %v546 = vand.u32 %v89, 4294901760
    %v547 = vsub.f32 %v89, %v546
    %v548 = vand.u32 %v547, 4294901760
    %549 = vmatpush1.msra.mxu0 %v548
    %550 = vmatprep.subr.mxu0 0.0
    %v551 = vand.u32 %v90, 4294901760
    %v552 = vsub.f32 %v90, %v551
    %v553 = vand.u32 %v552, 4294901760
    %554 = vmatpush1.msra.mxu0 %v553
    %555 = vmatprep.subr.mxu0 0.0
    %v556 = vand.u32 %v91, 4294901760
    %v557 = vsub.f32 %v91, %v556
    %v558 = vand.u32 %v557, 4294901760
    %559 = vmatpush1.msra.mxu0 %v558
    %560 = vmatprep.subr.mxu0 0.0
    %v561 = vand.u32 %v92, 4294901760
    %v562 = vsub.f32 %v92, %v561
    %v563 = vand.u32 %v562, 4294901760
    %564 = vmatpush1.msra.mxu0 %v563
    %565 = vmatprep.subr.mxu0 0.0
    %v566 = vand.u32 %v93, 4294901760
    %v567 = vsub.f32 %v93, %v566
    %v568 = vand.u32 %v567, 4294901760
    %569 = vmatpush1.msra.mxu0 %v568
    %570 = vmatprep.subr.mxu0 0.0
    %v571 = vand.u32 %v94, 4294901760
    %v572 = vsub.f32 %v94, %v571
    %v573 = vand.u32 %v572, 4294901760
    %574 = vmatpush1.msra.mxu0 %v573
    %575 = vmatprep.subr.mxu0 0.0
    %v576 = vand.u32 %v95, 4294901760
    %v577 = vsub.f32 %v95, %v576
    %v578 = vand.u32 %v577, 4294901760
    %579 = vmatpush1.msra.mxu0 %v578
    %580 = vmatprep.subr.mxu0 0.0
    %v581 = vand.u32 %v96, 4294901760
    %v582 = vsub.f32 %v96, %v581
    %v583 = vand.u32 %v582, 4294901760
    %584 = vmatpush1.msra.mxu0 %v583
    %585 = vmatprep.subr.mxu0 0.0
    %v586 = vand.u32 %v97, 4294901760
    %v587 = vsub.f32 %v97, %v586
    %v588 = vand.u32 %v587, 4294901760
    %589 = vmatpush1.msra.mxu0 %v588
    %590 = vmatprep.subr.mxu0 0.0
    %v591 = vand.u32 %v98, 4294901760
    %v592 = vsub.f32 %v98, %v591
    %v593 = vand.u32 %v592, 4294901760
    %594 = vmatpush1.msra.mxu0 %v593
    %595 = vmatprep.subr.mxu0 0.0
    %v596 = vand.u32 %v99, 4294901760
    %v597 = vsub.f32 %v99, %v596
    %v598 = vand.u32 %v597, 4294901760
    %599 = vmatpush1.msra.mxu0 %v598
    %600 = vmatprep.subr.mxu0 0.0
    %v601 = vand.u32 %v100, 4294901760
    %v602 = vsub.f32 %v100, %v601
    %v603 = vand.u32 %v602, 4294901760
    %604 = vmatpush1.msra.mxu0 %v603
    %605 = vmatprep.subr.mxu0 0.0
    %v606 = vand.u32 %v101, 4294901760
    %v607 = vsub.f32 %v101, %v606
    %v608 = vand.u32 %v607, 4294901760
    %609 = vmatpush1.msra.mxu0 %v608
    %610 = vmatprep.subr.mxu0 0.0
    %v611 = vand.u32 %v102, 4294901760
    %v612 = vsub.f32 %v102, %v611
    %v613 = vand.u32 %v612, 4294901760
    %614 = vmatpush1.msra.mxu0 %v613
    %615 = vmatprep.subr.mxu0 0.0
    %v616 = vand.u32 %v103, 4294901760
    %v617 = vsub.f32 %v103, %v616
    %v618 = vand.u32 %v617, 4294901760
    %619 = vmatpush1.msra.mxu0 %v618
    %620 = vmatprep.subr.mxu0 0.0
    %621 = vmatpush1.msra.mxu0 0.0
    %622 = vmatprep.subr.mxu0 0.0
    %623 = vmatpush1.msra.mxu0 0.0
    %624 = vmatprep.subr.mxu0 0.0
    %625 = vmatpush1.msra.mxu0 0.0
    %626 = vmatprep.subr.mxu0 0.0
    %627 = vmatpush1.msra.mxu0 0.0
    %628 = vmatprep.subr.mxu0 0.0
    %629 = vmatpush1.msra.mxu0 0.0
    %630 = vmatprep.subr.mxu0 0.0
    %631 = vmatpush1.msra.mxu0 0.0
    %632 = vmatprep.subr.mxu0 0.0
    %633 = vmatpush1.msra.mxu0 0.0
    %634 = vmatprep.subr.mxu0 0.0
    %635 = vmatpush1.msra.mxu0 0.0
    %636 = vmatprep.subr.mxu0 0.0
    %637 = vmatpush1.msra.mxu0 0.0
    %638 = vmatprep.subr.mxu0 0.0
    %639 = vmatpush1.msra.mxu0 0.0
    %640 = vmatprep.subr.mxu0 0.0
    %641 = vmatpush1.msra.mxu0 0.0
    %642 = vmatprep.subr.mxu0 0.0
    %643 = vmatpush1.msra.mxu0 0.0
    %644 = vmatprep.subr.mxu0 0.0
    %645 = vmatpush1.msra.mxu0 0.0
    %646 = vmatprep.subr.mxu0 0.0
    %647 = vmatpush1.msra.mxu0 0.0
    %648 = vmatprep.subr.mxu0 0.0
    %649 = vmatpush1.msra.mxu0 0.0
    %650 = vmatprep.subr.mxu0 0.0
    %651 = vmatpush1.msra.mxu0 0.0
    %652 = vmatprep.mubr.f32.mxu0 0.0
    %v653 = vand.u32 %v104, 4294901760
    %654 = vmatmul.mubr.f32.gmra.mrb[0].mxu0 %v653
    %v655 = vpop.f32.mrb[0].mxu0
    %v656 = vadd.f32 %v537, %v655
    %v657 = vpop.f32.mrb[0].mxu0
    %658 = vdwg.mxu0
    %659 = vmatprep.subr.mxu0 0.0
    %v660 = vand.u32 %v88, 4294901760
    %661 = vmatpush1.msra.mxu0 %v660
    %662 = vmatprep.subr.mxu0 0.0
    %v663 = vand.u32 %v89, 4294901760
    %664 = vmatpush1.msra.mxu0 %v663
    %665 = vmatprep.subr.mxu0 0.0
    %v666 = vand.u32 %v90, 4294901760
    %667 = vmatpush1.msra.mxu0 %v666
    %668 = vmatprep.subr.mxu0 0.0
    %v669 = vand.u32 %v91, 4294901760
    %670 = vmatpush1.msra.mxu0 %v669
    %671 = vmatprep.subr.mxu0 0.0
    %v672 = vand.u32 %v92, 4294901760
    %673 = vmatpush1.msra.mxu0 %v672
    %674 = vmatprep.subr.mxu0 0.0
    %v675 = vand.u32 %v93, 4294901760
    %676 = vmatpush1.msra.mxu0 %v675
    %677 = vmatprep.subr.mxu0 0.0
    %v678 = vand.u32 %v94, 4294901760
    %679 = vmatpush1.msra.mxu0 %v678
    %680 = vmatprep.subr.mxu0 0.0
    %v681 = vand.u32 %v95, 4294901760
    %682 = vmatpush1.msra.mxu0 %v681
    %683 = vmatprep.subr.mxu0 0.0
    %v684 = vand.u32 %v96, 4294901760
    %685 = vmatpush1.msra.mxu0 %v684
    %686 = vmatprep.subr.mxu0 0.0
    %v687 = vand.u32 %v97, 4294901760
    %688 = vmatpush1.msra.mxu0 %v687
    %689 = vmatprep.subr.mxu0 0.0
    %v690 = vand.u32 %v98, 4294901760
    %691 = vmatpush1.msra.mxu0 %v690
    %692 = vmatprep.subr.mxu0 0.0
    %v693 = vand.u32 %v99, 4294901760
    %694 = vmatpush1.msra.mxu0 %v693
    %695 = vmatprep.subr.mxu0 0.0
    %v696 = vand.u32 %v100, 4294901760
    %697 = vmatpush1.msra.mxu0 %v696
    %698 = vmatprep.subr.mxu0 0.0
    %v699 = vand.u32 %v101, 4294901760
    %700 = vmatpush1.msra.mxu0 %v699
    %701 = vmatprep.subr.mxu0 0.0
    %v702 = vand.u32 %v102, 4294901760
    %703 = vmatpush1.msra.mxu0 %v702
    %704 = vmatprep.subr.mxu0 0.0
    %v705 = vand.u32 %v103, 4294901760
    %706 = vmatpush1.msra.mxu0 %v705
    %707 = vmatprep.subr.mxu0 0.0
    %708 = vmatpush1.msra.mxu0 0.0
    %709 = vmatprep.subr.mxu0 0.0
    %710 = vmatpush1.msra.mxu0 0.0
    %711 = vmatprep.subr.mxu0 0.0
    %712 = vmatpush1.msra.mxu0 0.0
    %713 = vmatprep.subr.mxu0 0.0
    %714 = vmatpush1.msra.mxu0 0.0
    %715 = vmatprep.subr.mxu0 0.0
    %716 = vmatpush1.msra.mxu0 0.0
    %717 = vmatprep.subr.mxu0 0.0
    %718 = vmatpush1.msra.mxu0 0.0
    %719 = vmatprep.subr.mxu0 0.0
    %720 = vmatpush1.msra.mxu0 0.0
    %721 = vmatprep.subr.mxu0 0.0
    %722 = vmatpush1.msra.mxu0 0.0
    %723 = vmatprep.subr.mxu0 0.0
    %724 = vmatpush1.msra.mxu0 0.0
    %725 = vmatprep.subr.mxu0 0.0
    %726 = vmatpush1.msra.mxu0 0.0
    %727 = vmatprep.subr.mxu0 0.0
    %728 = vmatpush1.msra.mxu0 0.0
    %729 = vmatprep.subr.mxu0 0.0
    %730 = vmatpush1.msra.mxu0 0.0
    %731 = vmatprep.subr.mxu0 0.0
    %732 = vmatpush1.msra.mxu0 0.0
    %733 = vmatprep.subr.mxu0 0.0
    %734 = vmatpush1.msra.mxu0 0.0
    %735 = vmatprep.subr.mxu0 0.0
    %736 = vmatpush1.msra.mxu0 0.0
    %737 = vmatprep.subr.mxu0 0.0
    %738 = vmatpush1.msra.mxu0 0.0
    %739 = vmatprep.mubr.f32.mxu0 0.0
    %v740 = vand.u32 %v104, 4294901760
    %741 = vmatmul.mubr.f32.gmra.mrb[0].mxu0 %v740
    %v742 = vpop.f32.mrb[0].mxu0
    %v743 = vadd.f32 %v656, %v742
    %v744 = vpop.f32.mrb[0].mxu0
    %745 = vdwg.mxu0
    %v746 = vadd.f32 %v32, %v743
    %v747 = vld [vmem:[%s0 + $0x1] sm:$0x1]
    %v748 = vlaneseq
    %v749 = vshrl.u32 %v748, 7
    %v750 = vsub.s32 0, %v749
    %v751 = vrot.slane %v747, %v750
    %vm752 = vcmp.eq.s32.totalorder %v36, %v751
    %vm753 = vcmp.eq.s32.totalorder %v37, %v751
    %vm754 = vcmp.eq.s32.totalorder %v38, %v751
    %vm755 = vcmp.eq.s32.totalorder %v39, %v751
    %vm756 = vcmp.eq.s32.totalorder %v40, %v751
    %vm757 = vcmp.eq.s32.totalorder %v41, %v751
    %vm758 = vcmp.eq.s32.totalorder %v42, %v751
    %vm759 = vcmp.eq.s32.totalorder %v43, %v751
    %vm760 = vcmp.eq.s32.totalorder %v44, %v751
    %vm761 = vcmp.eq.s32.totalorder %v45, %v751
    %vm762 = vcmp.eq.s32.totalorder %v46, %v751
    %vm763 = vcmp.eq.s32.totalorder %v47, %v751
    %vm764 = vcmp.eq.s32.totalorder %v48, %v751
    %vm765 = vcmp.eq.s32.totalorder %v49, %v751
    %vm766 = vcmp.eq.s32.totalorder %v50, %v751
    %vm767 = vcmp.eq.s32.totalorder %v51, %v751
    %v768 = vsel %vm752, 1, 0
    %v769 = vsel %vm753, 1, 0
    %v770 = vsel %vm754, 1, 0
    %v771 = vsel %vm755, 1, 0
    %v772 = vsel %vm756, 1, 0
    %v773 = vsel %vm757, 1, 0
    %v774 = vsel %vm758, 1, 0
    %v775 = vsel %vm759, 1, 0
    %v776 = vsel %vm760, 1, 0
    %v777 = vsel %vm761, 1, 0
    %v778 = vsel %vm762, 1, 0
    %v779 = vsel %vm763, 1, 0
    %v780 = vsel %vm764, 1, 0
    %v781 = vsel %vm765, 1, 0
    %v782 = vsel %vm766, 1, 0
    %v783 = vsel %vm767, 1, 0
    %v784 = vcvt.s32.f32 %v768
    %v785 = vcvt.s32.f32 %v769
    %v786 = vcvt.s32.f32 %v770
    %v787 = vcvt.s32.f32 %v771
    %v788 = vcvt.s32.f32 %v772
    %v789 = vcvt.s32.f32 %v773
    %v790 = vcvt.s32.f32 %v774
    %v791 = vcvt.s32.f32 %v775
    %v792 = vcvt.s32.f32 %v776
    %v793 = vcvt.s32.f32 %v777
    %v794 = vcvt.s32.f32 %v778
    %v795 = vcvt.s32.f32 %v779
    %v796 = vcvt.s32.f32 %v780
    %v797 = vcvt.s32.f32 %v781
    %v798 = vcvt.s32.f32 %v782
    %v799 = vcvt.s32.f32 %v783
    %s800 = scalar_lea.vmem [#allocation2], 8
    %v801 = vld [vmem:[%s800] sm:$0xff]
    %802 = vmatprep.subr.mxu0 0.0
    %v803 = vand.u32 %v784, 4294901760
    %804 = vmatpush1.msra.mxu0 %v803
    %805 = vmatprep.subr.mxu0 0.0
    %v806 = vand.u32 %v785, 4294901760
    %807 = vmatpush1.msra.mxu0 %v806
    %808 = vmatprep.subr.mxu0 0.0
    %v809 = vand.u32 %v786, 4294901760
    %810 = vmatpush1.msra.mxu0 %v809
    %811 = vmatprep.subr.mxu0 0.0
    %v812 = vand.u32 %v787, 4294901760
    %813 = vmatpush1.msra.mxu0 %v812
    %814 = vmatprep.subr.mxu0 0.0
    %v815 = vand.u32 %v788, 4294901760
    %816 = vmatpush1.msra.mxu0 %v815
    %817 = vmatprep.subr.mxu0 0.0
    %v818 = vand.u32 %v789, 4294901760
    %819 = vmatpush1.msra.mxu0 %v818
    %820 = vmatprep.subr.mxu0 0.0
    %v821 = vand.u32 %v790, 4294901760
    %822 = vmatpush1.msra.mxu0 %v821
    %823 = vmatprep.subr.mxu0 0.0
    %v824 = vand.u32 %v791, 4294901760
    %825 = vmatpush1.msra.mxu0 %v824
    %826 = vmatprep.subr.mxu0 0.0
    %v827 = vand.u32 %v792, 4294901760
    %828 = vmatpush1.msra.mxu0 %v827
    %829 = vmatprep.subr.mxu0 0.0
    %v830 = vand.u32 %v793, 4294901760
    %831 = vmatpush1.msra.mxu0 %v830
    %832 = vmatprep.subr.mxu0 0.0
    %v833 = vand.u32 %v794, 4294901760
    %834 = vmatpush1.msra.mxu0 %v833
    %835 = vmatprep.subr.mxu0 0.0
    %v836 = vand.u32 %v795, 4294901760
    %837 = vmatpush1.msra.mxu0 %v836
    %838 = vmatprep.subr.mxu0 0.0
    %v839 = vand.u32 %v796, 4294901760
    %840 = vmatpush1.msra.mxu0 %v839
    %841 = vmatprep.subr.mxu0 0.0
    %v842 = vand.u32 %v797, 4294901760
    %843 = vmatpush1.msra.mxu0 %v842
    %844 = vmatprep.subr.mxu0 0.0
    %v845 = vand.u32 %v798, 4294901760
    %846 = vmatpush1.msra.mxu0 %v845
    %847 = vmatprep.subr.mxu0 0.0
    %v848 = vand.u32 %v799, 4294901760
    %849 = vmatpush1.msra.mxu0 %v848
    %850 = vmatprep.subr.mxu0 0.0
    %851 = vmatpush1.msra.mxu0 0.0
    %852 = vmatprep.subr.mxu0 0.0
    %853 = vmatpush1.msra.mxu0 0.0
    %854 = vmatprep.subr.mxu0 0.0
    %855 = vmatpush1.msra.mxu0 0.0
    %856 = vmatprep.subr.mxu0 0.0
    %857 = vmatpush1.msra.mxu0 0.0
    %858 = vmatprep.subr.mxu0 0.0
    %859 = vmatpush1.msra.mxu0 0.0
    %860 = vmatprep.subr.mxu0 0.0
    %861 = vmatpush1.msra.mxu0 0.0
    %862 = vmatprep.subr.mxu0 0.0
    %863 = vmatpush1.msra.mxu0 0.0
    %864 = vmatprep.subr.mxu0 0.0
    %865 = vmatpush1.msra.mxu0 0.0
    %866 = vmatprep.subr.mxu0 0.0
    %867 = vmatpush1.msra.mxu0 0.0
    %868 = vmatprep.subr.mxu0 0.0
    %869 = vmatpush1.msra.mxu0 0.0
    %870 = vmatprep.subr.mxu0 0.0
    %871 = vmatpush1.msra.mxu0 0.0
    %872 = vmatprep.subr.mxu0 0.0
    %873 = vmatpush1.msra.mxu0 0.0
    %874 = vmatprep.subr.mxu0 0.0
    %875 = vmatpush1.msra.mxu0 0.0
    %876 = vmatprep.subr.mxu0 0.0
    %877 = vmatpush1.msra.mxu0 0.0
    %878 = vmatprep.subr.mxu0 0.0
    %879 = vmatpush1.msra.mxu0 0.0
    %880 = vmatprep.subr.mxu0 0.0
    %881 = vmatpush1.msra.mxu0 0.0
    %882 = vmatprep.mubr.f32.mxu0 0.0
    %v883 = vand.u32 %v801, 4294901760
    %v884 = vsub.f32 %v801, %v883
    %v885 = vand.u32 %v884, 4294901760
    %v886 = vsub.f32 %v884, %v885
    %v887 = vand.u32 %v886, 4294901760
    %888 = vmatmul.mubr.f32.gmra.mrb[0].mxu0 %v887
    %v889 = vpop.f32.mrb[0].mxu0
    %v890 = vadd.f32 0.0, %v889
    %v891 = vpop.f32.mrb[0].mxu0
    %892 = vdwg.mxu0
    %893 = vmatprep.subr.mxu0 0.0
    %v894 = vand.u32 %v784, 4294901760
    %v895 = vsub.f32 %v784, %v894
    %v896 = vand.u32 %v895, 4294901760
    %v897 = vsub.f32 %v895, %v896
    %v898 = vand.u32 %v897, 4294901760
    %899 = vmatpush1.msra.mxu0 %v898
    %900 = vmatprep.subr.mxu0 0.0
    %v901 = vand.u32 %v785, 4294901760
    %v902 = vsub.f32 %v785, %v901
    %v903 = vand.u32 %v902, 4294901760
    %v904 = vsub.f32 %v902, %v903
    %v905 = vand.u32 %v904, 4294901760
    %906 = vmatpush1.msra.mxu0 %v905
    %907 = vmatprep.subr.mxu0 0.0
    %v908 = vand.u32 %v786, 4294901760
    %v909 = vsub.f32 %v786, %v908
    %v910 = vand.u32 %v909, 4294901760
    %v911 = vsub.f32 %v909, %v910
    %v912 = vand.u32 %v911, 4294901760
    %913 = vmatpush1.msra.mxu0 %v912
    %914 = vmatprep.subr.mxu0 0.0
    %v915 = vand.u32 %v787, 4294901760
    %v916 = vsub.f32 %v787, %v915
    %v917 = vand.u32 %v916, 4294901760
    %v918 = vsub.f32 %v916, %v917
    %v919 = vand.u32 %v918, 4294901760
    %920 = vmatpush1.msra.mxu0 %v919
    %921 = vmatprep.subr.mxu0 0.0
    %v922 = vand.u32 %v788, 4294901760
    %v923 = vsub.f32 %v788, %v922
    %v924 = vand.u32 %v923, 4294901760
    %v925 = vsub.f32 %v923, %v924
    %v926 = vand.u32 %v925, 4294901760
    %927 = vmatpush1.msra.mxu0 %v926
    %928 = vmatprep.subr.mxu0 0.0
    %v929 = vand.u32 %v789, 4294901760
    %v930 = vsub.f32 %v789, %v929
    %v931 = vand.u32 %v930, 4294901760
    %v932 = vsub.f32 %v930, %v931
    %v933 = vand.u32 %v932, 4294901760
    %934 = vmatpush1.msra.mxu0 %v933
    %935 = vmatprep.subr.mxu0 0.0
    %v936 = vand.u32 %v790, 4294901760
    %v937 = vsub.f32 %v790, %v936
    %v938 = vand.u32 %v937, 4294901760
    %v939 = vsub.f32 %v937, %v938
    %v940 = vand.u32 %v939, 4294901760
    %941 = vmatpush1.msra.mxu0 %v940
    %942 = vmatprep.subr.mxu0 0.0
    %v943 = vand.u32 %v791, 4294901760
    %v944 = vsub.f32 %v791, %v943
    %v945 = vand.u32 %v944, 4294901760
    %v946 = vsub.f32 %v944, %v945
    %v947 = vand.u32 %v946, 4294901760
    %948 = vmatpush1.msra.mxu0 %v947
    %949 = vmatprep.subr.mxu0 0.0
    %v950 = vand.u32 %v792, 4294901760
    %v951 = vsub.f32 %v792, %v950
    %v952 = vand.u32 %v951, 4294901760
    %v953 = vsub.f32 %v951, %v952
    %v954 = vand.u32 %v953, 4294901760
    %955 = vmatpush1.msra.mxu0 %v954
    %956 = vmatprep.subr.mxu0 0.0
    %v957 = vand.u32 %v793, 4294901760
    %v958 = vsub.f32 %v793, %v957
    %v959 = vand.u32 %v958, 4294901760
    %v960 = vsub.f32 %v958, %v959
    %v961 = vand.u32 %v960, 4294901760
    %962 = vmatpush1.msra.mxu0 %v961
    %963 = vmatprep.subr.mxu0 0.0
    %v964 = vand.u32 %v794, 4294901760
    %v965 = vsub.f32 %v794, %v964
    %v966 = vand.u32 %v965, 4294901760
    %v967 = vsub.f32 %v965, %v966
    %v968 = vand.u32 %v967, 4294901760
    %969 = vmatpush1.msra.mxu0 %v968
    %970 = vmatprep.subr.mxu0 0.0
    %v971 = vand.u32 %v795, 4294901760
    %v972 = vsub.f32 %v795, %v971
    %v973 = vand.u32 %v972, 4294901760
    %v974 = vsub.f32 %v972, %v973
    %v975 = vand.u32 %v974, 4294901760
    %976 = vmatpush1.msra.mxu0 %v975
    %977 = vmatprep.subr.mxu0 0.0
    %v978 = vand.u32 %v796, 4294901760
    %v979 = vsub.f32 %v796, %v978
    %v980 = vand.u32 %v979, 4294901760
    %v981 = vsub.f32 %v979, %v980
    %v982 = vand.u32 %v981, 4294901760
    %983 = vmatpush1.msra.mxu0 %v982
    %984 = vmatprep.subr.mxu0 0.0
    %v985 = vand.u32 %v797, 4294901760
    %v986 = vsub.f32 %v797, %v985
    %v987 = vand.u32 %v986, 4294901760
    %v988 = vsub.f32 %v986, %v987
    %v989 = vand.u32 %v988, 4294901760
    %990 = vmatpush1.msra.mxu0 %v989
    %991 = vmatprep.subr.mxu0 0.0
    %v992 = vand.u32 %v798, 4294901760
    %v993 = vsub.f32 %v798, %v992
    %v994 = vand.u32 %v993, 4294901760
    %v995 = vsub.f32 %v993, %v994
    %v996 = vand.u32 %v995, 4294901760
    %997 = vmatpush1.msra.mxu0 %v996
    %998 = vmatprep.subr.mxu0 0.0
    %v999 = vand.u32 %v799, 4294901760
    %v1000 = vsub.f32 %v799, %v999
    %v1001 = vand.u32 %v1000, 4294901760
    %v1002 = vsub.f32 %v1000, %v1001
    %v1003 = vand.u32 %v1002, 4294901760
    %1004 = vmatpush1.msra.mxu0 %v1003
    %1005 = vmatprep.subr.mxu0 0.0
    %1006 = vmatpush1.msra.mxu0 0.0
    %1007 = vmatprep.subr.mxu0 0.0
    %1008 = vmatpush1.msra.mxu0 0.0
    %1009 = vmatprep.subr.mxu0 0.0
    %1010 = vmatpush1.msra.mxu0 0.0
    %1011 = vmatprep.subr.mxu0 0.0
    %1012 = vmatpush1.msra.mxu0 0.0
    %1013 = vmatprep.subr.mxu0 0.0
    %1014 = vmatpush1.msra.mxu0 0.0
    %1015 = vmatprep.subr.mxu0 0.0
    %1016 = vmatpush1.msra.mxu0 0.0
    %1017 = vmatprep.subr.mxu0 0.0
    %1018 = vmatpush1.msra.mxu0 0.0
    %1019 = vmatprep.subr.mxu0 0.0
    %1020 = vmatpush1.msra.mxu0 0.0
    %1021 = vmatprep.subr.mxu0 0.0
    %1022 = vmatpush1.msra.mxu0 0.0
    %1023 = vmatprep.subr.mxu0 0.0
    %1024 = vmatpush1.msra.mxu0 0.0
    %1025 = vmatprep.subr.mxu0 0.0
    %1026 = vmatpush1.msra.mxu0 0.0
    %1027 = vmatprep.subr.mxu0 0.0
    %1028 = vmatpush1.msra.mxu0 0.0
    %1029 = vmatprep.subr.mxu0 0.0
    %1030 = vmatpush1.msra.mxu0 0.0
    %1031 = vmatprep.subr.mxu0 0.0
    %1032 = vmatpush1.msra.mxu0 0.0
    %1033 = vmatprep.subr.mxu0 0.0
    %1034 = vmatpush1.msra.mxu0 0.0
    %1035 = vmatprep.subr.mxu0 0.0
    %1036 = vmatpush1.msra.mxu0 0.0
    %1037 = vmatprep.mubr.f32.mxu0 0.0
    %v1038 = vand.u32 %v801, 4294901760
    %1039 = vmatmul.mubr.f32.gmra.mrb[0].mxu0 %v1038
    %v1040 = vpop.f32.mrb[0].mxu0
    %v1041 = vadd.f32 %v890, %v1040
    %v1042 = vpop.f32.mrb[0].mxu0
    %1043 = vdwg.mxu0
    %1044 = vmatprep.subr.mxu0 0.0
    %v1045 = vand.u32 %v784, 4294901760
    %v1046 = vsub.f32 %v784, %v1045
    %1047 = vmatpush1.msra.mxu0 %v1046
    %1048 = vmatprep.subr.mxu0 0.0
    %v1049 = vand.u32 %v785, 4294901760
    %v1050 = vsub.f32 %v785, %v1049
    %1051 = vmatpush1.msra.mxu0 %v1050
    %1052 = vmatprep.subr.mxu0 0.0
    %v1053 = vand.u32 %v786, 4294901760
    %v1054 = vsub.f32 %v786, %v1053
    %1055 = vmatpush1.msra.mxu0 %v1054
    %1056 = vmatprep.subr.mxu0 0.0
    %v1057 = vand.u32 %v787, 4294901760
    %v1058 = vsub.f32 %v787, %v1057
    %1059 = vmatpush1.msra.mxu0 %v1058
    %1060 = vmatprep.subr.mxu0 0.0
    %v1061 = vand.u32 %v788, 4294901760
    %v1062 = vsub.f32 %v788, %v1061
    %1063 = vmatpush1.msra.mxu0 %v1062
    %1064 = vmatprep.subr.mxu0 0.0
    %v1065 = vand.u32 %v789, 4294901760
    %v1066 = vsub.f32 %v789, %v1065
    %1067 = vmatpush1.msra.mxu0 %v1066
    %1068 = vmatprep.subr.mxu0 0.0
    %v1069 = vand.u32 %v790, 4294901760
    %v1070 = vsub.f32 %v790, %v1069
    %1071 = vmatpush1.msra.mxu0 %v1070
    %1072 = vmatprep.subr.mxu0 0.0
    %v1073 = vand.u32 %v791, 4294901760
    %v1074 = vsub.f32 %v791, %v1073
    %1075 = vmatpush1.msra.mxu0 %v1074
    %1076 = vmatprep.subr.mxu0 0.0
    %v1077 = vand.u32 %v792, 4294901760
    %v1078 = vsub.f32 %v792, %v1077
    %1079 = vmatpush1.msra.mxu0 %v1078
    %1080 = vmatprep.subr.mxu0 0.0
    %v1081 = vand.u32 %v793, 4294901760
    %v1082 = vsub.f32 %v793, %v1081
    %1083 = vmatpush1.msra.mxu0 %v1082
    %1084 = vmatprep.subr.mxu0 0.0
    %v1085 = vand.u32 %v794, 4294901760
    %v1086 = vsub.f32 %v794, %v1085
    %1087 = vmatpush1.msra.mxu0 %v1086
    %1088 = vmatprep.subr.mxu0 0.0
    %v1089 = vand.u32 %v795, 4294901760
    %v1090 = vsub.f32 %v795, %v1089
    %1091 = vmatpush1.msra.mxu0 %v1090
    %1092 = vmatprep.subr.mxu0 0.0
    %v1093 = vand.u32 %v796, 4294901760
    %v1094 = vsub.f32 %v796, %v1093
    %1095 = vmatpush1.msra.mxu0 %v1094
    %1096 = vmatprep.subr.mxu0 0.0
    %v1097 = vand.u32 %v797, 4294901760
    %v1098 = vsub.f32 %v797, %v1097
    %1099 = vmatpush1.msra.mxu0 %v1098
    %1100 = vmatprep.subr.mxu0 0.0
    %v1101 = vand.u32 %v798, 4294901760
    %v1102 = vsub.f32 %v798, %v1101
    %1103 = vmatpush1.msra.mxu0 %v1102
    %1104 = vmatprep.subr.mxu0 0.0
    %v1105 = vand.u32 %v799, 4294901760
    %v1106 = vsub.f32 %v799, %v1105
    %1107 = vmatpush1.msra.mxu0 %v1106
    %1108 = vmatprep.subr.mxu0 0.0
    %1109 = vmatpush1.msra.mxu0 0.0
    %1110 = vmatprep.subr.mxu0 0.0
    %1111 = vmatpush1.msra.mxu0 0.0
    %1112 = vmatprep.subr.mxu0 0.0
    %1113 = vmatpush1.msra.mxu0 0.0
    %1114 = vmatprep.subr.mxu0 0.0
    %1115 = vmatpush1.msra.mxu0 0.0
    %1116 = vmatprep.subr.mxu0 0.0
    %1117 = vmatpush1.msra.mxu0 0.0
    %1118 = vmatprep.subr.mxu0 0.0
    %1119 = vmatpush1.msra.mxu0 0.0
    %1120 = vmatprep.subr.mxu0 0.0
    %1121 = vmatpush1.msra.mxu0 0.0
    %1122 = vmatprep.subr.mxu0 0.0
    %1123 = vmatpush1.msra.mxu0 0.0
    %1124 = vmatprep.subr.mxu0 0.0
    %1125 = vmatpush1.msra.mxu0 0.0
    %1126 = vmatprep.subr.mxu0 0.0
    %1127 = vmatpush1.msra.mxu0 0.0
    %1128 = vmatprep.subr.mxu0 0.0
    %1129 = vmatpush1.msra.mxu0 0.0
    %1130 = vmatprep.subr.mxu0 0.0
    %1131 = vmatpush1.msra.mxu0 0.0
    %1132 = vmatprep.subr.mxu0 0.0
    %1133 = vmatpush1.msra.mxu0 0.0
    %1134 = vmatprep.subr.mxu0 0.0
    %1135 = vmatpush1.msra.mxu0 0.0
    %1136 = vmatprep.subr.mxu0 0.0
    %1137 = vmatpush1.msra.mxu0 0.0
    %1138 = vmatprep.subr.mxu0 0.0
    %1139 = vmatpush1.msra.mxu0 0.0
    %1140 = vmatprep.mubr.f32.mxu0 0.0
    %v1141 = vand.u32 %v801, 4294901760
    %v1142 = vsub.f32 %v801, %v1141
    %1143 = vmatmul.mubr.f32.gmra.mrb[0].mxu0 %v1142
    %v1144 = vpop.f32.mrb[0].mxu0
    %v1145 = vadd.f32 %v1041, %v1144
    %v1146 = vpop.f32.mrb[0].mxu0
    %1147 = vdwg.mxu0
    %1148 = vmatprep.subr.mxu0 0.0
    %v1149 = vand.u32 %v784, 4294901760
    %1150 = vmatpush1.msra.mxu0 %v1149
    %1151 = vmatprep.subr.mxu0 0.0
    %v1152 = vand.u32 %v785, 4294901760
    %1153 = vmatpush1.msra.mxu0 %v1152
    %1154 = vmatprep.subr.mxu0 0.0
    %v1155 = vand.u32 %v786, 4294901760
    %1156 = vmatpush1.msra.mxu0 %v1155
    %1157 = vmatprep.subr.mxu0 0.0
    %v1158 = vand.u32 %v787, 4294901760
    %1159 = vmatpush1.msra.mxu0 %v1158
    %1160 = vmatprep.subr.mxu0 0.0
    %v1161 = vand.u32 %v788, 4294901760
    %1162 = vmatpush1.msra.mxu0 %v1161
    %1163 = vmatprep.subr.mxu0 0.0
    %v1164 = vand.u32 %v789, 4294901760
    %1165 = vmatpush1.msra.mxu0 %v1164
    %1166 = vmatprep.subr.mxu0 0.0
    %v1167 = vand.u32 %v790, 4294901760
    %1168 = vmatpush1.msra.mxu0 %v1167
    %1169 = vmatprep.subr.mxu0 0.0
    %v1170 = vand.u32 %v791, 4294901760
    %1171 = vmatpush1.msra.mxu0 %v1170
    %1172 = vmatprep.subr.mxu0 0.0
    %v1173 = vand.u32 %v792, 4294901760
    %1174 = vmatpush1.msra.mxu0 %v1173
    %1175 = vmatprep.subr.mxu0 0.0
    %v1176 = vand.u32 %v793, 4294901760
    %1177 = vmatpush1.msra.mxu0 %v1176
    %1178 = vmatprep.subr.mxu0 0.0
    %v1179 = vand.u32 %v794, 4294901760
    %1180 = vmatpush1.msra.mxu0 %v1179
    %1181 = vmatprep.subr.mxu0 0.0
    %v1182 = vand.u32 %v795, 4294901760
    %1183 = vmatpush1.msra.mxu0 %v1182
    %1184 = vmatprep.subr.mxu0 0.0
    %v1185 = vand.u32 %v796, 4294901760
    %1186 = vmatpush1.msra.mxu0 %v1185
    %1187 = vmatprep.subr.mxu0 0.0
    %v1188 = vand.u32 %v797, 4294901760
    %1189 = vmatpush1.msra.mxu0 %v1188
    %1190 = vmatprep.subr.mxu0 0.0
    %v1191 = vand.u32 %v798, 4294901760
    %1192 = vmatpush1.msra.mxu0 %v1191
    %1193 = vmatprep.subr.mxu0 0.0
    %v1194 = vand.u32 %v799, 4294901760
    %1195 = vmatpush1.msra.mxu0 %v1194
    %1196 = vmatprep.subr.mxu0 0.0
    %1197 = vmatpush1.msra.mxu0 0.0
    %1198 = vmatprep.subr.mxu0 0.0
    %1199 = vmatpush1.msra.mxu0 0.0
    %1200 = vmatprep.subr.mxu0 0.0
    %1201 = vmatpush1.msra.mxu0 0.0
    %1202 = vmatprep.subr.mxu0 0.0
    %1203 = vmatpush1.msra.mxu0 0.0
    %1204 = vmatprep.subr.mxu0 0.0
    %1205 = vmatpush1.msra.mxu0 0.0
    %1206 = vmatprep.subr.mxu0 0.0
    %1207 = vmatpush1.msra.mxu0 0.0
    %1208 = vmatprep.subr.mxu0 0.0
    %1209 = vmatpush1.msra.mxu0 0.0
    %1210 = vmatprep.subr.mxu0 0.0
    %1211 = vmatpush1.msra.mxu0 0.0
    %1212 = vmatprep.subr.mxu0 0.0
    %1213 = vmatpush1.msra.mxu0 0.0
    %1214 = vmatprep.subr.mxu0 0.0
    %1215 = vmatpush1.msra.mxu0 0.0
    %1216 = vmatprep.subr.mxu0 0.0
    %1217 = vmatpush1.msra.mxu0 0.0
    %1218 = vmatprep.subr.mxu0 0.0
    %1219 = vmatpush1.msra.mxu0 0.0
    %1220 = vmatprep.subr.mxu0 0.0
    %1221 = vmatpush1.msra.mxu0 0.0
    %1222 = vmatprep.subr.mxu0 0.0
    %1223 = vmatpush1.msra.mxu0 0.0
    %1224 = vmatprep.subr.mxu0 0.0
    %1225 = vmatpush1.msra.mxu0 0.0
    %1226 = vmatprep.subr.mxu0 0.0
    %1227 = vmatpush1.msra.mxu0 0.0
    %1228 = vmatprep.mubr.f32.mxu0 0.0
    %v1229 = vand.u32 %v801, 4294901760
    %v1230 = vsub.f32 %v801, %v1229
    %v1231 = vand.u32 %v1230, 4294901760
    %1232 = vmatmul.mubr.f32.gmra.mrb[0].mxu0 %v1231
    %v1233 = vpop.f32.mrb[0].mxu0
    %v1234 = vadd.f32 %v1145, %v1233
    %v1235 = vpop.f32.mrb[0].mxu0
    %1236 = vdwg.mxu0
    %1237 = vmatprep.subr.mxu0 0.0
    %v1238 = vand.u32 %v784, 4294901760
    %v1239 = vsub.f32 %v784, %v1238
    %v1240 = vand.u32 %v1239, 4294901760
    %1241 = vmatpush1.msra.mxu0 %v1240
    %1242 = vmatprep.subr.mxu0 0.0
    %v1243 = vand.u32 %v785, 4294901760
    %v1244 = vsub.f32 %v785, %v1243
    %v1245 = vand.u32 %v1244, 4294901760
    %1246 = vmatpush1.msra.mxu0 %v1245
    %1247 = vmatprep.subr.mxu0 0.0
    %v1248 = vand.u32 %v786, 4294901760
    %v1249 = vsub.f32 %v786, %v1248
    %v1250 = vand.u32 %v1249, 4294901760
    %1251 = vmatpush1.msra.mxu0 %v1250
    %1252 = vmatprep.subr.mxu0 0.0
    %v1253 = vand.u32 %v787, 4294901760
    %v1254 = vsub.f32 %v787, %v1253
    %v1255 = vand.u32 %v1254, 4294901760
    %1256 = vmatpush1.msra.mxu0 %v1255
    %1257 = vmatprep.subr.mxu0 0.0
    %v1258 = vand.u32 %v788, 4294901760
    %v1259 = vsub.f32 %v788, %v1258
    %v1260 = vand.u32 %v1259, 4294901760
    %1261 = vmatpush1.msra.mxu0 %v1260
    %1262 = vmatprep.subr.mxu0 0.0
    %v1263 = vand.u32 %v789, 4294901760
    %v1264 = vsub.f32 %v789, %v1263
    %v1265 = vand.u32 %v1264, 4294901760
    %1266 = vmatpush1.msra.mxu0 %v1265
    %1267 = vmatprep.subr.mxu0 0.0
    %v1268 = vand.u32 %v790, 4294901760
    %v1269 = vsub.f32 %v790, %v1268
    %v1270 = vand.u32 %v1269, 4294901760
    %1271 = vmatpush1.msra.mxu0 %v1270
    %1272 = vmatprep.subr.mxu0 0.0
    %v1273 = vand.u32 %v791, 4294901760
    %v1274 = vsub.f32 %v791, %v1273
    %v1275 = vand.u32 %v1274, 4294901760
    %1276 = vmatpush1.msra.mxu0 %v1275
    %1277 = vmatprep.subr.mxu0 0.0
    %v1278 = vand.u32 %v792, 4294901760
    %v1279 = vsub.f32 %v792, %v1278
    %v1280 = vand.u32 %v1279, 4294901760
    %1281 = vmatpush1.msra.mxu0 %v1280
    %1282 = vmatprep.subr.mxu0 0.0
    %v1283 = vand.u32 %v793, 4294901760
    %v1284 = vsub.f32 %v793, %v1283
    %v1285 = vand.u32 %v1284, 4294901760
    %1286 = vmatpush1.msra.mxu0 %v1285
    %1287 = vmatprep.subr.mxu0 0.0
    %v1288 = vand.u32 %v794, 4294901760
    %v1289 = vsub.f32 %v794, %v1288
    %v1290 = vand.u32 %v1289, 4294901760
    %1291 = vmatpush1.msra.mxu0 %v1290
    %1292 = vmatprep.subr.mxu0 0.0
    %v1293 = vand.u32 %v795, 4294901760
    %v1294 = vsub.f32 %v795, %v1293
    %v1295 = vand.u32 %v1294, 4294901760
    %1296 = vmatpush1.msra.mxu0 %v1295
    %1297 = vmatprep.subr.mxu0 0.0
    %v1298 = vand.u32 %v796, 4294901760
    %v1299 = vsub.f32 %v796, %v1298
    %v1300 = vand.u32 %v1299, 4294901760
    %1301 = vmatpush1.msra.mxu0 %v1300
    %1302 = vmatprep.subr.mxu0 0.0
    %v1303 = vand.u32 %v797, 4294901760
    %v1304 = vsub.f32 %v797, %v1303
    %v1305 = vand.u32 %v1304, 4294901760
    %1306 = vmatpush1.msra.mxu0 %v1305
    %1307 = vmatprep.subr.mxu0 0.0
    %v1308 = vand.u32 %v798, 4294901760
    %v1309 = vsub.f32 %v798, %v1308
    %v1310 = vand.u32 %v1309, 4294901760
    %1311 = vmatpush1.msra.mxu0 %v1310
    %1312 = vmatprep.subr.mxu0 0.0
    %v1313 = vand.u32 %v799, 4294901760
    %v1314 = vsub.f32 %v799, %v1313
    %v1315 = vand.u32 %v1314, 4294901760
    %1316 = vmatpush1.msra.mxu0 %v1315
    %1317 = vmatprep.subr.mxu0 0.0
    %1318 = vmatpush1.msra.mxu0 0.0
    %1319 = vmatprep.subr.mxu0 0.0
    %1320 = vmatpush1.msra.mxu0 0.0
    %1321 = vmatprep.subr.mxu0 0.0
    %1322 = vmatpush1.msra.mxu0 0.0
    %1323 = vmatprep.subr.mxu0 0.0
    %1324 = vmatpush1.msra.mxu0 0.0
    %1325 = vmatprep.subr.mxu0 0.0
    %1326 = vmatpush1.msra.mxu0 0.0
    %1327 = vmatprep.subr.mxu0 0.0
    %1328 = vmatpush1.msra.mxu0 0.0
    %1329 = vmatprep.subr.mxu0 0.0
    %1330 = vmatpush1.msra.mxu0 0.0
    %1331 = vmatprep.subr.mxu0 0.0
    %1332 = vmatpush1.msra.mxu0 0.0
    %1333 = vmatprep.subr.mxu0 0.0
    %1334 = vmatpush1.msra.mxu0 0.0
    %1335 = vmatprep.subr.mxu0 0.0
    %1336 = vmatpush1.msra.mxu0 0.0
    %1337 = vmatprep.subr.mxu0 0.0
    %1338 = vmatpush1.msra.mxu0 0.0
    %1339 = vmatprep.subr.mxu0 0.0
    %1340 = vmatpush1.msra.mxu0 0.0
    %1341 = vmatprep.subr.mxu0 0.0
    %1342 = vmatpush1.msra.mxu0 0.0
    %1343 = vmatprep.subr.mxu0 0.0
    %1344 = vmatpush1.msra.mxu0 0.0
    %1345 = vmatprep.subr.mxu0 0.0
    %1346 = vmatpush1.msra.mxu0 0.0
    %1347 = vmatprep.subr.mxu0 0.0
    %1348 = vmatpush1.msra.mxu0 0.0
    %1349 = vmatprep.mubr.f32.mxu0 0.0
    %v1350 = vand.u32 %v801, 4294901760
    %1351 = vmatmul.mubr.f32.gmra.mrb[0].mxu0 %v1350
    %v1352 = vpop.f32.mrb[0].mxu0
    %v1353 = vadd.f32 %v1234, %v1352
    %v1354 = vpop.f32.mrb[0].mxu0
    %1355 = vdwg.mxu0
    %1356 = vmatprep.subr.mxu0 0.0
    %v1357 = vand.u32 %v784, 4294901760
    %1358 = vmatpush1.msra.mxu0 %v1357
    %1359 = vmatprep.subr.mxu0 0.0
    %v1360 = vand.u32 %v785, 4294901760
    %1361 = vmatpush1.msra.mxu0 %v1360
    %1362 = vmatprep.subr.mxu0 0.0
    %v1363 = vand.u32 %v786, 4294901760
    %1364 = vmatpush1.msra.mxu0 %v1363
    %1365 = vmatprep.subr.mxu0 0.0
    %v1366 = vand.u32 %v787, 4294901760
    %1367 = vmatpush1.msra.mxu0 %v1366
    %1368 = vmatprep.subr.mxu0 0.0
    %v1369 = vand.u32 %v788, 4294901760
    %1370 = vmatpush1.msra.mxu0 %v1369
    %1371 = vmatprep.subr.mxu0 0.0
    %v1372 = vand.u32 %v789, 4294901760
    %1373 = vmatpush1.msra.mxu0 %v1372
    %1374 = vmatprep.subr.mxu0 0.0
    %v1375 = vand.u32 %v790, 4294901760
    %1376 = vmatpush1.msra.mxu0 %v1375
    %1377 = vmatprep.subr.mxu0 0.0
    %v1378 = vand.u32 %v791, 4294901760
    %1379 = vmatpush1.msra.mxu0 %v1378
    %1380 = vmatprep.subr.mxu0 0.0
    %v1381 = vand.u32 %v792, 4294901760
    %1382 = vmatpush1.msra.mxu0 %v1381
    %1383 = vmatprep.subr.mxu0 0.0
    %v1384 = vand.u32 %v793, 4294901760
    %1385 = vmatpush1.msra.mxu0 %v1384
    %1386 = vmatprep.subr.mxu0 0.0
    %v1387 = vand.u32 %v794, 4294901760
    %1388 = vmatpush1.msra.mxu0 %v1387
    %1389 = vmatprep.subr.mxu0 0.0
    %v1390 = vand.u32 %v795, 4294901760
    %1391 = vmatpush1.msra.mxu0 %v1390
    %1392 = vmatprep.subr.mxu0 0.0
    %v1393 = vand.u32 %v796, 4294901760
    %1394 = vmatpush1.msra.mxu0 %v1393
    %1395 = vmatprep.subr.mxu0 0.0
    %v1396 = vand.u32 %v797, 4294901760
    %1397 = vmatpush1.msra.mxu0 %v1396
    %1398 = vmatprep.subr.mxu0 0.0
    %v1399 = vand.u32 %v798, 4294901760
    %1400 = vmatpush1.msra.mxu0 %v1399
    %1401 = vmatprep.subr.mxu0 0.0
    %v1402 = vand.u32 %v799, 4294901760
    %1403 = vmatpush1.msra.mxu0 %v1402
    %1404 = vmatprep.subr.mxu0 0.0
    %1405 = vmatpush1.msra.mxu0 0.0
    %1406 = vmatprep.subr.mxu0 0.0
    %1407 = vmatpush1.msra.mxu0 0.0
    %1408 = vmatprep.subr.mxu0 0.0
    %1409 = vmatpush1.msra.mxu0 0.0
    %1410 = vmatprep.subr.mxu0 0.0
    %1411 = vmatpush1.msra.mxu0 0.0
    %1412 = vmatprep.subr.mxu0 0.0
    %1413 = vmatpush1.msra.mxu0 0.0
    %1414 = vmatprep.subr.mxu0 0.0
    %1415 = vmatpush1.msra.mxu0 0.0
    %1416 = vmatprep.subr.mxu0 0.0
    %1417 = vmatpush1.msra.mxu0 0.0
    %1418 = vmatprep.subr.mxu0 0.0
    %1419 = vmatpush1.msra.mxu0 0.0
    %1420 = vmatprep.subr.mxu0 0.0
    %1421 = vmatpush1.msra.mxu0 0.0
    %1422 = vmatprep.subr.mxu0 0.0
    %1423 = vmatpush1.msra.mxu0 0.0
    %1424 = vmatprep.subr.mxu0 0.0
    %1425 = vmatpush1.msra.mxu0 0.0
    %1426 = vmatprep.subr.mxu0 0.0
    %1427 = vmatpush1.msra.mxu0 0.0
    %1428 = vmatprep.subr.mxu0 0.0
    %1429 = vmatpush1.msra.mxu0 0.0
    %1430 = vmatprep.subr.mxu0 0.0
    %1431 = vmatpush1.msra.mxu0 0.0
    %1432 = vmatprep.subr.mxu0 0.0
    %1433 = vmatpush1.msra.mxu0 0.0
    %1434 = vmatprep.subr.mxu0 0.0
    %1435 = vmatpush1.msra.mxu0 0.0
    %1436 = vmatprep.mubr.f32.mxu0 0.0
    %v1437 = vand.u32 %v801, 4294901760
    %1438 = vmatmul.mubr.f32.gmra.mrb[0].mxu0 %v1437
    %v1439 = vpop.f32.mrb[0].mxu0
    %v1440 = vadd.f32 %v1353, %v1439
    %v1441 = vpop.f32.mrb[0].mxu0
    %1442 = vdwg.mxu0
    %v1443 = vadd.f32 %v746, %v1440
    %v1444 = vld [vmem:[%s0 + $0x2] sm:$0x1]
    %v1445 = vlaneseq
    %v1446 = vshrl.u32 %v1445, 7
    %v1447 = vsub.s32 0, %v1446
    %v1448 = vrot.slane %v1444, %v1447
    %vm1449 = vcmp.eq.s32.totalorder %v36, %v1448
    %vm1450 = vcmp.eq.s32.totalorder %v37, %v1448
    %vm1451 = vcmp.eq.s32.totalorder %v38, %v1448
    %vm1452 = vcmp.eq.s32.totalorder %v39, %v1448
    %vm1453 = vcmp.eq.s32.totalorder %v40, %v1448
    %vm1454 = vcmp.eq.s32.totalorder %v41, %v1448
    %vm1455 = vcmp.eq.s32.totalorder %v42, %v1448
    %vm1456 = vcmp.eq.s32.totalorder %v43, %v1448
    %vm1457 = vcmp.eq.s32.totalorder %v44, %v1448
    %vm1458 = vcmp.eq.s32.totalorder %v45, %v1448
    %vm1459 = vcmp.eq.s32.totalorder %v46, %v1448
    %vm1460 = vcmp.eq.s32.totalorder %v47, %v1448
    %vm1461 = vcmp.eq.s32.totalorder %v48, %v1448
    %vm1462 = vcmp.eq.s32.totalorder %v49, %v1448
    %vm1463 = vcmp.eq.s32.totalorder %v50, %v1448
    %vm1464 = vcmp.eq.s32.totalorder %v51, %v1448
    %v1465 = vsel %vm1449, 1, 0
    %v1466 = vsel %vm1450, 1, 0
    %v1467 = vsel %vm1451, 1, 0
    %v1468 = vsel %vm1452, 1, 0
    %v1469 = vsel %vm1453, 1, 0
    %v1470 = vsel %vm1454, 1, 0
    %v1471 = vsel %vm1455, 1, 0
    %v1472 = vsel %vm1456, 1, 0
    %v1473 = vsel %vm1457, 1, 0
    %v1474 = vsel %vm1458, 1, 0
    %v1475 = vsel %vm1459, 1, 0
    %v1476 = vsel %vm1460, 1, 0
    %v1477 = vsel %vm1461, 1, 0
    %v1478 = vsel %vm1462, 1, 0
    %v1479 = vsel %vm1463, 1, 0
    %v1480 = vsel %vm1464, 1, 0
    %v1481 = vcvt.s32.f32 %v1465
    %v1482 = vcvt.s32.f32 %v1466
    %v1483 = vcvt.s32.f32 %v1467
    %v1484 = vcvt.s32.f32 %v1468
    %v1485 = vcvt.s32.f32 %v1469
    %v1486 = vcvt.s32.f32 %v1470
    %v1487 = vcvt.s32.f32 %v1471
    %v1488 = vcvt.s32.f32 %v1472
    %v1489 = vcvt.s32.f32 %v1473
    %v1490 = vcvt.s32.f32 %v1474
    %v1491 = vcvt.s32.f32 %v1475
    %v1492 = vcvt.s32.f32 %v1476
    %v1493 = vcvt.s32.f32 %v1477
    %v1494 = vcvt.s32.f32 %v1478
    %v1495 = vcvt.s32.f32 %v1479
    %v1496 = vcvt.s32.f32 %v1480
    %s1497 = scalar_lea.vmem [#allocation2], 16
    %v1498 = vld [vmem:[%s1497] sm:$0xff]
    %1499 = vmatprep.subr.mxu0 0.0
    %v1500 = vand.u32 %v1481, 4294901760
    %1501 = vmatpush1.msra.mxu0 %v1500
    %1502 = vmatprep.subr.mxu0 0.0
    %v1503 = vand.u32 %v1482, 4294901760
    %1504 = vmatpush1.msra.mxu0 %v1503
    %1505 = vmatprep.subr.mxu0 0.0
    %v1506 = vand.u32 %v1483, 4294901760
    %1507 = vmatpush1.msra.mxu0 %v1506
    %1508 = vmatprep.subr.mxu0 0.0
    %v1509 = vand.u32 %v1484, 4294901760
    %1510 = vmatpush1.msra.mxu0 %v1509
    %1511 = vmatprep.subr.mxu0 0.0
    %v1512 = vand.u32 %v1485, 4294901760
    %1513 = vmatpush1.msra.mxu0 %v1512
    %1514 = vmatprep.subr.mxu0 0.0
    %v1515 = vand.u32 %v1486, 4294901760
    %1516 = vmatpush1.msra.mxu0 %v1515
    %1517 = vmatprep.subr.mxu0 0.0
    %v1518 = vand.u32 %v1487, 4294901760
    %1519 = vmatpush1.msra.mxu0 %v1518
    %1520 = vmatprep.subr.mxu0 0.0
    %v1521 = vand.u32 %v1488, 4294901760
    %1522 = vmatpush1.msra.mxu0 %v1521
    %1523 = vmatprep.subr.mxu0 0.0
    %v1524 = vand.u32 %v1489, 4294901760
    %1525 = vmatpush1.msra.mxu0 %v1524
    %1526 = vmatprep.subr.mxu0 0.0
    %v1527 = vand.u32 %v1490, 4294901760
    %1528 = vmatpush1.msra.mxu0 %v1527
    %1529 = vmatprep.subr.mxu0 0.0
    %v1530 = vand.u32 %v1491, 4294901760
    %1531 = vmatpush1.msra.mxu0 %v1530
    %1532 = vmatprep.subr.mxu0 0.0
    %v1533 = vand.u32 %v1492, 4294901760
    %1534 = vmatpush1.msra.mxu0 %v1533
    %1535 = vmatprep.subr.mxu0 0.0
    %v1536 = vand.u32 %v1493, 4294901760
    %1537 = vmatpush1.msra.mxu0 %v1536
    %1538 = vmatprep.subr.mxu0 0.0
    %v1539 = vand.u32 %v1494, 4294901760
    %1540 = vmatpush1.msra.mxu0 %v1539
    %1541 = vmatprep.subr.mxu0 0.0
    %v1542 = vand.u32 %v1495, 4294901760
    %1543 = vmatpush1.msra.mxu0 %v1542
    %1544 = vmatprep.subr.mxu0 0.0
    %v1545 = vand.u32 %v1496, 4294901760
    %1546 = vmatpush1.msra.mxu0 %v1545
    %1547 = vmatprep.subr.mxu0 0.0
    %1548 = vmatpush1.msra.mxu0 0.0
    %1549 = vmatprep.subr.mxu0 0.0
    %1550 = vmatpush1.msra.mxu0 0.0
    %1551 = vmatprep.subr.mxu0 0.0
    %1552 = vmatpush1.msra.mxu0 0.0
    %1553 = vmatprep.subr.mxu0 0.0
    %1554 = vmatpush1.msra.mxu0 0.0
    %1555 = vmatprep.subr.mxu0 0.0
    %1556 = vmatpush1.msra.mxu0 0.0
    %1557 = vmatprep.subr.mxu0 0.0
    %1558 = vmatpush1.msra.mxu0 0.0
    %1559 = vmatprep.subr.mxu0 0.0
    %1560 = vmatpush1.msra.mxu0 0.0
    %1561 = vmatprep.subr.mxu0 0.0
    %1562 = vmatpush1.msra.mxu0 0.0
    %1563 = vmatprep.subr.mxu0 0.0
    %1564 = vmatpush1.msra.mxu0 0.0
    %1565 = vmatprep.subr.mxu0 0.0
    %1566 = vmatpush1.msra.mxu0 0.0
    %1567 = vmatprep.subr.mxu0 0.0
    %1568 = vmatpush1.msra.mxu0 0.0
    %1569 = vmatprep.subr.mxu0 0.0
    %1570 = vmatpush1.msra.mxu0 0.0
    %1571 = vmatprep.subr.mxu0 0.0
    %1572 = vmatpush1.msra.mxu0 0.0
    %1573 = vmatprep.subr.mxu0 0.0
    %1574 = vmatpush1.msra.mxu0 0.0
    %1575 = vmatprep.subr.mxu0 0.0
    %1576 = vmatpush1.msra.mxu0 0.0
    %1577 = vmatprep.subr.mxu0 0.0
    %1578 = vmatpush1.msra.mxu0 0.0
    %1579 = vmatprep.mubr.f32.mxu0 0.0
    %v1580 = vand.u32 %v1498, 4294901760
    %v1581 = vsub.f32 %v1498, %v1580
    %v1582 = vand.u32 %v1581, 4294901760
    %v1583 = vsub.f32 %v1581, %v1582
    %v1584 = vand.u32 %v1583, 4294901760
    %1585 = vmatmul.mubr.f32.gmra.mrb[0].mxu0 %v1584
    %v1586 = vpop.f32.mrb[0].mxu0
    %v1587 = vadd.f32 0.0, %v1586
    %v1588 = vpop.f32.mrb[0].mxu0
    %1589 = vdwg.mxu0
    %1590 = vmatprep.subr.mxu0 0.0
    %v1591 = vand.u32 %v1481, 4294901760
    %v1592 = vsub.f32 %v1481, %v1591
    %v1593 = vand.u32 %v1592, 4294901760
    %v1594 = vsub.f32 %v1592, %v1593
    %v1595 = vand.u32 %v1594, 4294901760
    %1596 = vmatpush1.msra.mxu0 %v1595
    %1597 = vmatprep.subr.mxu0 0.0
    %v1598 = vand.u32 %v1482, 4294901760
    %v1599 = vsub.f32 %v1482, %v1598
    %v1600 = vand.u32 %v1599, 4294901760
    %v1601 = vsub.f32 %v1599, %v1600
    %v1602 = vand.u32 %v1601, 4294901760
    %1603 = vmatpush1.msra.mxu0 %v1602
    %1604 = vmatprep.subr.mxu0 0.0
    %v1605 = vand.u32 %v1483, 4294901760
    %v1606 = vsub.f32 %v1483, %v1605
    %v1607 = vand.u32 %v1606, 4294901760
    %v1608 = vsub.f32 %v1606, %v1607
    %v1609 = vand.u32 %v1608, 4294901760
    %1610 = vmatpush1.msra.mxu0 %v1609
    %1611 = vmatprep.subr.mxu0 0.0
    %v1612 = vand.u32 %v1484, 4294901760
    %v1613 = vsub.f32 %v1484, %v1612
    %v1614 = vand.u32 %v1613, 4294901760
    %v1615 = vsub.f32 %v1613, %v1614
    %v1616 = vand.u32 %v1615, 4294901760
    %1617 = vmatpush1.msra.mxu0 %v1616
    %1618 = vmatprep.subr.mxu0 0.0
    %v1619 = vand.u32 %v1485, 4294901760
    %v1620 = vsub.f32 %v1485, %v1619
    %v1621 = vand.u32 %v1620, 4294901760
    %v1622 = vsub.f32 %v1620, %v1621
    %v1623 = vand.u32 %v1622, 4294901760
    %1624 = vmatpush1.msra.mxu0 %v1623
    %1625 = vmatprep.subr.mxu0 0.0
    %v1626 = vand.u32 %v1486, 4294901760
    %v1627 = vsub.f32 %v1486, %v1626
    %v1628 = vand.u32 %v1627, 4294901760
    %v1629 = vsub.f32 %v1627, %v1628
    %v1630 = vand.u32 %v1629, 4294901760
    %1631 = vmatpush1.msra.mxu0 %v1630
    %1632 = vmatprep.subr.mxu0 0.0
    %v1633 = vand.u32 %v1487, 4294901760
    %v1634 = vsub.f32 %v1487, %v1633
    %v1635 = vand.u32 %v1634, 4294901760
    %v1636 = vsub.f32 %v1634, %v1635
    %v1637 = vand.u32 %v1636, 4294901760
    %1638 = vmatpush1.msra.mxu0 %v1637
    %1639 = vmatprep.subr.mxu0 0.0
    %v1640 = vand.u32 %v1488, 4294901760
    %v1641 = vsub.f32 %v1488, %v1640
    %v1642 = vand.u32 %v1641, 4294901760
    %v1643 = vsub.f32 %v1641, %v1642
    %v1644 = vand.u32 %v1643, 4294901760
    %1645 = vmatpush1.msra.mxu0 %v1644
    %1646 = vmatprep.subr.mxu0 0.0
    %v1647 = vand.u32 %v1489, 4294901760
    %v1648 = vsub.f32 %v1489, %v1647
    %v1649 = vand.u32 %v1648, 4294901760
    %v1650 = vsub.f32 %v1648, %v1649
    %v1651 = vand.u32 %v1650, 4294901760
    %1652 = vmatpush1.msra.mxu0 %v1651
    %1653 = vmatprep.subr.mxu0 0.0
    %v1654 = vand.u32 %v1490, 4294901760
    %v1655 = vsub.f32 %v1490, %v1654
    %v1656 = vand.u32 %v1655, 4294901760
    %v1657 = vsub.f32 %v1655, %v1656
    %v1658 = vand.u32 %v1657, 4294901760
    %1659 = vmatpush1.msra.mxu0 %v1658
    %1660 = vmatprep.subr.mxu0 0.0
    %v1661 = vand.u32 %v1491, 4294901760
    %v1662 = vsub.f32 %v1491, %v1661
    %v1663 = vand.u32 %v1662, 4294901760
    %v1664 = vsub.f32 %v1662, %v1663
    %v1665 = vand.u32 %v1664, 4294901760
    %1666 = vmatpush1.msra.mxu0 %v1665
    %1667 = vmatprep.subr.mxu0 0.0
    %v1668 = vand.u32 %v1492, 4294901760
    %v1669 = vsub.f32 %v1492, %v1668
    %v1670 = vand.u32 %v1669, 4294901760
    %v1671 = vsub.f32 %v1669, %v1670
    %v1672 = vand.u32 %v1671, 4294901760
    %1673 = vmatpush1.msra.mxu0 %v1672
    %1674 = vmatprep.subr.mxu0 0.0
    %v1675 = vand.u32 %v1493, 4294901760
    %v1676 = vsub.f32 %v1493, %v1675
    %v1677 = vand.u32 %v1676, 4294901760
    %v1678 = vsub.f32 %v1676, %v1677
    %v1679 = vand.u32 %v1678, 4294901760
    %1680 = vmatpush1.msra.mxu0 %v1679
    %1681 = vmatprep.subr.mxu0 0.0
    %v1682 = vand.u32 %v1494, 4294901760
    %v1683 = vsub.f32 %v1494, %v1682
    %v1684 = vand.u32 %v1683, 4294901760
    %v1685 = vsub.f32 %v1683, %v1684
    %v1686 = vand.u32 %v1685, 4294901760
    %1687 = vmatpush1.msra.mxu0 %v1686
    %1688 = vmatprep.subr.mxu0 0.0
    %v1689 = vand.u32 %v1495, 4294901760
    %v1690 = vsub.f32 %v1495, %v1689
    %v1691 = vand.u32 %v1690, 4294901760
    %v1692 = vsub.f32 %v1690, %v1691
    %v1693 = vand.u32 %v1692, 4294901760
    %1694 = vmatpush1.msra.mxu0 %v1693
    %1695 = vmatprep.subr.mxu0 0.0
    %v1696 = vand.u32 %v1496, 4294901760
    %v1697 = vsub.f32 %v1496, %v1696
    %v1698 = vand.u32 %v1697, 4294901760
    %v1699 = vsub.f32 %v1697, %v1698
    %v1700 = vand.u32 %v1699, 4294901760
    %1701 = vmatpush1.msra.mxu0 %v1700
    %1702 = vmatprep.subr.mxu0 0.0
    %1703 = vmatpush1.msra.mxu0 0.0
    %1704 = vmatprep.subr.mxu0 0.0
    %1705 = vmatpush1.msra.mxu0 0.0
    %1706 = vmatprep.subr.mxu0 0.0
    %1707 = vmatpush1.msra.mxu0 0.0
    %1708 = vmatprep.subr.mxu0 0.0
    %1709 = vmatpush1.msra.mxu0 0.0
    %1710 = vmatprep.subr.mxu0 0.0
    %1711 = vmatpush1.msra.mxu0 0.0
    %1712 = vmatprep.subr.mxu0 0.0
    %1713 = vmatpush1.msra.mxu0 0.0
    %1714 = vmatprep.subr.mxu0 0.0
    %1715 = vmatpush1.msra.mxu0 0.0
    %1716 = vmatprep.subr.mxu0 0.0
    %1717 = vmatpush1.msra.mxu0 0.0
    %1718 = vmatprep.subr.mxu0 0.0
    %1719 = vmatpush1.msra.mxu0 0.0
    %1720 = vmatprep.subr.mxu0 0.0
    %1721 = vmatpush1.msra.mxu0 0.0
    %1722 = vmatprep.subr.mxu0 0.0
    %1723 = vmatpush1.msra.mxu0 0.0
    %1724 = vmatprep.subr.mxu0 0.0
    %1725 = vmatpush1.msra.mxu0 0.0
    %1726 = vmatprep.subr.mxu0 0.0
    %1727 = vmatpush1.msra.mxu0 0.0
    %1728 = vmatprep.subr.mxu0 0.0
    %1729 = vmatpush1.msra.mxu0 0.0
    %1730 = vmatprep.subr.mxu0 0.0
    %1731 = vmatpush1.msra.mxu0 0.0
    %1732 = vmatprep.subr.mxu0 0.0
    %1733 = vmatpush1.msra.mxu0 0.0
    %1734 = vmatprep.mubr.f32.mxu0 0.0
    %v1735 = vand.u32 %v1498, 4294901760
    %1736 = vmatmul.mubr.f32.gmra.mrb[0].mxu0 %v1735
    %v1737 = vpop.f32.mrb[0].mxu0
    %v1738 = vadd.f32 %v1587, %v1737
    %v1739 = vpop.f32.mrb[0].mxu0
    %1740 = vdwg.mxu0
    %1741 = vmatprep.subr.mxu0 0.0
    %v1742 = vand.u32 %v1481, 4294901760
    %v1743 = vsub.f32 %v1481, %v1742
    %1744 = vmatpush1.msra.mxu0 %v1743
    %1745 = vmatprep.subr.mxu0 0.0
    %v1746 = vand.u32 %v1482, 4294901760
    %v1747 = vsub.f32 %v1482, %v1746
    %1748 = vmatpush1.msra.mxu0 %v1747
    %1749 = vmatprep.subr.mxu0 0.0
    %v1750 = vand.u32 %v1483, 4294901760
    %v1751 = vsub.f32 %v1483, %v1750
    %1752 = vmatpush1.msra.mxu0 %v1751
    %1753 = vmatprep.subr.mxu0 0.0
    %v1754 = vand.u32 %v1484, 4294901760
    %v1755 = vsub.f32 %v1484, %v1754
    %1756 = vmatpush1.msra.mxu0 %v1755
    %1757 = vmatprep.subr.mxu0 0.0
    %v1758 = vand.u32 %v1485, 4294901760
    %v1759 = vsub.f32 %v1485, %v1758
    %1760 = vmatpush1.msra.mxu0 %v1759
    %1761 = vmatprep.subr.mxu0 0.0
    %v1762 = vand.u32 %v1486, 4294901760
    %v1763 = vsub.f32 %v1486, %v1762
    %1764 = vmatpush1.msra.mxu0 %v1763
    %1765 = vmatprep.subr.mxu0 0.0
    %v1766 = vand.u32 %v1487, 4294901760
    %v1767 = vsub.f32 %v1487, %v1766
    %1768 = vmatpush1.msra.mxu0 %v1767
    %1769 = vmatprep.subr.mxu0 0.0
    %v1770 = vand.u32 %v1488, 4294901760
    %v1771 = vsub.f32 %v1488, %v1770
    %1772 = vmatpush1.msra.mxu0 %v1771
    %1773 = vmatprep.subr.mxu0 0.0
    %v1774 = vand.u32 %v1489, 4294901760
    %v1775 = vsub.f32 %v1489, %v1774
    %1776 = vmatpush1.msra.mxu0 %v1775
    %1777 = vmatprep.subr.mxu0 0.0
    %v1778 = vand.u32 %v1490, 4294901760
    %v1779 = vsub.f32 %v1490, %v1778
    %1780 = vmatpush1.msra.mxu0 %v1779
    %1781 = vmatprep.subr.mxu0 0.0
    %v1782 = vand.u32 %v1491, 4294901760
    %v1783 = vsub.f32 %v1491, %v1782
    %1784 = vmatpush1.msra.mxu0 %v1783
    %1785 = vmatprep.subr.mxu0 0.0
    %v1786 = vand.u32 %v1492, 4294901760
    %v1787 = vsub.f32 %v1492, %v1786
    %1788 = vmatpush1.msra.mxu0 %v1787
    %1789 = vmatprep.subr.mxu0 0.0
    %v1790 = vand.u32 %v1493, 4294901760
    %v1791 = vsub.f32 %v1493, %v1790
    %1792 = vmatpush1.msra.mxu0 %v1791
    %1793 = vmatprep.subr.mxu0 0.0
    %v1794 = vand.u32 %v1494, 4294901760
    %v1795 = vsub.f32 %v1494, %v1794
    %1796 = vmatpush1.msra.mxu0 %v1795
    %1797 = vmatprep.subr.mxu0 0.0
    %v1798 = vand.u32 %v1495, 4294901760
    %v1799 = vsub.f32 %v1495, %v1798
    %1800 = vmatpush1.msra.mxu0 %v1799
    %1801 = vmatprep.subr.mxu0 0.0
    %v1802 = vand.u32 %v1496, 4294901760
    %v1803 = vsub.f32 %v1496, %v1802
    %1804 = vmatpush1.msra.mxu0 %v1803
    %1805 = vmatprep.subr.mxu0 0.0
    %1806 = vmatpush1.msra.mxu0 0.0
    %1807 = vmatprep.subr.mxu0 0.0
    %1808 = vmatpush1.msra.mxu0 0.0
    %1809 = vmatprep.subr.mxu0 0.0
    %1810 = vmatpush1.msra.mxu0 0.0
    %1811 = vmatprep.subr.mxu0 0.0
    %1812 = vmatpush1.msra.mxu0 0.0
    %1813 = vmatprep.subr.mxu0 0.0
    %1814 = vmatpush1.msra.mxu0 0.0
    %1815 = vmatprep.subr.mxu0 0.0
    %1816 = vmatpush1.msra.mxu0 0.0
    %1817 = vmatprep.subr.mxu0 0.0
    %1818 = vmatpush1.msra.mxu0 0.0
    %1819 = vmatprep.subr.mxu0 0.0
    %1820 = vmatpush1.msra.mxu0 0.0
    %1821 = vmatprep.subr.mxu0 0.0
    %1822 = vmatpush1.msra.mxu0 0.0
    %1823 = vmatprep.subr.mxu0 0.0
    %1824 = vmatpush1.msra.mxu0 0.0
    %1825 = vmatprep.subr.mxu0 0.0
    %1826 = vmatpush1.msra.mxu0 0.0
    %1827 = vmatprep.subr.mxu0 0.0
    %1828 = vmatpush1.msra.mxu0 0.0
    %1829 = vmatprep.subr.mxu0 0.0
    %1830 = vmatpush1.msra.mxu0 0.0
    %1831 = vmatprep.subr.mxu0 0.0
    %1832 = vmatpush1.msra.mxu0 0.0
    %1833 = vmatprep.subr.mxu0 0.0
    %1834 = vmatpush1.msra.mxu0 0.0
    %1835 = vmatprep.subr.mxu0 0.0
    %1836 = vmatpush1.msra.mxu0 0.0
    %1837 = vmatprep.mubr.f32.mxu0 0.0
    %v1838 = vand.u32 %v1498, 4294901760
    %v1839 = vsub.f32 %v1498, %v1838
    %1840 = vmatmul.mubr.f32.gmra.mrb[0].mxu0 %v1839
    %v1841 = vpop.f32.mrb[0].mxu0
    %v1842 = vadd.f32 %v1738, %v1841
    %v1843 = vpop.f32.mrb[0].mxu0
    %1844 = vdwg.mxu0
    %1845 = vmatprep.subr.mxu0 0.0
    %v1846 = vand.u32 %v1481, 4294901760
    %1847 = vmatpush1.msra.mxu0 %v1846
    %1848 = vmatprep.subr.mxu0 0.0
    %v1849 = vand.u32 %v1482, 4294901760
    %1850 = vmatpush1.msra.mxu0 %v1849
    %1851 = vmatprep.subr.mxu0 0.0
    %v1852 = vand.u32 %v1483, 4294901760
    %1853 = vmatpush1.msra.mxu0 %v1852
    %1854 = vmatprep.subr.mxu0 0.0
    %v1855 = vand.u32 %v1484, 4294901760
    %1856 = vmatpush1.msra.mxu0 %v1855
    %1857 = vmatprep.subr.mxu0 0.0
    %v1858 = vand.u32 %v1485, 4294901760
    %1859 = vmatpush1.msra.mxu0 %v1858
    %1860 = vmatprep.subr.mxu0 0.0
    %v1861 = vand.u32 %v1486, 4294901760
    %1862 = vmatpush1.msra.mxu0 %v1861
    %1863 = vmatprep.subr.mxu0 0.0
    %v1864 = vand.u32 %v1487, 4294901760
    %1865 = vmatpush1.msra.mxu0 %v1864
    %1866 = vmatprep.subr.mxu0 0.0
    %v1867 = vand.u32 %v1488, 4294901760
    %1868 = vmatpush1.msra.mxu0 %v1867
    %1869 = vmatprep.subr.mxu0 0.0
    %v1870 = vand.u32 %v1489, 4294901760
    %1871 = vmatpush1.msra.mxu0 %v1870
    %1872 = vmatprep.subr.mxu0 0.0
    %v1873 = vand.u32 %v1490, 4294901760
    %1874 = vmatpush1.msra.mxu0 %v1873
    %1875 = vmatprep.subr.mxu0 0.0
    %v1876 = vand.u32 %v1491, 4294901760
    %1877 = vmatpush1.msra.mxu0 %v1876
    %1878 = vmatprep.subr.mxu0 0.0
    %v1879 = vand.u32 %v1492, 4294901760
    %1880 = vmatpush1.msra.mxu0 %v1879
    %1881 = vmatprep.subr.mxu0 0.0
    %v1882 = vand.u32 %v1493, 4294901760
    %1883 = vmatpush1.msra.mxu0 %v1882
    %1884 = vmatprep.subr.mxu0 0.0
    %v1885 = vand.u32 %v1494, 4294901760
    %1886 = vmatpush1.msra.mxu0 %v1885
    %1887 = vmatprep.subr.mxu0 0.0
    %v1888 = vand.u32 %v1495, 4294901760
    %1889 = vmatpush1.msra.mxu0 %v1888
    %1890 = vmatprep.subr.mxu0 0.0
    %v1891 = vand.u32 %v1496, 4294901760
    %1892 = vmatpush1.msra.mxu0 %v1891
    %1893 = vmatprep.subr.mxu0 0.0
    %1894 = vmatpush1.msra.mxu0 0.0
    %1895 = vmatprep.subr.mxu0 0.0
    %1896 = vmatpush1.msra.mxu0 0.0
    %1897 = vmatprep.subr.mxu0 0.0
    %1898 = vmatpush1.msra.mxu0 0.0
    %1899 = vmatprep.subr.mxu0 0.0
    %1900 = vmatpush1.msra.mxu0 0.0
    %1901 = vmatprep.subr.mxu0 0.0
    %1902 = vmatpush1.msra.mxu0 0.0
    %1903 = vmatprep.subr.mxu0 0.0
    %1904 = vmatpush1.msra.mxu0 0.0
    %1905 = vmatprep.subr.mxu0 0.0
    %1906 = vmatpush1.msra.mxu0 0.0
    %1907 = vmatprep.subr.mxu0 0.0
    %1908 = vmatpush1.msra.mxu0 0.0
    %1909 = vmatprep.subr.mxu0 0.0
    %1910 = vmatpush1.msra.mxu0 0.0
    %1911 = vmatprep.subr.mxu0 0.0
    %1912 = vmatpush1.msra.mxu0 0.0
    %1913 = vmatprep.subr.mxu0 0.0
    %1914 = vmatpush1.msra.mxu0 0.0
    %1915 = vmatprep.subr.mxu0 0.0
    %1916 = vmatpush1.msra.mxu0 0.0
    %1917 = vmatprep.subr.mxu0 0.0
    %1918 = vmatpush1.msra.mxu0 0.0
    %1919 = vmatprep.subr.mxu0 0.0
    %1920 = vmatpush1.msra.mxu0 0.0
    %1921 = vmatprep.subr.mxu0 0.0
    %1922 = vmatpush1.msra.mxu0 0.0
    %1923 = vmatprep.subr.mxu0 0.0
    %1924 = vmatpush1.msra.mxu0 0.0
    %1925 = vmatprep.mubr.f32.mxu0 0.0
    %v1926 = vand.u32 %v1498, 4294901760
    %v1927 = vsub.f32 %v1498, %v1926
    %v1928 = vand.u32 %v1927, 4294901760
    %1929 = vmatmul.mubr.f32.gmra.mrb[0].mxu0 %v1928
    %v1930 = vpop.f32.mrb[0].mxu0
    %v1931 = vadd.f32 %v1842, %v1930
    %v1932 = vpop.f32.mrb[0].mxu0
    %1933 = vdwg.mxu0
    %1934 = vmatprep.subr.mxu0 0.0
    %v1935 = vand.u32 %v1481, 4294901760
    %v1936 = vsub.f32 %v1481, %v1935
    %v1937 = vand.u32 %v1936, 4294901760
    %1938 = vmatpush1.msra.mxu0 %v1937
    %1939 = vmatprep.subr.mxu0 0.0
    %v1940 = vand.u32 %v1482, 4294901760
    %v1941 = vsub.f32 %v1482, %v1940
    %v1942 = vand.u32 %v1941, 4294901760
    %1943 = vmatpush1.msra.mxu0 %v1942
    %1944 = vmatprep.subr.mxu0 0.0
    %v1945 = vand.u32 %v1483, 4294901760
    %v1946 = vsub.f32 %v1483, %v1945
    %v1947 = vand.u32 %v1946, 4294901760
    %1948 = vmatpush1.msra.mxu0 %v1947
    %1949 = vmatprep.subr.mxu0 0.0
    %v1950 = vand.u32 %v1484, 4294901760
    %v1951 = vsub.f32 %v1484, %v1950
    %v1952 = vand.u32 %v1951, 4294901760
    %1953 = vmatpush1.msra.mxu0 %v1952
    %1954 = vmatprep.subr.mxu0 0.0
    %v1955 = vand.u32 %v1485, 4294901760
    %v1956 = vsub.f32 %v1485, %v1955
    %v1957 = vand.u32 %v1956, 4294901760
    %1958 = vmatpush1.msra.mxu0 %v1957
    %1959 = vmatprep.subr.mxu0 0.0
    %v1960 = vand.u32 %v1486, 4294901760
    %v1961 = vsub.f32 %v1486, %v1960
    %v1962 = vand.u32 %v1961, 4294901760
    %1963 = vmatpush1.msra.mxu0 %v1962
    %1964 = vmatprep.subr.mxu0 0.0
    %v1965 = vand.u32 %v1487, 4294901760
    %v1966 = vsub.f32 %v1487, %v1965
    %v1967 = vand.u32 %v1966, 4294901760
    %1968 = vmatpush1.msra.mxu0 %v1967
    %1969 = vmatprep.subr.mxu0 0.0
    %v1970 = vand.u32 %v1488, 4294901760
    %v1971 = vsub.f32 %v1488, %v1970
    %v1972 = vand.u32 %v1971, 4294901760
    %1973 = vmatpush1.msra.mxu0 %v1972
    %1974 = vmatprep.subr.mxu0 0.0
    %v1975 = vand.u32 %v1489, 4294901760
    %v1976 = vsub.f32 %v1489, %v1975
    %v1977 = vand.u32 %v1976, 4294901760
    %1978 = vmatpush1.msra.mxu0 %v1977
    %1979 = vmatprep.subr.mxu0 0.0
    %v1980 = vand.u32 %v1490, 4294901760
    %v1981 = vsub.f32 %v1490, %v1980
    %v1982 = vand.u32 %v1981, 4294901760
    %1983 = vmatpush1.msra.mxu0 %v1982
    %1984 = vmatprep.subr.mxu0 0.0
    %v1985 = vand.u32 %v1491, 4294901760
    %v1986 = vsub.f32 %v1491, %v1985
    %v1987 = vand.u32 %v1986, 4294901760
    %1988 = vmatpush1.msra.mxu0 %v1987
    %1989 = vmatprep.subr.mxu0 0.0
    %v1990 = vand.u32 %v1492, 4294901760
    %v1991 = vsub.f32 %v1492, %v1990
    %v1992 = vand.u32 %v1991, 4294901760
    %1993 = vmatpush1.msra.mxu0 %v1992
    %1994 = vmatprep.subr.mxu0 0.0
    %v1995 = vand.u32 %v1493, 4294901760
    %v1996 = vsub.f32 %v1493, %v1995
    %v1997 = vand.u32 %v1996, 4294901760
    %1998 = vmatpush1.msra.mxu0 %v1997
    %1999 = vmatprep.subr.mxu0 0.0
    %v2000 = vand.u32 %v1494, 4294901760
    %v2001 = vsub.f32 %v1494, %v2000
    %v2002 = vand.u32 %v2001, 4294901760
    %2003 = vmatpush1.msra.mxu0 %v2002
    %2004 = vmatprep.subr.mxu0 0.0
    %v2005 = vand.u32 %v1495, 4294901760
    %v2006 = vsub.f32 %v1495, %v2005
    %v2007 = vand.u32 %v2006, 4294901760
    %2008 = vmatpush1.msra.mxu0 %v2007
    %2009 = vmatprep.subr.mxu0 0.0
    %v2010 = vand.u32 %v1496, 4294901760
    %v2011 = vsub.f32 %v1496, %v2010
    %v2012 = vand.u32 %v2011, 4294901760
    %2013 = vmatpush1.msra.mxu0 %v2012
    %2014 = vmatprep.subr.mxu0 0.0
    %2015 = vmatpush1.msra.mxu0 0.0
    %2016 = vmatprep.subr.mxu0 0.0
    %2017 = vmatpush1.msra.mxu0 0.0
    %2018 = vmatprep.subr.mxu0 0.0
    %2019 = vmatpush1.msra.mxu0 0.0
    %2020 = vmatprep.subr.mxu0 0.0
    %2021 = vmatpush1.msra.mxu0 0.0
    %2022 = vmatprep.subr.mxu0 0.0
    %2023 = vmatpush1.msra.mxu0 0.0
    %2024 = vmatprep.subr.mxu0 0.0
    %2025 = vmatpush1.msra.mxu0 0.0
    %2026 = vmatprep.subr.mxu0 0.0
    %2027 = vmatpush1.msra.mxu0 0.0
    %2028 = vmatprep.subr.mxu0 0.0
    %2029 = vmatpush1.msra.mxu0 0.0
    %2030 = vmatprep.subr.mxu0 0.0
    %2031 = vmatpush1.msra.mxu0 0.0
    %2032 = vmatprep.subr.mxu0 0.0
    %2033 = vmatpush1.msra.mxu0 0.0
    %2034 = vmatprep.subr.mxu0 0.0
    %2035 = vmatpush1.msra.mxu0 0.0
    %2036 = vmatprep.subr.mxu0 0.0
    %2037 = vmatpush1.msra.mxu0 0.0
    %2038 = vmatprep.subr.mxu0 0.0
    %2039 = vmatpush1.msra.mxu0 0.0
    %2040 = vmatprep.subr.mxu0 0.0
    %2041 = vmatpush1.msra.mxu0 0.0
    %2042 = vmatprep.subr.mxu0 0.0
    %2043 = vmatpush1.msra.mxu0 0.0
    %2044 = vmatprep.subr.mxu0 0.0
    %2045 = vmatpush1.msra.mxu0 0.0
    %2046 = vmatprep.mubr.f32.mxu0 0.0
    %v2047 = vand.u32 %v1498, 4294901760
    %2048 = vmatmul.mubr.f32.gmra.mrb[0].mxu0 %v2047
    %v2049 = vpop.f32.mrb[0].mxu0
    %v2050 = vadd.f32 %v1931, %v2049
    %v2051 = vpop.f32.mrb[0].mxu0
    %2052 = vdwg.mxu0
    %2053 = vmatprep.subr.mxu0 0.0
    %v2054 = vand.u32 %v1481, 4294901760
    %2055 = vmatpush1.msra.mxu0 %v2054
    %2056 = vmatprep.subr.mxu0 0.0
    %v2057 = vand.u32 %v1482, 4294901760
    %2058 = vmatpush1.msra.mxu0 %v2057
    %2059 = vmatprep.subr.mxu0 0.0
    %v2060 = vand.u32 %v1483, 4294901760
    %2061 = vmatpush1.msra.mxu0 %v2060
    %2062 = vmatprep.subr.mxu0 0.0
    %v2063 = vand.u32 %v1484, 4294901760
    %2064 = vmatpush1.msra.mxu0 %v2063
    %2065 = vmatprep.subr.mxu0 0.0
    %v2066 = vand.u32 %v1485, 4294901760
    %2067 = vmatpush1.msra.mxu0 %v2066
    %2068 = vmatprep.subr.mxu0 0.0
    %v2069 = vand.u32 %v1486, 4294901760
    %2070 = vmatpush1.msra.mxu0 %v2069
    %2071 = vmatprep.subr.mxu0 0.0
    %v2072 = vand.u32 %v1487, 4294901760
    %2073 = vmatpush1.msra.mxu0 %v2072
    %2074 = vmatprep.subr.mxu0 0.0
    %v2075 = vand.u32 %v1488, 4294901760
    %2076 = vmatpush1.msra.mxu0 %v2075
    %2077 = vmatprep.subr.mxu0 0.0
    %v2078 = vand.u32 %v1489, 4294901760
    %2079 = vmatpush1.msra.mxu0 %v2078
    %2080 = vmatprep.subr.mxu0 0.0
    %v2081 = vand.u32 %v1490, 4294901760
    %2082 = vmatpush1.msra.mxu0 %v2081
    %2083 = vmatprep.subr.mxu0 0.0
    %v2084 = vand.u32 %v1491, 4294901760
    %2085 = vmatpush1.msra.mxu0 %v2084
    %2086 = vmatprep.subr.mxu0 0.0
    %v2087 = vand.u32 %v1492, 4294901760
    %2088 = vmatpush1.msra.mxu0 %v2087
    %2089 = vmatprep.subr.mxu0 0.0
    %v2090 = vand.u32 %v1493, 4294901760
    %2091 = vmatpush1.msra.mxu0 %v2090
    %2092 = vmatprep.subr.mxu0 0.0
    %v2093 = vand.u32 %v1494, 4294901760
    %2094 = vmatpush1.msra.mxu0 %v2093
    %2095 = vmatprep.subr.mxu0 0.0
    %v2096 = vand.u32 %v1495, 4294901760
    %2097 = vmatpush1.msra.mxu0 %v2096
    %2098 = vmatprep.subr.mxu0 0.0
    %v2099 = vand.u32 %v1496, 4294901760
    %2100 = vmatpush1.msra.mxu0 %v2099
    %2101 = vmatprep.subr.mxu0 0.0
    %2102 = vmatpush1.msra.mxu0 0.0
    %2103 = vmatprep.subr.mxu0 0.0
    %2104 = vmatpush1.msra.mxu0 0.0
    %2105 = vmatprep.subr.mxu0 0.0
    %2106 = vmatpush1.msra.mxu0 0.0
    %2107 = vmatprep.subr.mxu0 0.0
    %2108 = vmatpush1.msra.mxu0 0.0
    %2109 = vmatprep.subr.mxu0 0.0
    %2110 = vmatpush1.msra.mxu0 0.0
    %2111 = vmatprep.subr.mxu0 0.0
    %2112 = vmatpush1.msra.mxu0 0.0
    %2113 = vmatprep.subr.mxu0 0.0
    %2114 = vmatpush1.msra.mxu0 0.0
    %2115 = vmatprep.subr.mxu0 0.0
    %2116 = vmatpush1.msra.mxu0 0.0
    %2117 = vmatprep.subr.mxu0 0.0
    %2118 = vmatpush1.msra.mxu0 0.0
    %2119 = vmatprep.subr.mxu0 0.0
    %2120 = vmatpush1.msra.mxu0 0.0
    %2121 = vmatprep.subr.mxu0 0.0
    %2122 = vmatpush1.msra.mxu0 0.0
    %2123 = vmatprep.subr.mxu0 0.0
    %2124 = vmatpush1.msra.mxu0 0.0
    %2125 = vmatprep.subr.mxu0 0.0
    %2126 = vmatpush1.msra.mxu0 0.0
    %2127 = vmatprep.subr.mxu0 0.0
    %2128 = vmatpush1.msra.mxu0 0.0
    %2129 = vmatprep.subr.mxu0 0.0
    %2130 = vmatpush1.msra.mxu0 0.0
    %2131 = vmatprep.subr.mxu0 0.0
    %2132 = vmatpush1.msra.mxu0 0.0
    %2133 = vmatprep.mubr.f32.mxu0 0.0
    %v2134 = vand.u32 %v1498, 4294901760
    %2135 = vmatmul.mubr.f32.gmra.mrb[0].mxu0 %v2134
    %v2136 = vpop.f32.mrb[0].mxu0
    %v2137 = vadd.f32 %v2050, %v2136
    %v2138 = vpop.f32.mrb[0].mxu0
    %2139 = vdwg.mxu0
    %v2140 = vadd.f32 %v1443, %v2137
    %v2141 = vld [vmem:[%s0 + $0x3] sm:$0x1]
    %v2142 = vlaneseq
    %v2143 = vshrl.u32 %v2142, 7
    %v2144 = vsub.s32 0, %v2143
    %v2145 = vrot.slane %v2141, %v2144
    %vm2146 = vcmp.eq.s32.totalorder %v36, %v2145
    %vm2147 = vcmp.eq.s32.totalorder %v37, %v2145
    %vm2148 = vcmp.eq.s32.totalorder %v38, %v2145
    %vm2149 = vcmp.eq.s32.totalorder %v39, %v2145
    %vm2150 = vcmp.eq.s32.totalorder %v40, %v2145
    %vm2151 = vcmp.eq.s32.totalorder %v41, %v2145
    %vm2152 = vcmp.eq.s32.totalorder %v42, %v2145
    %vm2153 = vcmp.eq.s32.totalorder %v43, %v2145
    %vm2154 = vcmp.eq.s32.totalorder %v44, %v2145
    %vm2155 = vcmp.eq.s32.totalorder %v45, %v2145
    %vm2156 = vcmp.eq.s32.totalorder %v46, %v2145
    %vm2157 = vcmp.eq.s32.totalorder %v47, %v2145
    %vm2158 = vcmp.eq.s32.totalorder %v48, %v2145
    %vm2159 = vcmp.eq.s32.totalorder %v49, %v2145
    %vm2160 = vcmp.eq.s32.totalorder %v50, %v2145
    %vm2161 = vcmp.eq.s32.totalorder %v51, %v2145
    %v2162 = vsel %vm2146, 1, 0
    %v2163 = vsel %vm2147, 1, 0
    %v2164 = vsel %vm2148, 1, 0
    %v2165 = vsel %vm2149, 1, 0
    %v2166 = vsel %vm2150, 1, 0
    %v2167 = vsel %vm2151, 1, 0
    %v2168 = vsel %vm2152, 1, 0
    %v2169 = vsel %vm2153, 1, 0
    %v2170 = vsel %vm2154, 1, 0
    %v2171 = vsel %vm2155, 1, 0
    %v2172 = vsel %vm2156, 1, 0
    %v2173 = vsel %vm2157, 1, 0
    %v2174 = vsel %vm2158, 1, 0
    %v2175 = vsel %vm2159, 1, 0
    %v2176 = vsel %vm2160, 1, 0
    %v2177 = vsel %vm2161, 1, 0
    %v2178 = vcvt.s32.f32 %v2162
    %v2179 = vcvt.s32.f32 %v2163
    %v2180 = vcvt.s32.f32 %v2164
    %v2181 = vcvt.s32.f32 %v2165
    %v2182 = vcvt.s32.f32 %v2166
    %v2183 = vcvt.s32.f32 %v2167
    %v2184 = vcvt.s32.f32 %v2168
    %v2185 = vcvt.s32.f32 %v2169
    %v2186 = vcvt.s32.f32 %v2170
    %v2187 = vcvt.s32.f32 %v2171
    %v2188 = vcvt.s32.f32 %v2172
    %v2189 = vcvt.s32.f32 %v2173
    %v2190 = vcvt.s32.f32 %v2174
    %v2191 = vcvt.s32.f32 %v2175
    %v2192 = vcvt.s32.f32 %v2176
    %v2193 = vcvt.s32.f32 %v2177
    %s2194 = scalar_lea.vmem [#allocation2], 24
    %v2195 = vld [vmem:[%s2194] sm:$0xff]
    %2196 = vmatprep.subr.mxu0 0.0
    %v2197 = vand.u32 %v2178, 4294901760
    %2198 = vmatpush1.msra.mxu0 %v2197
    %2199 = vmatprep.subr.mxu0 0.0
    %v2200 = vand.u32 %v2179, 4294901760
    %2201 = vmatpush1.msra.mxu0 %v2200
    %2202 = vmatprep.subr.mxu0 0.0
    %v2203 = vand.u32 %v2180, 4294901760
    %2204 = vmatpush1.msra.mxu0 %v2203
    %2205 = vmatprep.subr.mxu0 0.0
    %v2206 = vand.u32 %v2181, 4294901760
    %2207 = vmatpush1.msra.mxu0 %v2206
    %2208 = vmatprep.subr.mxu0 0.0
    %v2209 = vand.u32 %v2182, 4294901760
    %2210 = vmatpush1.msra.mxu0 %v2209
    %2211 = vmatprep.subr.mxu0 0.0
    %v2212 = vand.u32 %v2183, 4294901760
    %2213 = vmatpush1.msra.mxu0 %v2212
    %2214 = vmatprep.subr.mxu0 0.0
    %v2215 = vand.u32 %v2184, 4294901760
    %2216 = vmatpush1.msra.mxu0 %v2215
    %2217 = vmatprep.subr.mxu0 0.0
    %v2218 = vand.u32 %v2185, 4294901760
    %2219 = vmatpush1.msra.mxu0 %v2218
    %2220 = vmatprep.subr.mxu0 0.0
    %v2221 = vand.u32 %v2186, 4294901760
    %2222 = vmatpush1.msra.mxu0 %v2221
    %2223 = vmatprep.subr.mxu0 0.0
    %v2224 = vand.u32 %v2187, 4294901760
    %2225 = vmatpush1.msra.mxu0 %v2224
    %2226 = vmatprep.subr.mxu0 0.0
    %v2227 = vand.u32 %v2188, 4294901760
    %2228 = vmatpush1.msra.mxu0 %v2227
    %2229 = vmatprep.subr.mxu0 0.0
    %v2230 = vand.u32 %v2189, 4294901760
    %2231 = vmatpush1.msra.mxu0 %v2230
    %2232 = vmatprep.subr.mxu0 0.0
    %v2233 = vand.u32 %v2190, 4294901760
    %2234 = vmatpush1.msra.mxu0 %v2233
    %2235 = vmatprep.subr.mxu0 0.0
    %v2236 = vand.u32 %v2191, 4294901760
    %2237 = vmatpush1.msra.mxu0 %v2236
    %2238 = vmatprep.subr.mxu0 0.0
    %v2239 = vand.u32 %v2192, 4294901760
    %2240 = vmatpush1.msra.mxu0 %v2239
    %2241 = vmatprep.subr.mxu0 0.0
    %v2242 = vand.u32 %v2193, 4294901760
    %2243 = vmatpush1.msra.mxu0 %v2242
    %2244 = vmatprep.subr.mxu0 0.0
    %2245 = vmatpush1.msra.mxu0 0.0
    %2246 = vmatprep.subr.mxu0 0.0
    %2247 = vmatpush1.msra.mxu0 0.0
    %2248 = vmatprep.subr.mxu0 0.0
    %2249 = vmatpush1.msra.mxu0 0.0
    %2250 = vmatprep.subr.mxu0 0.0
    %2251 = vmatpush1.msra.mxu0 0.0
    %2252 = vmatprep.subr.mxu0 0.0
    %2253 = vmatpush1.msra.mxu0 0.0
    %2254 = vmatprep.subr.mxu0 0.0
    %2255 = vmatpush1.msra.mxu0 0.0
    %2256 = vmatprep.subr.mxu0 0.0
    %2257 = vmatpush1.msra.mxu0 0.0
    %2258 = vmatprep.subr.mxu0 0.0
    %2259 = vmatpush1.msra.mxu0 0.0
    %2260 = vmatprep.subr.mxu0 0.0
    %2261 = vmatpush1.msra.mxu0 0.0
    %2262 = vmatprep.subr.mxu0 0.0
    %2263 = vmatpush1.msra.mxu0 0.0
    %2264 = vmatprep.subr.mxu0 0.0
    %2265 = vmatpush1.msra.mxu0 0.0
    %2266 = vmatprep.subr.mxu0 0.0
    %2267 = vmatpush1.msra.mxu0 0.0
    %2268 = vmatprep.subr.mxu0 0.0
    %2269 = vmatpush1.msra.mxu0 0.0
    %2270 = vmatprep.subr.mxu0 0.0
    %2271 = vmatpush1.msra.mxu0 0.0
    %2272 = vmatprep.subr.mxu0 0.0
    %2273 = vmatpush1.msra.mxu0 0.0
    %2274 = vmatprep.subr.mxu0 0.0
    %2275 = vmatpush1.msra.mxu0 0.0
    %2276 = vmatprep.mubr.f32.mxu0 0.0
    %v2277 = vand.u32 %v2195, 4294901760
    %v2278 = vsub.f32 %v2195, %v2277
    %v2279 = vand.u32 %v2278, 4294901760
    %v2280 = vsub.f32 %v2278, %v2279
    %v2281 = vand.u32 %v2280, 4294901760
    %2282 = vmatmul.mubr.f32.gmra.mrb[0].mxu0 %v2281
    %v2283 = vpop.f32.mrb[0].mxu0
    %v2284 = vadd.f32 0.0, %v2283
    %v2285 = vpop.f32.mrb[0].mxu0
    %2286 = vdwg.mxu0
    %2287 = vmatprep.subr.mxu0 0.0
    %v2288 = vand.u32 %v2178, 4294901760
    %v2289 = vsub.f32 %v2178, %v2288
    %v2290 = vand.u32 %v2289, 4294901760
    %v2291 = vsub.f32 %v2289, %v2290
    %v2292 = vand.u32 %v2291, 4294901760
    %2293 = vmatpush1.msra.mxu0 %v2292
    %2294 = vmatprep.subr.mxu0 0.0
    %v2295 = vand.u32 %v2179, 4294901760
    %v2296 = vsub.f32 %v2179, %v2295
    %v2297 = vand.u32 %v2296, 4294901760
    %v2298 = vsub.f32 %v2296, %v2297
    %v2299 = vand.u32 %v2298, 4294901760
    %2300 = vmatpush1.msra.mxu0 %v2299
    %2301 = vmatprep.subr.mxu0 0.0
    %v2302 = vand.u32 %v2180, 4294901760
    %v2303 = vsub.f32 %v2180, %v2302
    %v2304 = vand.u32 %v2303, 4294901760
    %v2305 = vsub.f32 %v2303, %v2304
    %v2306 = vand.u32 %v2305, 4294901760
    %2307 = vmatpush1.msra.mxu0 %v2306
    %2308 = vmatprep.subr.mxu0 0.0
    %v2309 = vand.u32 %v2181, 4294901760
    %v2310 = vsub.f32 %v2181, %v2309
    %v2311 = vand.u32 %v2310, 4294901760
    %v2312 = vsub.f32 %v2310, %v2311
    %v2313 = vand.u32 %v2312, 4294901760
    %2314 = vmatpush1.msra.mxu0 %v2313
    %2315 = vmatprep.subr.mxu0 0.0
    %v2316 = vand.u32 %v2182, 4294901760
    %v2317 = vsub.f32 %v2182, %v2316
    %v2318 = vand.u32 %v2317, 4294901760
    %v2319 = vsub.f32 %v2317, %v2318
    %v2320 = vand.u32 %v2319, 4294901760
    %2321 = vmatpush1.msra.mxu0 %v2320
    %2322 = vmatprep.subr.mxu0 0.0
    %v2323 = vand.u32 %v2183, 4294901760
    %v2324 = vsub.f32 %v2183, %v2323
    %v2325 = vand.u32 %v2324, 4294901760
    %v2326 = vsub.f32 %v2324, %v2325
    %v2327 = vand.u32 %v2326, 4294901760
    %2328 = vmatpush1.msra.mxu0 %v2327
    %2329 = vmatprep.subr.mxu0 0.0
    %v2330 = vand.u32 %v2184, 4294901760
    %v2331 = vsub.f32 %v2184, %v2330
    %v2332 = vand.u32 %v2331, 4294901760
    %v2333 = vsub.f32 %v2331, %v2332
    %v2334 = vand.u32 %v2333, 4294901760
    %2335 = vmatpush1.msra.mxu0 %v2334
    %2336 = vmatprep.subr.mxu0 0.0
    %v2337 = vand.u32 %v2185, 4294901760
    %v2338 = vsub.f32 %v2185, %v2337
    %v2339 = vand.u32 %v2338, 4294901760
    %v2340 = vsub.f32 %v2338, %v2339
    %v2341 = vand.u32 %v2340, 4294901760
    %2342 = vmatpush1.msra.mxu0 %v2341
    %2343 = vmatprep.subr.mxu0 0.0
    %v2344 = vand.u32 %v2186, 4294901760
    %v2345 = vsub.f32 %v2186, %v2344
    %v2346 = vand.u32 %v2345, 4294901760
    %v2347 = vsub.f32 %v2345, %v2346
    %v2348 = vand.u32 %v2347, 4294901760
    %2349 = vmatpush1.msra.mxu0 %v2348
    %2350 = vmatprep.subr.mxu0 0.0
    %v2351 = vand.u32 %v2187, 4294901760
    %v2352 = vsub.f32 %v2187, %v2351
    %v2353 = vand.u32 %v2352, 4294901760
    %v2354 = vsub.f32 %v2352, %v2353
    %v2355 = vand.u32 %v2354, 4294901760
    %2356 = vmatpush1.msra.mxu0 %v2355
    %2357 = vmatprep.subr.mxu0 0.0
    %v2358 = vand.u32 %v2188, 4294901760
    %v2359 = vsub.f32 %v2188, %v2358
    %v2360 = vand.u32 %v2359, 4294901760
    %v2361 = vsub.f32 %v2359, %v2360
    %v2362 = vand.u32 %v2361, 4294901760
    %2363 = vmatpush1.msra.mxu0 %v2362
    %2364 = vmatprep.subr.mxu0 0.0
    %v2365 = vand.u32 %v2189, 4294901760
    %v2366 = vsub.f32 %v2189, %v2365
    %v2367 = vand.u32 %v2366, 4294901760
    %v2368 = vsub.f32 %v2366, %v2367
    %v2369 = vand.u32 %v2368, 4294901760
    %2370 = vmatpush1.msra.mxu0 %v2369
    %2371 = vmatprep.subr.mxu0 0.0
    %v2372 = vand.u32 %v2190, 4294901760
    %v2373 = vsub.f32 %v2190, %v2372
    %v2374 = vand.u32 %v2373, 4294901760
    %v2375 = vsub.f32 %v2373, %v2374
    %v2376 = vand.u32 %v2375, 4294901760
    %2377 = vmatpush1.msra.mxu0 %v2376
    %2378 = vmatprep.subr.mxu0 0.0
    %v2379 = vand.u32 %v2191, 4294901760
    %v2380 = vsub.f32 %v2191, %v2379
    %v2381 = vand.u32 %v2380, 4294901760
    %v2382 = vsub.f32 %v2380, %v2381
    %v2383 = vand.u32 %v2382, 4294901760
    %2384 = vmatpush1.msra.mxu0 %v2383
    %2385 = vmatprep.subr.mxu0 0.0
    %v2386 = vand.u32 %v2192, 4294901760
    %v2387 = vsub.f32 %v2192, %v2386
    %v2388 = vand.u32 %v2387, 4294901760
    %v2389 = vsub.f32 %v2387, %v2388
    %v2390 = vand.u32 %v2389, 4294901760
    %2391 = vmatpush1.msra.mxu0 %v2390
    %2392 = vmatprep.subr.mxu0 0.0
    %v2393 = vand.u32 %v2193, 4294901760
    %v2394 = vsub.f32 %v2193, %v2393
    %v2395 = vand.u32 %v2394, 4294901760
    %v2396 = vsub.f32 %v2394, %v2395
    %v2397 = vand.u32 %v2396, 4294901760
    %2398 = vmatpush1.msra.mxu0 %v2397
    %2399 = vmatprep.subr.mxu0 0.0
    %2400 = vmatpush1.msra.mxu0 0.0
    %2401 = vmatprep.subr.mxu0 0.0
    %2402 = vmatpush1.msra.mxu0 0.0
    %2403 = vmatprep.subr.mxu0 0.0
    %2404 = vmatpush1.msra.mxu0 0.0
    %2405 = vmatprep.subr.mxu0 0.0
    %2406 = vmatpush1.msra.mxu0 0.0
    %2407 = vmatprep.subr.mxu0 0.0
    %2408 = vmatpush1.msra.mxu0 0.0
    %2409 = vmatprep.subr.mxu0 0.0
    %2410 = vmatpush1.msra.mxu0 0.0
    %2411 = vmatprep.subr.mxu0 0.0
    %2412 = vmatpush1.msra.mxu0 0.0
    %2413 = vmatprep.subr.mxu0 0.0
    %2414 = vmatpush1.msra.mxu0 0.0
    %2415 = vmatprep.subr.mxu0 0.0
    %2416 = vmatpush1.msra.mxu0 0.0
    %2417 = vmatprep.subr.mxu0 0.0
    %2418 = vmatpush1.msra.mxu0 0.0
    %2419 = vmatprep.subr.mxu0 0.0
    %2420 = vmatpush1.msra.mxu0 0.0
    %2421 = vmatprep.subr.mxu0 0.0
    %2422 = vmatpush1.msra.mxu0 0.0
    %2423 = vmatprep.subr.mxu0 0.0
    %2424 = vmatpush1.msra.mxu0 0.0
    %2425 = vmatprep.subr.mxu0 0.0
    %2426 = vmatpush1.msra.mxu0 0.0
    %2427 = vmatprep.subr.mxu0 0.0
    %2428 = vmatpush1.msra.mxu0 0.0
    %2429 = vmatprep.subr.mxu0 0.0
    %2430 = vmatpush1.msra.mxu0 0.0
    %2431 = vmatprep.mubr.f32.mxu0 0.0
    %v2432 = vand.u32 %v2195, 4294901760
    %2433 = vmatmul.mubr.f32.gmra.mrb[0].mxu0 %v2432
    %v2434 = vpop.f32.mrb[0].mxu0
    %v2435 = vadd.f32 %v2284, %v2434
    %v2436 = vpop.f32.mrb[0].mxu0
    %2437 = vdwg.mxu0
    %2438 = vmatprep.subr.mxu0 0.0
    %v2439 = vand.u32 %v2178, 4294901760
    %v2440 = vsub.f32 %v2178, %v2439
    %2441 = vmatpush1.msra.mxu0 %v2440
    %2442 = vmatprep.subr.mxu0 0.0
    %v2443 = vand.u32 %v2179, 4294901760
    %v2444 = vsub.f32 %v2179, %v2443
    %2445 = vmatpush1.msra.mxu0 %v2444
    %2446 = vmatprep.subr.mxu0 0.0
    %v2447 = vand.u32 %v2180, 4294901760
    %v2448 = vsub.f32 %v2180, %v2447
    %2449 = vmatpush1.msra.mxu0 %v2448
    %2450 = vmatprep.subr.mxu0 0.0
    %v2451 = vand.u32 %v2181, 4294901760
    %v2452 = vsub.f32 %v2181, %v2451
    %2453 = vmatpush1.msra.mxu0 %v2452
    %2454 = vmatprep.subr.mxu0 0.0
    %v2455 = vand.u32 %v2182, 4294901760
    %v2456 = vsub.f32 %v2182, %v2455
    %2457 = vmatpush1.msra.mxu0 %v2456
    %2458 = vmatprep.subr.mxu0 0.0
    %v2459 = vand.u32 %v2183, 4294901760
    %v2460 = vsub.f32 %v2183, %v2459
    %2461 = vmatpush1.msra.mxu0 %v2460
    %2462 = vmatprep.subr.mxu0 0.0
    %v2463 = vand.u32 %v2184, 4294901760
    %v2464 = vsub.f32 %v2184, %v2463
    %2465 = vmatpush1.msra.mxu0 %v2464
    %2466 = vmatprep.subr.mxu0 0.0
    %v2467 = vand.u32 %v2185, 4294901760
    %v2468 = vsub.f32 %v2185, %v2467
    %2469 = vmatpush1.msra.mxu0 %v2468
    %2470 = vmatprep.subr.mxu0 0.0
    %v2471 = vand.u32 %v2186, 4294901760
    %v2472 = vsub.f32 %v2186, %v2471
    %2473 = vmatpush1.msra.mxu0 %v2472
    %2474 = vmatprep.subr.mxu0 0.0
    %v2475 = vand.u32 %v2187, 4294901760
    %v2476 = vsub.f32 %v2187, %v2475
    %2477 = vmatpush1.msra.mxu0 %v2476
    %2478 = vmatprep.subr.mxu0 0.0
    %v2479 = vand.u32 %v2188, 4294901760
    %v2480 = vsub.f32 %v2188, %v2479
    %2481 = vmatpush1.msra.mxu0 %v2480
    %2482 = vmatprep.subr.mxu0 0.0
    %v2483 = vand.u32 %v2189, 4294901760
    %v2484 = vsub.f32 %v2189, %v2483
    %2485 = vmatpush1.msra.mxu0 %v2484
    %2486 = vmatprep.subr.mxu0 0.0
    %v2487 = vand.u32 %v2190, 4294901760
    %v2488 = vsub.f32 %v2190, %v2487
    %2489 = vmatpush1.msra.mxu0 %v2488
    %2490 = vmatprep.subr.mxu0 0.0
    %v2491 = vand.u32 %v2191, 4294901760
    %v2492 = vsub.f32 %v2191, %v2491
    %2493 = vmatpush1.msra.mxu0 %v2492
    %2494 = vmatprep.subr.mxu0 0.0
    %v2495 = vand.u32 %v2192, 4294901760
    %v2496 = vsub.f32 %v2192, %v2495
    %2497 = vmatpush1.msra.mxu0 %v2496
    %2498 = vmatprep.subr.mxu0 0.0
    %v2499 = vand.u32 %v2193, 4294901760
    %v2500 = vsub.f32 %v2193, %v2499
    %2501 = vmatpush1.msra.mxu0 %v2500
    %2502 = vmatprep.subr.mxu0 0.0
    %2503 = vmatpush1.msra.mxu0 0.0
    %2504 = vmatprep.subr.mxu0 0.0
    %2505 = vmatpush1.msra.mxu0 0.0
    %2506 = vmatprep.subr.mxu0 0.0
    %2507 = vmatpush1.msra.mxu0 0.0
    %2508 = vmatprep.subr.mxu0 0.0
    %2509 = vmatpush1.msra.mxu0 0.0
    %2510 = vmatprep.subr.mxu0 0.0
    %2511 = vmatpush1.msra.mxu0 0.0
    %2512 = vmatprep.subr.mxu0 0.0
    %2513 = vmatpush1.msra.mxu0 0.0
    %2514 = vmatprep.subr.mxu0 0.0
    %2515 = vmatpush1.msra.mxu0 0.0
    %2516 = vmatprep.subr.mxu0 0.0
    %2517 = vmatpush1.msra.mxu0 0.0
    %2518 = vmatprep.subr.mxu0 0.0
    %2519 = vmatpush1.msra.mxu0 0.0
    %2520 = vmatprep.subr.mxu0 0.0
    %2521 = vmatpush1.msra.mxu0 0.0
    %2522 = vmatprep.subr.mxu0 0.0
    %2523 = vmatpush1.msra.mxu0 0.0
    %2524 = vmatprep.subr.mxu0 0.0
    %2525 = vmatpush1.msra.mxu0 0.0
    %2526 = vmatprep.subr.mxu0 0.0
    %2527 = vmatpush1.msra.mxu0 0.0
    %2528 = vmatprep.subr.mxu0 0.0
    %2529 = vmatpush1.msra.mxu0 0.0
    %2530 = vmatprep.subr.mxu0 0.0
    %2531 = vmatpush1.msra.mxu0 0.0
    %2532 = vmatprep.subr.mxu0 0.0
    %2533 = vmatpush1.msra.mxu0 0.0
    %2534 = vmatprep.mubr.f32.mxu0 0.0
    %v2535 = vand.u32 %v2195, 4294901760
    %v2536 = vsub.f32 %v2195, %v2535
    %2537 = vmatmul.mubr.f32.gmra.mrb[0].mxu0 %v2536
    %v2538 = vpop.f32.mrb[0].mxu0
    %v2539 = vadd.f32 %v2435, %v2538
    %v2540 = vpop.f32.mrb[0].mxu0
    %2541 = vdwg.mxu0
    %2542 = vmatprep.subr.mxu0 0.0
    %v2543 = vand.u32 %v2178, 4294901760
    %2544 = vmatpush1.msra.mxu0 %v2543
    %2545 = vmatprep.subr.mxu0 0.0
    %v2546 = vand.u32 %v2179, 4294901760
    %2547 = vmatpush1.msra.mxu0 %v2546
    %2548 = vmatprep.subr.mxu0 0.0
    %v2549 = vand.u32 %v2180, 4294901760
    %2550 = vmatpush1.msra.mxu0 %v2549
    %2551 = vmatprep.subr.mxu0 0.0
    %v2552 = vand.u32 %v2181, 4294901760
    %2553 = vmatpush1.msra.mxu0 %v2552
    %2554 = vmatprep.subr.mxu0 0.0
    %v2555 = vand.u32 %v2182, 4294901760
    %2556 = vmatpush1.msra.mxu0 %v2555
    %2557 = vmatprep.subr.mxu0 0.0
    %v2558 = vand.u32 %v2183, 4294901760
    %2559 = vmatpush1.msra.mxu0 %v2558
    %2560 = vmatprep.subr.mxu0 0.0
    %v2561 = vand.u32 %v2184, 4294901760
    %2562 = vmatpush1.msra.mxu0 %v2561
    %2563 = vmatprep.subr.mxu0 0.0
    %v2564 = vand.u32 %v2185, 4294901760
    %2565 = vmatpush1.msra.mxu0 %v2564
    %2566 = vmatprep.subr.mxu0 0.0
    %v2567 = vand.u32 %v2186, 4294901760
    %2568 = vmatpush1.msra.mxu0 %v2567
    %2569 = vmatprep.subr.mxu0 0.0
    %v2570 = vand.u32 %v2187, 4294901760
    %2571 = vmatpush1.msra.mxu0 %v2570
    %2572 = vmatprep.subr.mxu0 0.0
    %v2573 = vand.u32 %v2188, 4294901760
    %2574 = vmatpush1.msra.mxu0 %v2573
    %2575 = vmatprep.subr.mxu0 0.0
    %v2576 = vand.u32 %v2189, 4294901760
    %2577 = vmatpush1.msra.mxu0 %v2576
    %2578 = vmatprep.subr.mxu0 0.0
    %v2579 = vand.u32 %v2190, 4294901760
    %2580 = vmatpush1.msra.mxu0 %v2579
    %2581 = vmatprep.subr.mxu0 0.0
    %v2582 = vand.u32 %v2191, 4294901760
    %2583 = vmatpush1.msra.mxu0 %v2582
    %2584 = vmatprep.subr.mxu0 0.0
    %v2585 = vand.u32 %v2192, 4294901760
    %2586 = vmatpush1.msra.mxu0 %v2585
    %2587 = vmatprep.subr.mxu0 0.0
    %v2588 = vand.u32 %v2193, 4294901760
    %2589 = vmatpush1.msra.mxu0 %v2588
    %2590 = vmatprep.subr.mxu0 0.0
    %2591 = vmatpush1.msra.mxu0 0.0
    %2592 = vmatprep.subr.mxu0 0.0
    %2593 = vmatpush1.msra.mxu0 0.0
    %2594 = vmatprep.subr.mxu0 0.0
    %2595 = vmatpush1.msra.mxu0 0.0
    %2596 = vmatprep.subr.mxu0 0.0
    %2597 = vmatpush1.msra.mxu0 0.0
    %2598 = vmatprep.subr.mxu0 0.0
    %2599 = vmatpush1.msra.mxu0 0.0
    %2600 = vmatprep.subr.mxu0 0.0
    %2601 = vmatpush1.msra.mxu0 0.0
    %2602 = vmatprep.subr.mxu0 0.0
    %2603 = vmatpush1.msra.mxu0 0.0
    %2604 = vmatprep.subr.mxu0 0.0
    %2605 = vmatpush1.msra.mxu0 0.0
    %2606 = vmatprep.subr.mxu0 0.0
    %2607 = vmatpush1.msra.mxu0 0.0
    %2608 = vmatprep.subr.mxu0 0.0
    %2609 = vmatpush1.msra.mxu0 0.0
    %2610 = vmatprep.subr.mxu0 0.0
    %2611 = vmatpush1.msra.mxu0 0.0
    %2612 = vmatprep.subr.mxu0 0.0
    %2613 = vmatpush1.msra.mxu0 0.0
    %2614 = vmatprep.subr.mxu0 0.0
    %2615 = vmatpush1.msra.mxu0 0.0
    %2616 = vmatprep.subr.mxu0 0.0
    %2617 = vmatpush1.msra.mxu0 0.0
    %2618 = vmatprep.subr.mxu0 0.0
    %2619 = vmatpush1.msra.mxu0 0.0
    %2620 = vmatprep.subr.mxu0 0.0
    %2621 = vmatpush1.msra.mxu0 0.0
    %2622 = vmatprep.mubr.f32.mxu0 0.0
    %v2623 = vand.u32 %v2195, 4294901760
    %v2624 = vsub.f32 %v2195, %v2623
    %v2625 = vand.u32 %v2624, 4294901760
    %2626 = vmatmul.mubr.f32.gmra.mrb[0].mxu0 %v2625
    %v2627 = vpop.f32.mrb[0].mxu0
    %v2628 = vadd.f32 %v2539, %v2627
    %v2629 = vpop.f32.mrb[0].mxu0
    %2630 = vdwg.mxu0
    %2631 = vmatprep.subr.mxu0 0.0
    %v2632 = vand.u32 %v2178, 4294901760
    %v2633 = vsub.f32 %v2178, %v2632
    %v2634 = vand.u32 %v2633, 4294901760
    %2635 = vmatpush1.msra.mxu0 %v2634
    %2636 = vmatprep.subr.mxu0 0.0
    %v2637 = vand.u32 %v2179, 4294901760
    %v2638 = vsub.f32 %v2179, %v2637
    %v2639 = vand.u32 %v2638, 4294901760
    %2640 = vmatpush1.msra.mxu0 %v2639
    %2641 = vmatprep.subr.mxu0 0.0
    %v2642 = vand.u32 %v2180, 4294901760
    %v2643 = vsub.f32 %v2180, %v2642
    %v2644 = vand.u32 %v2643, 4294901760
    %2645 = vmatpush1.msra.mxu0 %v2644
    %2646 = vmatprep.subr.mxu0 0.0
    %v2647 = vand.u32 %v2181, 4294901760
    %v2648 = vsub.f32 %v2181, %v2647
    %v2649 = vand.u32 %v2648, 4294901760
    %2650 = vmatpush1.msra.mxu0 %v2649
    %2651 = vmatprep.subr.mxu0 0.0
    %v2652 = vand.u32 %v2182, 4294901760
    %v2653 = vsub.f32 %v2182, %v2652
    %v2654 = vand.u32 %v2653, 4294901760
    %2655 = vmatpush1.msra.mxu0 %v2654
    %2656 = vmatprep.subr.mxu0 0.0
    %v2657 = vand.u32 %v2183, 4294901760
    %v2658 = vsub.f32 %v2183, %v2657
    %v2659 = vand.u32 %v2658, 4294901760
    %2660 = vmatpush1.msra.mxu0 %v2659
    %2661 = vmatprep.subr.mxu0 0.0
    %v2662 = vand.u32 %v2184, 4294901760
    %v2663 = vsub.f32 %v2184, %v2662
    %v2664 = vand.u32 %v2663, 4294901760
    %2665 = vmatpush1.msra.mxu0 %v2664
    %2666 = vmatprep.subr.mxu0 0.0
    %v2667 = vand.u32 %v2185, 4294901760
    %v2668 = vsub.f32 %v2185, %v2667
    %v2669 = vand.u32 %v2668, 4294901760
    %2670 = vmatpush1.msra.mxu0 %v2669
    %2671 = vmatprep.subr.mxu0 0.0
    %v2672 = vand.u32 %v2186, 4294901760
    %v2673 = vsub.f32 %v2186, %v2672
    %v2674 = vand.u32 %v2673, 4294901760
    %2675 = vmatpush1.msra.mxu0 %v2674
    %2676 = vmatprep.subr.mxu0 0.0
    %v2677 = vand.u32 %v2187, 4294901760
    %v2678 = vsub.f32 %v2187, %v2677
    %v2679 = vand.u32 %v2678, 4294901760
    %2680 = vmatpush1.msra.mxu0 %v2679
    %2681 = vmatprep.subr.mxu0 0.0
    %v2682 = vand.u32 %v2188, 4294901760
    %v2683 = vsub.f32 %v2188, %v2682
    %v2684 = vand.u32 %v2683, 4294901760
    %2685 = vmatpush1.msra.mxu0 %v2684
    %2686 = vmatprep.subr.mxu0 0.0
    %v2687 = vand.u32 %v2189, 4294901760
    %v2688 = vsub.f32 %v2189, %v2687
    %v2689 = vand.u32 %v2688, 4294901760
    %2690 = vmatpush1.msra.mxu0 %v2689
    %2691 = vmatprep.subr.mxu0 0.0
    %v2692 = vand.u32 %v2190, 4294901760
    %v2693 = vsub.f32 %v2190, %v2692
    %v2694 = vand.u32 %v2693, 4294901760
    %2695 = vmatpush1.msra.mxu0 %v2694
    %2696 = vmatprep.subr.mxu0 0.0
    %v2697 = vand.u32 %v2191, 4294901760
    %v2698 = vsub.f32 %v2191, %v2697
    %v2699 = vand.u32 %v2698, 4294901760
    %2700 = vmatpush1.msra.mxu0 %v2699
    %2701 = vmatprep.subr.mxu0 0.0
    %v2702 = vand.u32 %v2192, 4294901760
    %v2703 = vsub.f32 %v2192, %v2702
    %v2704 = vand.u32 %v2703, 4294901760
    %2705 = vmatpush1.msra.mxu0 %v2704
    %2706 = vmatprep.subr.mxu0 0.0
    %v2707 = vand.u32 %v2193, 4294901760
    %v2708 = vsub.f32 %v2193, %v2707
    %v2709 = vand.u32 %v2708, 4294901760
    %2710 = vmatpush1.msra.mxu0 %v2709
    %2711 = vmatprep.subr.mxu0 0.0
    %2712 = vmatpush1.msra.mxu0 0.0
    %2713 = vmatprep.subr.mxu0 0.0
    %2714 = vmatpush1.msra.mxu0 0.0
    %2715 = vmatprep.subr.mxu0 0.0
    %2716 = vmatpush1.msra.mxu0 0.0
    %2717 = vmatprep.subr.mxu0 0.0
    %2718 = vmatpush1.msra.mxu0 0.0
    %2719 = vmatprep.subr.mxu0 0.0
    %2720 = vmatpush1.msra.mxu0 0.0
    %2721 = vmatprep.subr.mxu0 0.0
    %2722 = vmatpush1.msra.mxu0 0.0
    %2723 = vmatprep.subr.mxu0 0.0
    %2724 = vmatpush1.msra.mxu0 0.0
    %2725 = vmatprep.subr.mxu0 0.0
    %2726 = vmatpush1.msra.mxu0 0.0
    %2727 = vmatprep.subr.mxu0 0.0
    %2728 = vmatpush1.msra.mxu0 0.0
    %2729 = vmatprep.subr.mxu0 0.0
    %2730 = vmatpush1.msra.mxu0 0.0
    %2731 = vmatprep.subr.mxu0 0.0
    %2732 = vmatpush1.msra.mxu0 0.0
    %2733 = vmatprep.subr.mxu0 0.0
    %2734 = vmatpush1.msra.mxu0 0.0
    %2735 = vmatprep.subr.mxu0 0.0
    %2736 = vmatpush1.msra.mxu0 0.0
    %2737 = vmatprep.subr.mxu0 0.0
    %2738 = vmatpush1.msra.mxu0 0.0
    %2739 = vmatprep.subr.mxu0 0.0
    %2740 = vmatpush1.msra.mxu0 0.0
    %2741 = vmatprep.subr.mxu0 0.0
    %2742 = vmatpush1.msra.mxu0 0.0
    %2743 = vmatprep.mubr.f32.mxu0 0.0
    %v2744 = vand.u32 %v2195, 4294901760
    %2745 = vmatmul.mubr.f32.gmra.mrb[0].mxu0 %v2744
    %v2746 = vpop.f32.mrb[0].mxu0
    %v2747 = vadd.f32 %v2628, %v2746
    %v2748 = vpop.f32.mrb[0].mxu0
    %2749 = vdwg.mxu0
    %2750 = vmatprep.subr.mxu0 0.0
    %v2751 = vand.u32 %v2178, 4294901760
    %2752 = vmatpush1.msra.mxu0 %v2751
    %2753 = vmatprep.subr.mxu0 0.0
    %v2754 = vand.u32 %v2179, 4294901760
    %2755 = vmatpush1.msra.mxu0 %v2754
    %2756 = vmatprep.subr.mxu0 0.0
    %v2757 = vand.u32 %v2180, 4294901760
    %2758 = vmatpush1.msra.mxu0 %v2757
    %2759 = vmatprep.subr.mxu0 0.0
    %v2760 = vand.u32 %v2181, 4294901760
    %2761 = vmatpush1.msra.mxu0 %v2760
    %2762 = vmatprep.subr.mxu0 0.0
    %v2763 = vand.u32 %v2182, 4294901760
    %2764 = vmatpush1.msra.mxu0 %v2763
    %2765 = vmatprep.subr.mxu0 0.0
    %v2766 = vand.u32 %v2183, 4294901760
    %2767 = vmatpush1.msra.mxu0 %v2766
    %2768 = vmatprep.subr.mxu0 0.0
    %v2769 = vand.u32 %v2184, 4294901760
    %2770 = vmatpush1.msra.mxu0 %v2769
    %2771 = vmatprep.subr.mxu0 0.0
    %v2772 = vand.u32 %v2185, 4294901760
    %2773 = vmatpush1.msra.mxu0 %v2772
    %2774 = vmatprep.subr.mxu0 0.0
    %v2775 = vand.u32 %v2186, 4294901760
    %2776 = vmatpush1.msra.mxu0 %v2775
    %2777 = vmatprep.subr.mxu0 0.0
    %v2778 = vand.u32 %v2187, 4294901760
    %2779 = vmatpush1.msra.mxu0 %v2778
    %2780 = vmatprep.subr.mxu0 0.0
    %v2781 = vand.u32 %v2188, 4294901760
    %2782 = vmatpush1.msra.mxu0 %v2781
    %2783 = vmatprep.subr.mxu0 0.0
    %v2784 = vand.u32 %v2189, 4294901760
    %2785 = vmatpush1.msra.mxu0 %v2784
    %2786 = vmatprep.subr.mxu0 0.0
    %v2787 = vand.u32 %v2190, 4294901760
    %2788 = vmatpush1.msra.mxu0 %v2787
    %2789 = vmatprep.subr.mxu0 0.0
    %v2790 = vand.u32 %v2191, 4294901760
    %2791 = vmatpush1.msra.mxu0 %v2790
    %2792 = vmatprep.subr.mxu0 0.0
    %v2793 = vand.u32 %v2192, 4294901760
    %2794 = vmatpush1.msra.mxu0 %v2793
    %2795 = vmatprep.subr.mxu0 0.0
    %v2796 = vand.u32 %v2193, 4294901760
    %2797 = vmatpush1.msra.mxu0 %v2796
    %2798 = vmatprep.subr.mxu0 0.0
    %2799 = vmatpush1.msra.mxu0 0.0
    %2800 = vmatprep.subr.mxu0 0.0
    %2801 = vmatpush1.msra.mxu0 0.0
    %2802 = vmatprep.subr.mxu0 0.0
    %2803 = vmatpush1.msra.mxu0 0.0
    %2804 = vmatprep.subr.mxu0 0.0
    %2805 = vmatpush1.msra.mxu0 0.0
    %2806 = vmatprep.subr.mxu0 0.0
    %2807 = vmatpush1.msra.mxu0 0.0
    %2808 = vmatprep.subr.mxu0 0.0
    %2809 = vmatpush1.msra.mxu0 0.0
    %2810 = vmatprep.subr.mxu0 0.0
    %2811 = vmatpush1.msra.mxu0 0.0
    %2812 = vmatprep.subr.mxu0 0.0
    %2813 = vmatpush1.msra.mxu0 0.0
    %2814 = vmatprep.subr.mxu0 0.0
    %2815 = vmatpush1.msra.mxu0 0.0
    %2816 = vmatprep.subr.mxu0 0.0
    %2817 = vmatpush1.msra.mxu0 0.0
    %2818 = vmatprep.subr.mxu0 0.0
    %2819 = vmatpush1.msra.mxu0 0.0
    %2820 = vmatprep.subr.mxu0 0.0
    %2821 = vmatpush1.msra.mxu0 0.0
    %2822 = vmatprep.subr.mxu0 0.0
    %2823 = vmatpush1.msra.mxu0 0.0
    %2824 = vmatprep.subr.mxu0 0.0
    %2825 = vmatpush1.msra.mxu0 0.0
    %2826 = vmatprep.subr.mxu0 0.0
    %2827 = vmatpush1.msra.mxu0 0.0
    %2828 = vmatprep.subr.mxu0 0.0
    %2829 = vmatpush1.msra.mxu0 0.0
    %2830 = vmatprep.mubr.f32.mxu0 0.0
    %v2831 = vand.u32 %v2195, 4294901760
    %2832 = vmatmul.mubr.f32.gmra.mrb[0].mxu0 %v2831
    %v2833 = vpop.f32.mrb[0].mxu0
    %v2834 = vadd.f32 %v2747, %v2833
    %v2835 = vpop.f32.mrb[0].mxu0
    %2836 = vdwg.mxu0
    %v2837 = vadd.f32 %v2140, %v2834
    %v2838 = vld [vmem:[%s0 + $0x4] sm:$0x1]
    %v2839 = vlaneseq
    %v2840 = vshrl.u32 %v2839, 7
    %v2841 = vsub.s32 0, %v2840
    %v2842 = vrot.slane %v2838, %v2841
    %vm2843 = vcmp.eq.s32.totalorder %v36, %v2842
    %vm2844 = vcmp.eq.s32.totalorder %v37, %v2842
    %vm2845 = vcmp.eq.s32.totalorder %v38, %v2842
    %vm2846 = vcmp.eq.s32.totalorder %v39, %v2842
    %vm2847 = vcmp.eq.s32.totalorder %v40, %v2842
    %vm2848 = vcmp.eq.s32.totalorder %v41, %v2842
    %vm2849 = vcmp.eq.s32.totalorder %v42, %v2842
    %vm2850 = vcmp.eq.s32.totalorder %v43, %v2842
    %vm2851 = vcmp.eq.s32.totalorder %v44, %v2842
    %vm2852 = vcmp.eq.s32.totalorder %v45, %v2842
    %vm2853 = vcmp.eq.s32.totalorder %v46, %v2842
    %vm2854 = vcmp.eq.s32.totalorder %v47, %v2842
    %vm2855 = vcmp.eq.s32.totalorder %v48, %v2842
    %vm2856 = vcmp.eq.s32.totalorder %v49, %v2842
    %vm2857 = vcmp.eq.s32.totalorder %v50, %v2842
    %vm2858 = vcmp.eq.s32.totalorder %v51, %v2842
    %v2859 = vsel %vm2843, 1, 0
    %v2860 = vsel %vm2844, 1, 0
    %v2861 = vsel %vm2845, 1, 0
    %v2862 = vsel %vm2846, 1, 0
    %v2863 = vsel %vm2847, 1, 0
    %v2864 = vsel %vm2848, 1, 0
    %v2865 = vsel %vm2849, 1, 0
    %v2866 = vsel %vm2850, 1, 0
    %v2867 = vsel %vm2851, 1, 0
    %v2868 = vsel %vm2852, 1, 0
    %v2869 = vsel %vm2853, 1, 0
    %v2870 = vsel %vm2854, 1, 0
    %v2871 = vsel %vm2855, 1, 0
    %v2872 = vsel %vm2856, 1, 0
    %v2873 = vsel %vm2857, 1, 0
    %v2874 = vsel %vm2858, 1, 0
    %v2875 = vcvt.s32.f32 %v2859
    %v2876 = vcvt.s32.f32 %v2860
    %v2877 = vcvt.s32.f32 %v2861
    %v2878 = vcvt.s32.f32 %v2862
    %v2879 = vcvt.s32.f32 %v2863
    %v2880 = vcvt.s32.f32 %v2864
    %v2881 = vcvt.s32.f32 %v2865
    %v2882 = vcvt.s32.f32 %v2866
    %v2883 = vcvt.s32.f32 %v2867
    %v2884 = vcvt.s32.f32 %v2868
    %v2885 = vcvt.s32.f32 %v2869
    %v2886 = vcvt.s32.f32 %v2870
    %v2887 = vcvt.s32.f32 %v2871
    %v2888 = vcvt.s32.f32 %v2872
    %v2889 = vcvt.s32.f32 %v2873
    %v2890 = vcvt.s32.f32 %v2874
    %s2891 = scalar_lea.vmem [#allocation2], 32
    %v2892 = vld [vmem:[%s2891] sm:$0xff]
    %2893 = vmatprep.subr.mxu0 0.0
    %v2894 = vand.u32 %v2875, 4294901760
    %2895 = vmatpush1.msra.mxu0 %v2894
    %2896 = vmatprep.subr.mxu0 0.0
    %v2897 = vand.u32 %v2876, 4294901760
    %2898 = vmatpush1.msra.mxu0 %v2897
    %2899 = vmatprep.subr.mxu0 0.0
    %v2900 = vand.u32 %v2877, 4294901760
    %2901 = vmatpush1.msra.mxu0 %v2900
    %2902 = vmatprep.subr.mxu0 0.0
    %v2903 = vand.u32 %v2878, 4294901760
    %2904 = vmatpush1.msra.mxu0 %v2903
    %2905 = vmatprep.subr.mxu0 0.0
    %v2906 = vand.u32 %v2879, 4294901760
    %2907 = vmatpush1.msra.mxu0 %v2906
    %2908 = vmatprep.subr.mxu0 0.0
    %v2909 = vand.u32 %v2880, 4294901760
    %2910 = vmatpush1.msra.mxu0 %v2909
    %2911 = vmatprep.subr.mxu0 0.0
    %v2912 = vand.u32 %v2881, 4294901760
    %2913 = vmatpush1.msra.mxu0 %v2912
    %2914 = vmatprep.subr.mxu0 0.0
    %v2915 = vand.u32 %v2882, 4294901760
    %2916 = vmatpush1.msra.mxu0 %v2915
    %2917 = vmatprep.subr.mxu0 0.0
    %v2918 = vand.u32 %v2883, 4294901760
    %2919 = vmatpush1.msra.mxu0 %v2918
    %2920 = vmatprep.subr.mxu0 0.0
    %v2921 = vand.u32 %v2884, 4294901760
    %2922 = vmatpush1.msra.mxu0 %v2921
    %2923 = vmatprep.subr.mxu0 0.0
    %v2924 = vand.u32 %v2885, 4294901760
    %2925 = vmatpush1.msra.mxu0 %v2924
    %2926 = vmatprep.subr.mxu0 0.0
    %v2927 = vand.u32 %v2886, 4294901760
    %2928 = vmatpush1.msra.mxu0 %v2927
    %2929 = vmatprep.subr.mxu0 0.0
    %v2930 = vand.u32 %v2887, 4294901760
    %2931 = vmatpush1.msra.mxu0 %v2930
    %2932 = vmatprep.subr.mxu0 0.0
    %v2933 = vand.u32 %v2888, 4294901760
    %2934 = vmatpush1.msra.mxu0 %v2933
    %2935 = vmatprep.subr.mxu0 0.0
    %v2936 = vand.u32 %v2889, 4294901760
    %2937 = vmatpush1.msra.mxu0 %v2936
    %2938 = vmatprep.subr.mxu0 0.0
    %v2939 = vand.u32 %v2890, 4294901760
    %2940 = vmatpush1.msra.mxu0 %v2939
    %2941 = vmatprep.subr.mxu0 0.0
    %2942 = vmatpush1.msra.mxu0 0.0
    %2943 = vmatprep.subr.mxu0 0.0
    %2944 = vmatpush1.msra.mxu0 0.0
    %2945 = vmatprep.subr.mxu0 0.0
    %2946 = vmatpush1.msra.mxu0 0.0
    %2947 = vmatprep.subr.mxu0 0.0
    %2948 = vmatpush1.msra.mxu0 0.0
    %2949 = vmatprep.subr.mxu0 0.0
    %2950 = vmatpush1.msra.mxu0 0.0
    %2951 = vmatprep.subr.mxu0 0.0
    %2952 = vmatpush1.msra.mxu0 0.0
    %2953 = vmatprep.subr.mxu0 0.0
    %2954 = vmatpush1.msra.mxu0 0.0
    %2955 = vmatprep.subr.mxu0 0.0
    %2956 = vmatpush1.msra.mxu0 0.0
    %2957 = vmatprep.subr.mxu0 0.0
    %2958 = vmatpush1.msra.mxu0 0.0
    %2959 = vmatprep.subr.mxu0 0.0
    %2960 = vmatpush1.msra.mxu0 0.0
    %2961 = vmatprep.subr.mxu0 0.0
    %2962 = vmatpush1.msra.mxu0 0.0
    %2963 = vmatprep.subr.mxu0 0.0
    %2964 = vmatpush1.msra.mxu0 0.0
    %2965 = vmatprep.subr.mxu0 0.0
    %2966 = vmatpush1.msra.mxu0 0.0
    %2967 = vmatprep.subr.mxu0 0.0
    %2968 = vmatpush1.msra.mxu0 0.0
    %2969 = vmatprep.subr.mxu0 0.0
    %2970 = vmatpush1.msra.mxu0 0.0
    %2971 = vmatprep.subr.mxu0 0.0
    %2972 = vmatpush1.msra.mxu0 0.0
    %2973 = vmatprep.mubr.f32.mxu0 0.0
    %v2974 = vand.u32 %v2892, 4294901760
    %v2975 = vsub.f32 %v2892, %v2974
    %v2976 = vand.u32 %v2975, 4294901760
    %v2977 = vsub.f32 %v2975, %v2976
    %v2978 = vand.u32 %v2977, 4294901760
    %2979 = vmatmul.mubr.f32.gmra.mrb[0].mxu0 %v2978
    %v2980 = vpop.f32.mrb[0].mxu0
    %v2981 = vadd.f32 0.0, %v2980
    %v2982 = vpop.f32.mrb[0].mxu0
    %2983 = vdwg.mxu0
    %2984 = vmatprep.subr.mxu0 0.0
    %v2985 = vand.u32 %v2875, 4294901760
    %v2986 = vsub.f32 %v2875, %v2985
    %v2987 = vand.u32 %v2986, 4294901760
    %v2988 = vsub.f32 %v2986, %v2987
    %v2989 = vand.u32 %v2988, 4294901760
    %2990 = vmatpush1.msra.mxu0 %v2989
    %2991 = vmatprep.subr.mxu0 0.0
    %v2992 = vand.u32 %v2876, 4294901760
    %v2993 = vsub.f32 %v2876, %v2992
    %v2994 = vand.u32 %v2993, 4294901760
    %v2995 = vsub.f32 %v2993, %v2994
    %v2996 = vand.u32 %v2995, 4294901760
    %2997 = vmatpush1.msra.mxu0 %v2996
    %2998 = vmatprep.subr.mxu0 0.0
    %v2999 = vand.u32 %v2877, 4294901760
    %v3000 = vsub.f32 %v2877, %v2999
    %v3001 = vand.u32 %v3000, 4294901760
    %v3002 = vsub.f32 %v3000, %v3001
    %v3003 = vand.u32 %v3002, 4294901760
    %3004 = vmatpush1.msra.mxu0 %v3003
    %3005 = vmatprep.subr.mxu0 0.0
    %v3006 = vand.u32 %v2878, 4294901760
    %v3007 = vsub.f32 %v2878, %v3006
    %v3008 = vand.u32 %v3007, 4294901760
    %v3009 = vsub.f32 %v3007, %v3008
    %v3010 = vand.u32 %v3009, 4294901760
    %3011 = vmatpush1.msra.mxu0 %v3010
    %3012 = vmatprep.subr.mxu0 0.0
    %v3013 = vand.u32 %v2879, 4294901760
    %v3014 = vsub.f32 %v2879, %v3013
    %v3015 = vand.u32 %v3014, 4294901760
    %v3016 = vsub.f32 %v3014, %v3015
    %v3017 = vand.u32 %v3016, 4294901760
    %3018 = vmatpush1.msra.mxu0 %v3017
    %3019 = vmatprep.subr.mxu0 0.0
    %v3020 = vand.u32 %v2880, 4294901760
    %v3021 = vsub.f32 %v2880, %v3020
    %v3022 = vand.u32 %v3021, 4294901760
    %v3023 = vsub.f32 %v3021, %v3022
    %v3024 = vand.u32 %v3023, 4294901760
    %3025 = vmatpush1.msra.mxu0 %v3024
    %3026 = vmatprep.subr.mxu0 0.0
    %v3027 = vand.u32 %v2881, 4294901760
    %v3028 = vsub.f32 %v2881, %v3027
    %v3029 = vand.u32 %v3028, 4294901760
    %v3030 = vsub.f32 %v3028, %v3029
    %v3031 = vand.u32 %v3030, 4294901760
    %3032 = vmatpush1.msra.mxu0 %v3031
    %3033 = vmatprep.subr.mxu0 0.0
    %v3034 = vand.u32 %v2882, 4294901760
    %v3035 = vsub.f32 %v2882, %v3034
    %v3036 = vand.u32 %v3035, 4294901760
    %v3037 = vsub.f32 %v3035, %v3036
    %v3038 = vand.u32 %v3037, 4294901760
    %3039 = vmatpush1.msra.mxu0 %v3038
    %3040 = vmatprep.subr.mxu0 0.0
    %v3041 = vand.u32 %v2883, 4294901760
    %v3042 = vsub.f32 %v2883, %v3041
    %v3043 = vand.u32 %v3042, 4294901760
    %v3044 = vsub.f32 %v3042, %v3043
    %v3045 = vand.u32 %v3044, 4294901760
    %3046 = vmatpush1.msra.mxu0 %v3045
    %3047 = vmatprep.subr.mxu0 0.0
    %v3048 = vand.u32 %v2884, 4294901760
    %v3049 = vsub.f32 %v2884, %v3048
    %v3050 = vand.u32 %v3049, 4294901760
    %v3051 = vsub.f32 %v3049, %v3050
    %v3052 = vand.u32 %v3051, 4294901760
    %3053 = vmatpush1.msra.mxu0 %v3052
    %3054 = vmatprep.subr.mxu0 0.0
    %v3055 = vand.u32 %v2885, 4294901760
    %v3056 = vsub.f32 %v2885, %v3055
    %v3057 = vand.u32 %v3056, 4294901760
    %v3058 = vsub.f32 %v3056, %v3057
    %v3059 = vand.u32 %v3058, 4294901760
    %3060 = vmatpush1.msra.mxu0 %v3059
    %3061 = vmatprep.subr.mxu0 0.0
    %v3062 = vand.u32 %v2886, 4294901760
    %v3063 = vsub.f32 %v2886, %v3062
    %v3064 = vand.u32 %v3063, 4294901760
    %v3065 = vsub.f32 %v3063, %v3064
    %v3066 = vand.u32 %v3065, 4294901760
    %3067 = vmatpush1.msra.mxu0 %v3066
    %3068 = vmatprep.subr.mxu0 0.0
    %v3069 = vand.u32 %v2887, 4294901760
    %v3070 = vsub.f32 %v2887, %v3069
    %v3071 = vand.u32 %v3070, 4294901760
    %v3072 = vsub.f32 %v3070, %v3071
    %v3073 = vand.u32 %v3072, 4294901760
    %3074 = vmatpush1.msra.mxu0 %v3073
    %3075 = vmatprep.subr.mxu0 0.0
    %v3076 = vand.u32 %v2888, 4294901760
    %v3077 = vsub.f32 %v2888, %v3076
    %v3078 = vand.u32 %v3077, 4294901760
    %v3079 = vsub.f32 %v3077, %v3078
    %v3080 = vand.u32 %v3079, 4294901760
    %3081 = vmatpush1.msra.mxu0 %v3080
    %3082 = vmatprep.subr.mxu0 0.0
    %v3083 = vand.u32 %v2889, 4294901760
    %v3084 = vsub.f32 %v2889, %v3083
    %v3085 = vand.u32 %v3084, 4294901760
    %v3086 = vsub.f32 %v3084, %v3085
    %v3087 = vand.u32 %v3086, 4294901760
    %3088 = vmatpush1.msra.mxu0 %v3087
    %3089 = vmatprep.subr.mxu0 0.0
    %v3090 = vand.u32 %v2890, 4294901760
    %v3091 = vsub.f32 %v2890, %v3090
    %v3092 = vand.u32 %v3091, 4294901760
    %v3093 = vsub.f32 %v3091, %v3092
    %v3094 = vand.u32 %v3093, 4294901760
    %3095 = vmatpush1.msra.mxu0 %v3094
    %3096 = vmatprep.subr.mxu0 0.0
    %3097 = vmatpush1.msra.mxu0 0.0
    %3098 = vmatprep.subr.mxu0 0.0
    %3099 = vmatpush1.msra.mxu0 0.0
    %3100 = vmatprep.subr.mxu0 0.0
    %3101 = vmatpush1.msra.mxu0 0.0
    %3102 = vmatprep.subr.mxu0 0.0
    %3103 = vmatpush1.msra.mxu0 0.0
    %3104 = vmatprep.subr.mxu0 0.0
    %3105 = vmatpush1.msra.mxu0 0.0
    %3106 = vmatprep.subr.mxu0 0.0
    %3107 = vmatpush1.msra.mxu0 0.0
    %3108 = vmatprep.subr.mxu0 0.0
    %3109 = vmatpush1.msra.mxu0 0.0
    %3110 = vmatprep.subr.mxu0 0.0
    %3111 = vmatpush1.msra.mxu0 0.0
    %3112 = vmatprep.subr.mxu0 0.0
    %3113 = vmatpush1.msra.mxu0 0.0
    %3114 = vmatprep.subr.mxu0 0.0
    %3115 = vmatpush1.msra.mxu0 0.0
    %3116 = vmatprep.subr.mxu0 0.0
    %3117 = vmatpush1.msra.mxu0 0.0
    %3118 = vmatprep.subr.mxu0 0.0
    %3119 = vmatpush1.msra.mxu0 0.0
    %3120 = vmatprep.subr.mxu0 0.0
    %3121 = vmatpush1.msra.mxu0 0.0
    %3122 = vmatprep.subr.mxu0 0.0
    %3123 = vmatpush1.msra.mxu0 0.0
    %3124 = vmatprep.subr.mxu0 0.0
    %3125 = vmatpush1.msra.mxu0 0.0
    %3126 = vmatprep.subr.mxu0 0.0
    %3127 = vmatpush1.msra.mxu0 0.0
    %3128 = vmatprep.mubr.f32.mxu0 0.0
    %v3129 = vand.u32 %v2892, 4294901760
    %3130 = vmatmul.mubr.f32.gmra.mrb[0].mxu0 %v3129
    %v3131 = vpop.f32.mrb[0].mxu0
    %v3132 = vadd.f32 %v2981, %v3131
    %v3133 = vpop.f32.mrb[0].mxu0
    %3134 = vdwg.mxu0
    %3135 = vmatprep.subr.mxu0 0.0
    %v3136 = vand.u32 %v2875, 4294901760
    %v3137 = vsub.f32 %v2875, %v3136
    %3138 = vmatpush1.msra.mxu0 %v3137
    %3139 = vmatprep.subr.mxu0 0.0
    %v3140 = vand.u32 %v2876, 4294901760
    %v3141 = vsub.f32 %v2876, %v3140
    %3142 = vmatpush1.msra.mxu0 %v3141
    %3143 = vmatprep.subr.mxu0 0.0
    %v3144 = vand.u32 %v2877, 4294901760
    %v3145 = vsub.f32 %v2877, %v3144
    %3146 = vmatpush1.msra.mxu0 %v3145
    %3147 = vmatprep.subr.mxu0 0.0
    %v3148 = vand.u32 %v2878, 4294901760
    %v3149 = vsub.f32 %v2878, %v3148
    %3150 = vmatpush1.msra.mxu0 %v3149
    %3151 = vmatprep.subr.mxu0 0.0
    %v3152 = vand.u32 %v2879, 4294901760
    %v3153 = vsub.f32 %v2879, %v3152
    %3154 = vmatpush1.msra.mxu0 %v3153
    %3155 = vmatprep.subr.mxu0 0.0
    %v3156 = vand.u32 %v2880, 4294901760
    %v3157 = vsub.f32 %v2880, %v3156
    %3158 = vmatpush1.msra.mxu0 %v3157
    %3159 = vmatprep.subr.mxu0 0.0
    %v3160 = vand.u32 %v2881, 4294901760
    %v3161 = vsub.f32 %v2881, %v3160
    %3162 = vmatpush1.msra.mxu0 %v3161
    %3163 = vmatprep.subr.mxu0 0.0
    %v3164 = vand.u32 %v2882, 4294901760
    %v3165 = vsub.f32 %v2882, %v3164
    %3166 = vmatpush1.msra.mxu0 %v3165
    %3167 = vmatprep.subr.mxu0 0.0
    %v3168 = vand.u32 %v2883, 4294901760
    %v3169 = vsub.f32 %v2883, %v3168
    %3170 = vmatpush1.msra.mxu0 %v3169
    %3171 = vmatprep.subr.mxu0 0.0
    %v3172 = vand.u32 %v2884, 4294901760
    %v3173 = vsub.f32 %v2884, %v3172
    %3174 = vmatpush1.msra.mxu0 %v3173
    %3175 = vmatprep.subr.mxu0 0.0
    %v3176 = vand.u32 %v2885, 4294901760
    %v3177 = vsub.f32 %v2885, %v3176
    %3178 = vmatpush1.msra.mxu0 %v3177
    %3179 = vmatprep.subr.mxu0 0.0
    %v3180 = vand.u32 %v2886, 4294901760
    %v3181 = vsub.f32 %v2886, %v3180
    %3182 = vmatpush1.msra.mxu0 %v3181
    %3183 = vmatprep.subr.mxu0 0.0
    %v3184 = vand.u32 %v2887, 4294901760
    %v3185 = vsub.f32 %v2887, %v3184
    %3186 = vmatpush1.msra.mxu0 %v3185
    %3187 = vmatprep.subr.mxu0 0.0
    %v3188 = vand.u32 %v2888, 4294901760
    %v3189 = vsub.f32 %v2888, %v3188
    %3190 = vmatpush1.msra.mxu0 %v3189
    %3191 = vmatprep.subr.mxu0 0.0
    %v3192 = vand.u32 %v2889, 4294901760
    %v3193 = vsub.f32 %v2889, %v3192
    %3194 = vmatpush1.msra.mxu0 %v3193
    %3195 = vmatprep.subr.mxu0 0.0
    %v3196 = vand.u32 %v2890, 4294901760
    %v3197 = vsub.f32 %v2890, %v3196
    %3198 = vmatpush1.msra.mxu0 %v3197
    %3199 = vmatprep.subr.mxu0 0.0
    %3200 = vmatpush1.msra.mxu0 0.0
    %3201 = vmatprep.subr.mxu0 0.0
    %3202 = vmatpush1.msra.mxu0 0.0
    %3203 = vmatprep.subr.mxu0 0.0
    %3204 = vmatpush1.msra.mxu0 0.0
    %3205 = vmatprep.subr.mxu0 0.0
    %3206 = vmatpush1.msra.mxu0 0.0
    %3207 = vmatprep.subr.mxu0 0.0
    %3208 = vmatpush1.msra.mxu0 0.0
    %3209 = vmatprep.subr.mxu0 0.0
    %3210 = vmatpush1.msra.mxu0 0.0
    %3211 = vmatprep.subr.mxu0 0.0
    %3212 = vmatpush1.msra.mxu0 0.0
    %3213 = vmatprep.subr.mxu0 0.0
    %3214 = vmatpush1.msra.mxu0 0.0
    %3215 = vmatprep.subr.mxu0 0.0
    %3216 = vmatpush1.msra.mxu0 0.0
    %3217 = vmatprep.subr.mxu0 0.0
    %3218 = vmatpush1.msra.mxu0 0.0
    %3219 = vmatprep.subr.mxu0 0.0
    %3220 = vmatpush1.msra.mxu0 0.0
    %3221 = vmatprep.subr.mxu0 0.0
    %3222 = vmatpush1.msra.mxu0 0.0
    %3223 = vmatprep.subr.mxu0 0.0
    %3224 = vmatpush1.msra.mxu0 0.0
    %3225 = vmatprep.subr.mxu0 0.0
    %3226 = vmatpush1.msra.mxu0 0.0
    %3227 = vmatprep.subr.mxu0 0.0
    %3228 = vmatpush1.msra.mxu0 0.0
    %3229 = vmatprep.subr.mxu0 0.0
    %3230 = vmatpush1.msra.mxu0 0.0
    %3231 = vmatprep.mubr.f32.mxu0 0.0
    %v3232 = vand.u32 %v2892, 4294901760
    %v3233 = vsub.f32 %v2892, %v3232
    %3234 = vmatmul.mubr.f32.gmra.mrb[0].mxu0 %v3233
    %v3235 = vpop.f32.mrb[0].mxu0
    %v3236 = vadd.f32 %v3132, %v3235
    %v3237 = vpop.f32.mrb[0].mxu0
    %3238 = vdwg.mxu0
    %3239 = vmatprep.subr.mxu0 0.0
    %v3240 = vand.u32 %v2875, 4294901760
    %3241 = vmatpush1.msra.mxu0 %v3240
    %3242 = vmatprep.subr.mxu0 0.0
    %v3243 = vand.u32 %v2876, 4294901760
    %3244 = vmatpush1.msra.mxu0 %v3243
    %3245 = vmatprep.subr.mxu0 0.0
    %v3246 = vand.u32 %v2877, 4294901760
    %3247 = vmatpush1.msra.mxu0 %v3246
    %3248 = vmatprep.subr.mxu0 0.0
    %v3249 = vand.u32 %v2878, 4294901760
    %3250 = vmatpush1.msra.mxu0 %v3249
    %3251 = vmatprep.subr.mxu0 0.0
    %v3252 = vand.u32 %v2879, 4294901760
    %3253 = vmatpush1.msra.mxu0 %v3252
    %3254 = vmatprep.subr.mxu0 0.0
    %v3255 = vand.u32 %v2880, 4294901760
    %3256 = vmatpush1.msra.mxu0 %v3255
    %3257 = vmatprep.subr.mxu0 0.0
    %v3258 = vand.u32 %v2881, 4294901760
    %3259 = vmatpush1.msra.mxu0 %v3258
    %3260 = vmatprep.subr.mxu0 0.0
    %v3261 = vand.u32 %v2882, 4294901760
    %3262 = vmatpush1.msra.mxu0 %v3261
    %3263 = vmatprep.subr.mxu0 0.0
    %v3264 = vand.u32 %v2883, 4294901760
    %3265 = vmatpush1.msra.mxu0 %v3264
    %3266 = vmatprep.subr.mxu0 0.0
    %v3267 = vand.u32 %v2884, 4294901760
    %3268 = vmatpush1.msra.mxu0 %v3267
    %3269 = vmatprep.subr.mxu0 0.0
    %v3270 = vand.u32 %v2885, 4294901760
    %3271 = vmatpush1.msra.mxu0 %v3270
    %3272 = vmatprep.subr.mxu0 0.0
    %v3273 = vand.u32 %v2886, 4294901760
    %3274 = vmatpush1.msra.mxu0 %v3273
    %3275 = vmatprep.subr.mxu0 0.0
    %v3276 = vand.u32 %v2887, 4294901760
    %3277 = vmatpush1.msra.mxu0 %v3276
    %3278 = vmatprep.subr.mxu0 0.0
    %v3279 = vand.u32 %v2888, 4294901760
    %3280 = vmatpush1.msra.mxu0 %v3279
    %3281 = vmatprep.subr.mxu0 0.0
    %v3282 = vand.u32 %v2889, 4294901760
    %3283 = vmatpush1.msra.mxu0 %v3282
    %3284 = vmatprep.subr.mxu0 0.0
    %v3285 = vand.u32 %v2890, 4294901760
    %3286 = vmatpush1.msra.mxu0 %v3285
    %3287 = vmatprep.subr.mxu0 0.0
    %3288 = vmatpush1.msra.mxu0 0.0
    %3289 = vmatprep.subr.mxu0 0.0
    %3290 = vmatpush1.msra.mxu0 0.0
    %3291 = vmatprep.subr.mxu0 0.0
    %3292 = vmatpush1.msra.mxu0 0.0
    %3293 = vmatprep.subr.mxu0 0.0
    %3294 = vmatpush1.msra.mxu0 0.0
    %3295 = vmatprep.subr.mxu0 0.0
    %3296 = vmatpush1.msra.mxu0 0.0
    %3297 = vmatprep.subr.mxu0 0.0
    %3298 = vmatpush1.msra.mxu0 0.0
    %3299 = vmatprep.subr.mxu0 0.0
    %3300 = vmatpush1.msra.mxu0 0.0
    %3301 = vmatprep.subr.mxu0 0.0
    %3302 = vmatpush1.msra.mxu0 0.0
    %3303 = vmatprep.subr.mxu0 0.0
    %3304 = vmatpush1.msra.mxu0 0.0
    %3305 = vmatprep.subr.mxu0 0.0
    %3306 = vmatpush1.msra.mxu0 0.0
    %3307 = vmatprep.subr.mxu0 0.0
    %3308 = vmatpush1.msra.mxu0 0.0
    %3309 = vmatprep.subr.mxu0 0.0
    %3310 = vmatpush1.msra.mxu0 0.0
    %3311 = vmatprep.subr.mxu0 0.0
    %3312 = vmatpush1.msra.mxu0 0.0
    %3313 = vmatprep.subr.mxu0 0.0
    %3314 = vmatpush1.msra.mxu0 0.0
    %3315 = vmatprep.subr.mxu0 0.0
    %3316 = vmatpush1.msra.mxu0 0.0
    %3317 = vmatprep.subr.mxu0 0.0
    %3318 = vmatpush1.msra.mxu0 0.0
    %3319 = vmatprep.mubr.f32.mxu0 0.0
    %v3320 = vand.u32 %v2892, 4294901760
    %v3321 = vsub.f32 %v2892, %v3320
    %v3322 = vand.u32 %v3321, 4294901760
    %3323 = vmatmul.mubr.f32.gmra.mrb[0].mxu0 %v3322
    %v3324 = vpop.f32.mrb[0].mxu0
    %v3325 = vadd.f32 %v3236, %v3324
    %v3326 = vpop.f32.mrb[0].mxu0
    %3327 = vdwg.mxu0
    %3328 = vmatprep.subr.mxu0 0.0
    %v3329 = vand.u32 %v2875, 4294901760
    %v3330 = vsub.f32 %v2875, %v3329
    %v3331 = vand.u32 %v3330, 4294901760
    %3332 = vmatpush1.msra.mxu0 %v3331
    %3333 = vmatprep.subr.mxu0 0.0
    %v3334 = vand.u32 %v2876, 4294901760
    %v3335 = vsub.f32 %v2876, %v3334
    %v3336 = vand.u32 %v3335, 4294901760
    %3337 = vmatpush1.msra.mxu0 %v3336
    %3338 = vmatprep.subr.mxu0 0.0
    %v3339 = vand.u32 %v2877, 4294901760
    %v3340 = vsub.f32 %v2877, %v3339
    %v3341 = vand.u32 %v3340, 4294901760
    %3342 = vmatpush1.msra.mxu0 %v3341
    %3343 = vmatprep.subr.mxu0 0.0
    %v3344 = vand.u32 %v2878, 4294901760
    %v3345 = vsub.f32 %v2878, %v3344
    %v3346 = vand.u32 %v3345, 4294901760
    %3347 = vmatpush1.msra.mxu0 %v3346
    %3348 = vmatprep.subr.mxu0 0.0
    %v3349 = vand.u32 %v2879, 4294901760
    %v3350 = vsub.f32 %v2879, %v3349
    %v3351 = vand.u32 %v3350, 4294901760
    %3352 = vmatpush1.msra.mxu0 %v3351
    %3353 = vmatprep.subr.mxu0 0.0
    %v3354 = vand.u32 %v2880, 4294901760
    %v3355 = vsub.f32 %v2880, %v3354
    %v3356 = vand.u32 %v3355, 4294901760
    %3357 = vmatpush1.msra.mxu0 %v3356
    %3358 = vmatprep.subr.mxu0 0.0
    %v3359 = vand.u32 %v2881, 4294901760
    %v3360 = vsub.f32 %v2881, %v3359
    %v3361 = vand.u32 %v3360, 4294901760
    %3362 = vmatpush1.msra.mxu0 %v3361
    %3363 = vmatprep.subr.mxu0 0.0
    %v3364 = vand.u32 %v2882, 4294901760
    %v3365 = vsub.f32 %v2882, %v3364
    %v3366 = vand.u32 %v3365, 4294901760
    %3367 = vmatpush1.msra.mxu0 %v3366
    %3368 = vmatprep.subr.mxu0 0.0
    %v3369 = vand.u32 %v2883, 4294901760
    %v3370 = vsub.f32 %v2883, %v3369
    %v3371 = vand.u32 %v3370, 4294901760
    %3372 = vmatpush1.msra.mxu0 %v3371
    %3373 = vmatprep.subr.mxu0 0.0
    %v3374 = vand.u32 %v2884, 4294901760
    %v3375 = vsub.f32 %v2884, %v3374
    %v3376 = vand.u32 %v3375, 4294901760
    %3377 = vmatpush1.msra.mxu0 %v3376
    %3378 = vmatprep.subr.mxu0 0.0
    %v3379 = vand.u32 %v2885, 4294901760
    %v3380 = vsub.f32 %v2885, %v3379
    %v3381 = vand.u32 %v3380, 4294901760
    %3382 = vmatpush1.msra.mxu0 %v3381
    %3383 = vmatprep.subr.mxu0 0.0
    %v3384 = vand.u32 %v2886, 4294901760
    %v3385 = vsub.f32 %v2886, %v3384
    %v3386 = vand.u32 %v3385, 4294901760
    %3387 = vmatpush1.msra.mxu0 %v3386
    %3388 = vmatprep.subr.mxu0 0.0
    %v3389 = vand.u32 %v2887, 4294901760
    %v3390 = vsub.f32 %v2887, %v3389
    %v3391 = vand.u32 %v3390, 4294901760
    %3392 = vmatpush1.msra.mxu0 %v3391
    %3393 = vmatprep.subr.mxu0 0.0
    %v3394 = vand.u32 %v2888, 4294901760
    %v3395 = vsub.f32 %v2888, %v3394
    %v3396 = vand.u32 %v3395, 4294901760
    %3397 = vmatpush1.msra.mxu0 %v3396
    %3398 = vmatprep.subr.mxu0 0.0
    %v3399 = vand.u32 %v2889, 4294901760
    %v3400 = vsub.f32 %v2889, %v3399
    %v3401 = vand.u32 %v3400, 4294901760
    %3402 = vmatpush1.msra.mxu0 %v3401
    %3403 = vmatprep.subr.mxu0 0.0
    %v3404 = vand.u32 %v2890, 4294901760
    %v3405 = vsub.f32 %v2890, %v3404
    %v3406 = vand.u32 %v3405, 4294901760
    %3407 = vmatpush1.msra.mxu0 %v3406
    %3408 = vmatprep.subr.mxu0 0.0
    %3409 = vmatpush1.msra.mxu0 0.0
    %3410 = vmatprep.subr.mxu0 0.0
    %3411 = vmatpush1.msra.mxu0 0.0
    %3412 = vmatprep.subr.mxu0 0.0
    %3413 = vmatpush1.msra.mxu0 0.0
    %3414 = vmatprep.subr.mxu0 0.0
    %3415 = vmatpush1.msra.mxu0 0.0
    %3416 = vmatprep.subr.mxu0 0.0
    %3417 = vmatpush1.msra.mxu0 0.0
    %3418 = vmatprep.subr.mxu0 0.0
    %3419 = vmatpush1.msra.mxu0 0.0
    %3420 = vmatprep.subr.mxu0 0.0
    %3421 = vmatpush1.msra.mxu0 0.0
    %3422 = vmatprep.subr.mxu0 0.0
    %3423 = vmatpush1.msra.mxu0 0.0
    %3424 = vmatprep.subr.mxu0 0.0
    %3425 = vmatpush1.msra.mxu0 0.0
    %3426 = vmatprep.subr.mxu0 0.0
    %3427 = vmatpush1.msra.mxu0 0.0
    %3428 = vmatprep.subr.mxu0 0.0
    %3429 = vmatpush1.msra.mxu0 0.0
    %3430 = vmatprep.subr.mxu0 0.0
    %3431 = vmatpush1.msra.mxu0 0.0
    %3432 = vmatprep.subr.mxu0 0.0
    %3433 = vmatpush1.msra.mxu0 0.0
    %3434 = vmatprep.subr.mxu0 0.0
    %3435 = vmatpush1.msra.mxu0 0.0
    %3436 = vmatprep.subr.mxu0 0.0
    %3437 = vmatpush1.msra.mxu0 0.0
    %3438 = vmatprep.subr.mxu0 0.0
    %3439 = vmatpush1.msra.mxu0 0.0
    %3440 = vmatprep.mubr.f32.mxu0 0.0
    %v3441 = vand.u32 %v2892, 4294901760
    %3442 = vmatmul.mubr.f32.gmra.mrb[0].mxu0 %v3441
    %v3443 = vpop.f32.mrb[0].mxu0
    %v3444 = vadd.f32 %v3325, %v3443
    %v3445 = vpop.f32.mrb[0].mxu0
    %3446 = vdwg.mxu0
    %3447 = vmatprep.subr.mxu0 0.0
    %v3448 = vand.u32 %v2875, 4294901760
    %3449 = vmatpush1.msra.mxu0 %v3448
    %3450 = vmatprep.subr.mxu0 0.0
    %v3451 = vand.u32 %v2876, 4294901760
    %3452 = vmatpush1.msra.mxu0 %v3451
    %3453 = vmatprep.subr.mxu0 0.0
    %v3454 = vand.u32 %v2877, 4294901760
    %3455 = vmatpush1.msra.mxu0 %v3454
    %3456 = vmatprep.subr.mxu0 0.0
    %v3457 = vand.u32 %v2878, 4294901760
    %3458 = vmatpush1.msra.mxu0 %v3457
    %3459 = vmatprep.subr.mxu0 0.0
    %v3460 = vand.u32 %v2879, 4294901760
    %3461 = vmatpush1.msra.mxu0 %v3460
    %3462 = vmatprep.subr.mxu0 0.0
    %v3463 = vand.u32 %v2880, 4294901760
    %3464 = vmatpush1.msra.mxu0 %v3463
    %3465 = vmatprep.subr.mxu0 0.0
    %v3466 = vand.u32 %v2881, 4294901760
    %3467 = vmatpush1.msra.mxu0 %v3466
    %3468 = vmatprep.subr.mxu0 0.0
    %v3469 = vand.u32 %v2882, 4294901760
    %3470 = vmatpush1.msra.mxu0 %v3469
    %3471 = vmatprep.subr.mxu0 0.0
    %v3472 = vand.u32 %v2883, 4294901760
    %3473 = vmatpush1.msra.mxu0 %v3472
    %3474 = vmatprep.subr.mxu0 0.0
    %v3475 = vand.u32 %v2884, 4294901760
    %3476 = vmatpush1.msra.mxu0 %v3475
    %3477 = vmatprep.subr.mxu0 0.0
    %v3478 = vand.u32 %v2885, 4294901760
    %3479 = vmatpush1.msra.mxu0 %v3478
    %3480 = vmatprep.subr.mxu0 0.0
    %v3481 = vand.u32 %v2886, 4294901760
    %3482 = vmatpush1.msra.mxu0 %v3481
    %3483 = vmatprep.subr.mxu0 0.0
    %v3484 = vand.u32 %v2887, 4294901760
    %3485 = vmatpush1.msra.mxu0 %v3484
    %3486 = vmatprep.subr.mxu0 0.0
    %v3487 = vand.u32 %v2888, 4294901760
    %3488 = vmatpush1.msra.mxu0 %v3487
    %3489 = vmatprep.subr.mxu0 0.0
    %v3490 = vand.u32 %v2889, 4294901760
    %3491 = vmatpush1.msra.mxu0 %v3490
    %3492 = vmatprep.subr.mxu0 0.0
    %v3493 = vand.u32 %v2890, 4294901760
    %3494 = vmatpush1.msra.mxu0 %v3493
    %3495 = vmatprep.subr.mxu0 0.0
    %3496 = vmatpush1.msra.mxu0 0.0
    %3497 = vmatprep.subr.mxu0 0.0
    %3498 = vmatpush1.msra.mxu0 0.0
    %3499 = vmatprep.subr.mxu0 0.0
    %3500 = vmatpush1.msra.mxu0 0.0
    %3501 = vmatprep.subr.mxu0 0.0
    %3502 = vmatpush1.msra.mxu0 0.0
    %3503 = vmatprep.subr.mxu0 0.0
    %3504 = vmatpush1.msra.mxu0 0.0
    %3505 = vmatprep.subr.mxu0 0.0
    %3506 = vmatpush1.msra.mxu0 0.0
    %3507 = vmatprep.subr.mxu0 0.0
    %3508 = vmatpush1.msra.mxu0 0.0
    %3509 = vmatprep.subr.mxu0 0.0
    %3510 = vmatpush1.msra.mxu0 0.0
    %3511 = vmatprep.subr.mxu0 0.0
    %3512 = vmatpush1.msra.mxu0 0.0
    %3513 = vmatprep.subr.mxu0 0.0
    %3514 = vmatpush1.msra.mxu0 0.0
    %3515 = vmatprep.subr.mxu0 0.0
    %3516 = vmatpush1.msra.mxu0 0.0
    %3517 = vmatprep.subr.mxu0 0.0
    %3518 = vmatpush1.msra.mxu0 0.0
    %3519 = vmatprep.subr.mxu0 0.0
    %3520 = vmatpush1.msra.mxu0 0.0
    %3521 = vmatprep.subr.mxu0 0.0
    %3522 = vmatpush1.msra.mxu0 0.0
    %3523 = vmatprep.subr.mxu0 0.0
    %3524 = vmatpush1.msra.mxu0 0.0
    %3525 = vmatprep.subr.mxu0 0.0
    %3526 = vmatpush1.msra.mxu0 0.0
    %3527 = vmatprep.mubr.f32.mxu0 0.0
    %v3528 = vand.u32 %v2892, 4294901760
    %3529 = vmatmul.mubr.f32.gmra.mrb[0].mxu0 %v3528
    %v3530 = vpop.f32.mrb[0].mxu0
    %v3531 = vadd.f32 %v3444, %v3530
    %v3532 = vpop.f32.mrb[0].mxu0
    %3533 = vdwg.mxu0
    %v3534 = vadd.f32 %v2837, %v3531
    %v3535 = vld [vmem:[%s0 + $0x5] sm:$0x1]
    %v3536 = vlaneseq
    %v3537 = vshrl.u32 %v3536, 7
    %v3538 = vsub.s32 0, %v3537
    %v3539 = vrot.slane %v3535, %v3538
    %vm3540 = vcmp.eq.s32.totalorder %v36, %v3539
    %vm3541 = vcmp.eq.s32.totalorder %v37, %v3539
    %vm3542 = vcmp.eq.s32.totalorder %v38, %v3539
    %vm3543 = vcmp.eq.s32.totalorder %v39, %v3539
    %vm3544 = vcmp.eq.s32.totalorder %v40, %v3539
    %vm3545 = vcmp.eq.s32.totalorder %v41, %v3539
    %vm3546 = vcmp.eq.s32.totalorder %v42, %v3539
    %vm3547 = vcmp.eq.s32.totalorder %v43, %v3539
    %vm3548 = vcmp.eq.s32.totalorder %v44, %v3539
    %vm3549 = vcmp.eq.s32.totalorder %v45, %v3539
    %vm3550 = vcmp.eq.s32.totalorder %v46, %v3539
    %vm3551 = vcmp.eq.s32.totalorder %v47, %v3539
    %vm3552 = vcmp.eq.s32.totalorder %v48, %v3539
    %vm3553 = vcmp.eq.s32.totalorder %v49, %v3539
    %vm3554 = vcmp.eq.s32.totalorder %v50, %v3539
    %vm3555 = vcmp.eq.s32.totalorder %v51, %v3539
    %v3556 = vsel %vm3540, 1, 0
    %v3557 = vsel %vm3541, 1, 0
    %v3558 = vsel %vm3542, 1, 0
    %v3559 = vsel %vm3543, 1, 0
    %v3560 = vsel %vm3544, 1, 0
    %v3561 = vsel %vm3545, 1, 0
    %v3562 = vsel %vm3546, 1, 0
    %v3563 = vsel %vm3547, 1, 0
    %v3564 = vsel %vm3548, 1, 0
    %v3565 = vsel %vm3549, 1, 0
    %v3566 = vsel %vm3550, 1, 0
    %v3567 = vsel %vm3551, 1, 0
    %v3568 = vsel %vm3552, 1, 0
    %v3569 = vsel %vm3553, 1, 0
    %v3570 = vsel %vm3554, 1, 0
    %v3571 = vsel %vm3555, 1, 0
    %v3572 = vcvt.s32.f32 %v3556
    %v3573 = vcvt.s32.f32 %v3557
    %v3574 = vcvt.s32.f32 %v3558
    %v3575 = vcvt.s32.f32 %v3559
    %v3576 = vcvt.s32.f32 %v3560
    %v3577 = vcvt.s32.f32 %v3561
    %v3578 = vcvt.s32.f32 %v3562
    %v3579 = vcvt.s32.f32 %v3563
    %v3580 = vcvt.s32.f32 %v3564
    %v3581 = vcvt.s32.f32 %v3565
    %v3582 = vcvt.s32.f32 %v3566
    %v3583 = vcvt.s32.f32 %v3567
    %v3584 = vcvt.s32.f32 %v3568
    %v3585 = vcvt.s32.f32 %v3569
    %v3586 = vcvt.s32.f32 %v3570
    %v3587 = vcvt.s32.f32 %v3571
    %s3588 = scalar_lea.vmem [#allocation2], 40
    %v3589 = vld [vmem:[%s3588] sm:$0xff]
    %3590 = vmatprep.subr.mxu0 0.0
    %v3591 = vand.u32 %v3572, 4294901760
    %3592 = vmatpush1.msra.mxu0 %v3591
    %3593 = vmatprep.subr.mxu0 0.0
    %v3594 = vand.u32 %v3573, 4294901760
    %3595 = vmatpush1.msra.mxu0 %v3594
    %3596 = vmatprep.subr.mxu0 0.0
    %v3597 = vand.u32 %v3574, 4294901760
    %3598 = vmatpush1.msra.mxu0 %v3597
    %3599 = vmatprep.subr.mxu0 0.0
    %v3600 = vand.u32 %v3575, 4294901760
    %3601 = vmatpush1.msra.mxu0 %v3600
    %3602 = vmatprep.subr.mxu0 0.0
    %v3603 = vand.u32 %v3576, 4294901760
    %3604 = vmatpush1.msra.mxu0 %v3603
    %3605 = vmatprep.subr.mxu0 0.0
    %v3606 = vand.u32 %v3577, 4294901760
    %3607 = vmatpush1.msra.mxu0 %v3606
    %3608 = vmatprep.subr.mxu0 0.0
    %v3609 = vand.u32 %v3578, 4294901760
    %3610 = vmatpush1.msra.mxu0 %v3609
    %3611 = vmatprep.subr.mxu0 0.0
    %v3612 = vand.u32 %v3579, 4294901760
    %3613 = vmatpush1.msra.mxu0 %v3612
    %3614 = vmatprep.subr.mxu0 0.0
    %v3615 = vand.u32 %v3580, 4294901760
    %3616 = vmatpush1.msra.mxu0 %v3615
    %3617 = vmatprep.subr.mxu0 0.0
    %v3618 = vand.u32 %v3581, 4294901760
    %3619 = vmatpush1.msra.mxu0 %v3618
    %3620 = vmatprep.subr.mxu0 0.0
    %v3621 = vand.u32 %v3582, 4294901760
    %3622 = vmatpush1.msra.mxu0 %v3621
    %3623 = vmatprep.subr.mxu0 0.0
    %v3624 = vand.u32 %v3583, 4294901760
    %3625 = vmatpush1.msra.mxu0 %v3624
    %3626 = vmatprep.subr.mxu0 0.0
    %v3627 = vand.u32 %v3584, 4294901760
    %3628 = vmatpush1.msra.mxu0 %v3627
    %3629 = vmatprep.subr.mxu0 0.0
    %v3630 = vand.u32 %v3585, 4294901760
    %3631 = vmatpush1.msra.mxu0 %v3630
    %3632 = vmatprep.subr.mxu0 0.0
    %v3633 = vand.u32 %v3586, 4294901760
    %3634 = vmatpush1.msra.mxu0 %v3633
    %3635 = vmatprep.subr.mxu0 0.0
    %v3636 = vand.u32 %v3587, 4294901760
    %3637 = vmatpush1.msra.mxu0 %v3636
    %3638 = vmatprep.subr.mxu0 0.0
    %3639 = vmatpush1.msra.mxu0 0.0
    %3640 = vmatprep.subr.mxu0 0.0
    %3641 = vmatpush1.msra.mxu0 0.0
    %3642 = vmatprep.subr.mxu0 0.0
    %3643 = vmatpush1.msra.mxu0 0.0
    %3644 = vmatprep.subr.mxu0 0.0
    %3645 = vmatpush1.msra.mxu0 0.0
    %3646 = vmatprep.subr.mxu0 0.0
    %3647 = vmatpush1.msra.mxu0 0.0
    %3648 = vmatprep.subr.mxu0 0.0
    %3649 = vmatpush1.msra.mxu0 0.0
    %3650 = vmatprep.subr.mxu0 0.0
    %3651 = vmatpush1.msra.mxu0 0.0
    %3652 = vmatprep.subr.mxu0 0.0
    %3653 = vmatpush1.msra.mxu0 0.0
    %3654 = vmatprep.subr.mxu0 0.0
    %3655 = vmatpush1.msra.mxu0 0.0
    %3656 = vmatprep.subr.mxu0 0.0
    %3657 = vmatpush1.msra.mxu0 0.0
    %3658 = vmatprep.subr.mxu0 0.0
    %3659 = vmatpush1.msra.mxu0 0.0
    %3660 = vmatprep.subr.mxu0 0.0
    %3661 = vmatpush1.msra.mxu0 0.0
    %3662 = vmatprep.subr.mxu0 0.0
    %3663 = vmatpush1.msra.mxu0 0.0
    %3664 = vmatprep.subr.mxu0 0.0
    %3665 = vmatpush1.msra.mxu0 0.0
    %3666 = vmatprep.subr.mxu0 0.0
    %3667 = vmatpush1.msra.mxu0 0.0
    %3668 = vmatprep.subr.mxu0 0.0
    %3669 = vmatpush1.msra.mxu0 0.0
    %3670 = vmatprep.mubr.f32.mxu0 0.0
    %v3671 = vand.u32 %v3589, 4294901760
    %v3672 = vsub.f32 %v3589, %v3671
    %v3673 = vand.u32 %v3672, 4294901760
    %v3674 = vsub.f32 %v3672, %v3673
    %v3675 = vand.u32 %v3674, 4294901760
    %3676 = vmatmul.mubr.f32.gmra.mrb[0].mxu0 %v3675
    %v3677 = vpop.f32.mrb[0].mxu0
    %v3678 = vadd.f32 0.0, %v3677
    %v3679 = vpop.f32.mrb[0].mxu0
    %3680 = vdwg.mxu0
    %3681 = vmatprep.subr.mxu0 0.0
    %v3682 = vand.u32 %v3572, 4294901760
    %v3683 = vsub.f32 %v3572, %v3682
    %v3684 = vand.u32 %v3683, 4294901760
    %v3685 = vsub.f32 %v3683, %v3684
    %v3686 = vand.u32 %v3685, 4294901760
    %3687 = vmatpush1.msra.mxu0 %v3686
    %3688 = vmatprep.subr.mxu0 0.0
    %v3689 = vand.u32 %v3573, 4294901760
    %v3690 = vsub.f32 %v3573, %v3689
    %v3691 = vand.u32 %v3690, 4294901760
    %v3692 = vsub.f32 %v3690, %v3691
    %v3693 = vand.u32 %v3692, 4294901760
    %3694 = vmatpush1.msra.mxu0 %v3693
    %3695 = vmatprep.subr.mxu0 0.0
    %v3696 = vand.u32 %v3574, 4294901760
    %v3697 = vsub.f32 %v3574, %v3696
    %v3698 = vand.u32 %v3697, 4294901760
    %v3699 = vsub.f32 %v3697, %v3698
    %v3700 = vand.u32 %v3699, 4294901760
    %3701 = vmatpush1.msra.mxu0 %v3700
    %3702 = vmatprep.subr.mxu0 0.0
    %v3703 = vand.u32 %v3575, 4294901760
    %v3704 = vsub.f32 %v3575, %v3703
    %v3705 = vand.u32 %v3704, 4294901760
    %v3706 = vsub.f32 %v3704, %v3705
    %v3707 = vand.u32 %v3706, 4294901760
    %3708 = vmatpush1.msra.mxu0 %v3707
    %3709 = vmatprep.subr.mxu0 0.0
    %v3710 = vand.u32 %v3576, 4294901760
    %v3711 = vsub.f32 %v3576, %v3710
    %v3712 = vand.u32 %v3711, 4294901760
    %v3713 = vsub.f32 %v3711, %v3712
    %v3714 = vand.u32 %v3713, 4294901760
    %3715 = vmatpush1.msra.mxu0 %v3714
    %3716 = vmatprep.subr.mxu0 0.0
    %v3717 = vand.u32 %v3577, 4294901760
    %v3718 = vsub.f32 %v3577, %v3717
    %v3719 = vand.u32 %v3718, 4294901760
    %v3720 = vsub.f32 %v3718, %v3719
    %v3721 = vand.u32 %v3720, 4294901760
    %3722 = vmatpush1.msra.mxu0 %v3721
    %3723 = vmatprep.subr.mxu0 0.0
    %v3724 = vand.u32 %v3578, 4294901760
    %v3725 = vsub.f32 %v3578, %v3724
    %v3726 = vand.u32 %v3725, 4294901760
    %v3727 = vsub.f32 %v3725, %v3726
    %v3728 = vand.u32 %v3727, 4294901760
    %3729 = vmatpush1.msra.mxu0 %v3728
    %3730 = vmatprep.subr.mxu0 0.0
    %v3731 = vand.u32 %v3579, 4294901760
    %v3732 = vsub.f32 %v3579, %v3731
    %v3733 = vand.u32 %v3732, 4294901760
    %v3734 = vsub.f32 %v3732, %v3733
    %v3735 = vand.u32 %v3734, 4294901760
    %3736 = vmatpush1.msra.mxu0 %v3735
    %3737 = vmatprep.subr.mxu0 0.0
    %v3738 = vand.u32 %v3580, 4294901760
    %v3739 = vsub.f32 %v3580, %v3738
    %v3740 = vand.u32 %v3739, 4294901760
    %v3741 = vsub.f32 %v3739, %v3740
    %v3742 = vand.u32 %v3741, 4294901760
    %3743 = vmatpush1.msra.mxu0 %v3742
    %3744 = vmatprep.subr.mxu0 0.0
    %v3745 = vand.u32 %v3581, 4294901760
    %v3746 = vsub.f32 %v3581, %v3745
    %v3747 = vand.u32 %v3746, 4294901760
    %v3748 = vsub.f32 %v3746, %v3747
    %v3749 = vand.u32 %v3748, 4294901760
    %3750 = vmatpush1.msra.mxu0 %v3749
    %3751 = vmatprep.subr.mxu0 0.0
    %v3752 = vand.u32 %v3582, 4294901760
    %v3753 = vsub.f32 %v3582, %v3752
    %v3754 = vand.u32 %v3753, 4294901760
    %v3755 = vsub.f32 %v3753, %v3754
    %v3756 = vand.u32 %v3755, 4294901760
    %3757 = vmatpush1.msra.mxu0 %v3756
    %3758 = vmatprep.subr.mxu0 0.0
    %v3759 = vand.u32 %v3583, 4294901760
    %v3760 = vsub.f32 %v3583, %v3759
    %v3761 = vand.u32 %v3760, 4294901760
    %v3762 = vsub.f32 %v3760, %v3761
    %v3763 = vand.u32 %v3762, 4294901760
    %3764 = vmatpush1.msra.mxu0 %v3763
    %3765 = vmatprep.subr.mxu0 0.0
    %v3766 = vand.u32 %v3584, 4294901760
    %v3767 = vsub.f32 %v3584, %v3766
    %v3768 = vand.u32 %v3767, 4294901760
    %v3769 = vsub.f32 %v3767, %v3768
    %v3770 = vand.u32 %v3769, 4294901760
    %3771 = vmatpush1.msra.mxu0 %v3770
    %3772 = vmatprep.subr.mxu0 0.0
    %v3773 = vand.u32 %v3585, 4294901760
    %v3774 = vsub.f32 %v3585, %v3773
    %v3775 = vand.u32 %v3774, 4294901760
    %v3776 = vsub.f32 %v3774, %v3775
    %v3777 = vand.u32 %v3776, 4294901760
    %3778 = vmatpush1.msra.mxu0 %v3777
    %3779 = vmatprep.subr.mxu0 0.0
    %v3780 = vand.u32 %v3586, 4294901760
    %v3781 = vsub.f32 %v3586, %v3780
    %v3782 = vand.u32 %v3781, 4294901760
    %v3783 = vsub.f32 %v3781, %v3782
    %v3784 = vand.u32 %v3783, 4294901760
    %3785 = vmatpush1.msra.mxu0 %v3784
    %3786 = vmatprep.subr.mxu0 0.0
    %v3787 = vand.u32 %v3587, 4294901760
    %v3788 = vsub.f32 %v3587, %v3787
    %v3789 = vand.u32 %v3788, 4294901760
    %v3790 = vsub.f32 %v3788, %v3789
    %v3791 = vand.u32 %v3790, 4294901760
    %3792 = vmatpush1.msra.mxu0 %v3791
    %3793 = vmatprep.subr.mxu0 0.0
    %3794 = vmatpush1.msra.mxu0 0.0
    %3795 = vmatprep.subr.mxu0 0.0
    %3796 = vmatpush1.msra.mxu0 0.0
    %3797 = vmatprep.subr.mxu0 0.0
    %3798 = vmatpush1.msra.mxu0 0.0
    %3799 = vmatprep.subr.mxu0 0.0
    %3800 = vmatpush1.msra.mxu0 0.0
    %3801 = vmatprep.subr.mxu0 0.0
    %3802 = vmatpush1.msra.mxu0 0.0
    %3803 = vmatprep.subr.mxu0 0.0
    %3804 = vmatpush1.msra.mxu0 0.0
    %3805 = vmatprep.subr.mxu0 0.0
    %3806 = vmatpush1.msra.mxu0 0.0
    %3807 = vmatprep.subr.mxu0 0.0
    %3808 = vmatpush1.msra.mxu0 0.0
    %3809 = vmatprep.subr.mxu0 0.0
    %3810 = vmatpush1.msra.mxu0 0.0
    %3811 = vmatprep.subr.mxu0 0.0
    %3812 = vmatpush1.msra.mxu0 0.0
    %3813 = vmatprep.subr.mxu0 0.0
    %3814 = vmatpush1.msra.mxu0 0.0
    %3815 = vmatprep.subr.mxu0 0.0
    %3816 = vmatpush1.msra.mxu0 0.0
    %3817 = vmatprep.subr.mxu0 0.0
    %3818 = vmatpush1.msra.mxu0 0.0
    %3819 = vmatprep.subr.mxu0 0.0
    %3820 = vmatpush1.msra.mxu0 0.0
    %3821 = vmatprep.subr.mxu0 0.0
    %3822 = vmatpush1.msra.mxu0 0.0
    %3823 = vmatprep.subr.mxu0 0.0
    %3824 = vmatpush1.msra.mxu0 0.0
    %3825 = vmatprep.mubr.f32.mxu0 0.0
    %v3826 = vand.u32 %v3589, 4294901760
    %3827 = vmatmul.mubr.f32.gmra.mrb[0].mxu0 %v3826
    %v3828 = vpop.f32.mrb[0].mxu0
    %v3829 = vadd.f32 %v3678, %v3828
    %v3830 = vpop.f32.mrb[0].mxu0
    %3831 = vdwg.mxu0
    %3832 = vmatprep.subr.mxu0 0.0
    %v3833 = vand.u32 %v3572, 4294901760
    %v3834 = vsub.f32 %v3572, %v3833
    %3835 = vmatpush1.msra.mxu0 %v3834
    %3836 = vmatprep.subr.mxu0 0.0
    %v3837 = vand.u32 %v3573, 4294901760
    %v3838 = vsub.f32 %v3573, %v3837
    %3839 = vmatpush1.msra.mxu0 %v3838
    %3840 = vmatprep.subr.mxu0 0.0
    %v3841 = vand.u32 %v3574, 4294901760
    %v3842 = vsub.f32 %v3574, %v3841
    %3843 = vmatpush1.msra.mxu0 %v3842
    %3844 = vmatprep.subr.mxu0 0.0
    %v3845 = vand.u32 %v3575, 4294901760
    %v3846 = vsub.f32 %v3575, %v3845
    %3847 = vmatpush1.msra.mxu0 %v3846
    %3848 = vmatprep.subr.mxu0 0.0
    %v3849 = vand.u32 %v3576, 4294901760
    %v3850 = vsub.f32 %v3576, %v3849
    %3851 = vmatpush1.msra.mxu0 %v3850
    %3852 = vmatprep.subr.mxu0 0.0
    %v3853 = vand.u32 %v3577, 4294901760
    %v3854 = vsub.f32 %v3577, %v3853
    %3855 = vmatpush1.msra.mxu0 %v3854
    %3856 = vmatprep.subr.mxu0 0.0
    %v3857 = vand.u32 %v3578, 4294901760
    %v3858 = vsub.f32 %v3578, %v3857
    %3859 = vmatpush1.msra.mxu0 %v3858
    %3860 = vmatprep.subr.mxu0 0.0
    %v3861 = vand.u32 %v3579, 4294901760
    %v3862 = vsub.f32 %v3579, %v3861
    %3863 = vmatpush1.msra.mxu0 %v3862
    %3864 = vmatprep.subr.mxu0 0.0
    %v3865 = vand.u32 %v3580, 4294901760
    %v3866 = vsub.f32 %v3580, %v3865
    %3867 = vmatpush1.msra.mxu0 %v3866
    %3868 = vmatprep.subr.mxu0 0.0
    %v3869 = vand.u32 %v3581, 4294901760
    %v3870 = vsub.f32 %v3581, %v3869
    %3871 = vmatpush1.msra.mxu0 %v3870
    %3872 = vmatprep.subr.mxu0 0.0
    %v3873 = vand.u32 %v3582, 4294901760
    %v3874 = vsub.f32 %v3582, %v3873
    %3875 = vmatpush1.msra.mxu0 %v3874
    %3876 = vmatprep.subr.mxu0 0.0
    %v3877 = vand.u32 %v3583, 4294901760
    %v3878 = vsub.f32 %v3583, %v3877
    %3879 = vmatpush1.msra.mxu0 %v3878
    %3880 = vmatprep.subr.mxu0 0.0
    %v3881 = vand.u32 %v3584, 4294901760
    %v3882 = vsub.f32 %v3584, %v3881
    %3883 = vmatpush1.msra.mxu0 %v3882
    %3884 = vmatprep.subr.mxu0 0.0
    %v3885 = vand.u32 %v3585, 4294901760
    %v3886 = vsub.f32 %v3585, %v3885
    %3887 = vmatpush1.msra.mxu0 %v3886
    %3888 = vmatprep.subr.mxu0 0.0
    %v3889 = vand.u32 %v3586, 4294901760
    %v3890 = vsub.f32 %v3586, %v3889
    %3891 = vmatpush1.msra.mxu0 %v3890
    %3892 = vmatprep.subr.mxu0 0.0
    %v3893 = vand.u32 %v3587, 4294901760
    %v3894 = vsub.f32 %v3587, %v3893
    %3895 = vmatpush1.msra.mxu0 %v3894
    %3896 = vmatprep.subr.mxu0 0.0
    %3897 = vmatpush1.msra.mxu0 0.0
    %3898 = vmatprep.subr.mxu0 0.0
    %3899 = vmatpush1.msra.mxu0 0.0
    %3900 = vmatprep.subr.mxu0 0.0
    %3901 = vmatpush1.msra.mxu0 0.0
    %3902 = vmatprep.subr.mxu0 0.0
    %3903 = vmatpush1.msra.mxu0 0.0
    %3904 = vmatprep.subr.mxu0 0.0
    %3905 = vmatpush1.msra.mxu0 0.0
    %3906 = vmatprep.subr.mxu0 0.0
    %3907 = vmatpush1.msra.mxu0 0.0
    %3908 = vmatprep.subr.mxu0 0.0
    %3909 = vmatpush1.msra.mxu0 0.0
    %3910 = vmatprep.subr.mxu0 0.0
    %3911 = vmatpush1.msra.mxu0 0.0
    %3912 = vmatprep.subr.mxu0 0.0
    %3913 = vmatpush1.msra.mxu0 0.0
    %3914 = vmatprep.subr.mxu0 0.0
    %3915 = vmatpush1.msra.mxu0 0.0
    %3916 = vmatprep.subr.mxu0 0.0
    %3917 = vmatpush1.msra.mxu0 0.0
    %3918 = vmatprep.subr.mxu0 0.0
    %3919 = vmatpush1.msra.mxu0 0.0
    %3920 = vmatprep.subr.mxu0 0.0
    %3921 = vmatpush1.msra.mxu0 0.0
    %3922 = vmatprep.subr.mxu0 0.0
    %3923 = vmatpush1.msra.mxu0 0.0
    %3924 = vmatprep.subr.mxu0 0.0
    %3925 = vmatpush1.msra.mxu0 0.0
    %3926 = vmatprep.subr.mxu0 0.0
    %3927 = vmatpush1.msra.mxu0 0.0
    %3928 = vmatprep.mubr.f32.mxu0 0.0
    %v3929 = vand.u32 %v3589, 4294901760
    %v3930 = vsub.f32 %v3589, %v3929
    %3931 = vmatmul.mubr.f32.gmra.mrb[0].mxu0 %v3930
    %v3932 = vpop.f32.mrb[0].mxu0
    %v3933 = vadd.f32 %v3829, %v3932
    %v3934 = vpop.f32.mrb[0].mxu0
    %3935 = vdwg.mxu0
    %3936 = vmatprep.subr.mxu0 0.0
    %v3937 = vand.u32 %v3572, 4294901760
    %3938 = vmatpush1.msra.mxu0 %v3937
    %3939 = vmatprep.subr.mxu0 0.0
    %v3940 = vand.u32 %v3573, 4294901760
    %3941 = vmatpush1.msra.mxu0 %v3940
    %3942 = vmatprep.subr.mxu0 0.0
    %v3943 = vand.u32 %v3574, 4294901760
    %3944 = vmatpush1.msra.mxu0 %v3943
    %3945 = vmatprep.subr.mxu0 0.0
    %v3946 = vand.u32 %v3575, 4294901760
    %3947 = vmatpush1.msra.mxu0 %v3946
    %3948 = vmatprep.subr.mxu0 0.0
    %v3949 = vand.u32 %v3576, 4294901760
    %3950 = vmatpush1.msra.mxu0 %v3949
    %3951 = vmatprep.subr.mxu0 0.0
    %v3952 = vand.u32 %v3577, 4294901760
    %3953 = vmatpush1.msra.mxu0 %v3952
    %3954 = vmatprep.subr.mxu0 0.0
    %v3955 = vand.u32 %v3578, 4294901760
    %3956 = vmatpush1.msra.mxu0 %v3955
    %3957 = vmatprep.subr.mxu0 0.0
    %v3958 = vand.u32 %v3579, 4294901760
    %3959 = vmatpush1.msra.mxu0 %v3958
    %3960 = vmatprep.subr.mxu0 0.0
    %v3961 = vand.u32 %v3580, 4294901760
    %3962 = vmatpush1.msra.mxu0 %v3961
    %3963 = vmatprep.subr.mxu0 0.0
    %v3964 = vand.u32 %v3581, 4294901760
    %3965 = vmatpush1.msra.mxu0 %v3964
    %3966 = vmatprep.subr.mxu0 0.0
    %v3967 = vand.u32 %v3582, 4294901760
    %3968 = vmatpush1.msra.mxu0 %v3967
    %3969 = vmatprep.subr.mxu0 0.0
    %v3970 = vand.u32 %v3583, 4294901760
    %3971 = vmatpush1.msra.mxu0 %v3970
    %3972 = vmatprep.subr.mxu0 0.0
    %v3973 = vand.u32 %v3584, 4294901760
    %3974 = vmatpush1.msra.mxu0 %v3973
    %3975 = vmatprep.subr.mxu0 0.0
    %v3976 = vand.u32 %v3585, 4294901760
    %3977 = vmatpush1.msra.mxu0 %v3976
    %3978 = vmatprep.subr.mxu0 0.0
    %v3979 = vand.u32 %v3586, 4294901760
    %3980 = vmatpush1.msra.mxu0 %v3979
    %3981 = vmatprep.subr.mxu0 0.0
    %v3982 = vand.u32 %v3587, 4294901760
    %3983 = vmatpush1.msra.mxu0 %v3982
    %3984 = vmatprep.subr.mxu0 0.0
    %3985 = vmatpush1.msra.mxu0 0.0
    %3986 = vmatprep.subr.mxu0 0.0
    %3987 = vmatpush1.msra.mxu0 0.0
    %3988 = vmatprep.subr.mxu0 0.0
    %3989 = vmatpush1.msra.mxu0 0.0
    %3990 = vmatprep.subr.mxu0 0.0
    %3991 = vmatpush1.msra.mxu0 0.0
    %3992 = vmatprep.subr.mxu0 0.0
    %3993 = vmatpush1.msra.mxu0 0.0
    %3994 = vmatprep.subr.mxu0 0.0
    %3995 = vmatpush1.msra.mxu0 0.0
    %3996 = vmatprep.subr.mxu0 0.0
    %3997 = vmatpush1.msra.mxu0 0.0
    %3998 = vmatprep.subr.mxu0 0.0
    %3999 = vmatpush1.msra.mxu0 0.0
    %4000 = vmatprep.subr.mxu0 0.0
    %4001 = vmatpush1.msra.mxu0 0.0
    %4002 = vmatprep.subr.mxu0 0.0
    %4003 = vmatpush1.msra.mxu0 0.0
    %4004 = vmatprep.subr.mxu0 0.0
    %4005 = vmatpush1.msra.mxu0 0.0
    %4006 = vmatprep.subr.mxu0 0.0
    %4007 = vmatpush1.msra.mxu0 0.0
    %4008 = vmatprep.subr.mxu0 0.0
    %4009 = vmatpush1.msra.mxu0 0.0
    %4010 = vmatprep.subr.mxu0 0.0
    %4011 = vmatpush1.msra.mxu0 0.0
    %4012 = vmatprep.subr.mxu0 0.0
    %4013 = vmatpush1.msra.mxu0 0.0
    %4014 = vmatprep.subr.mxu0 0.0
    %4015 = vmatpush1.msra.mxu0 0.0
    %4016 = vmatprep.mubr.f32.mxu0 0.0
    %v4017 = vand.u32 %v3589, 4294901760
    %v4018 = vsub.f32 %v3589, %v4017
    %v4019 = vand.u32 %v4018, 4294901760
    %4020 = vmatmul.mubr.f32.gmra.mrb[0].mxu0 %v4019
    %v4021 = vpop.f32.mrb[0].mxu0
    %v4022 = vadd.f32 %v3933, %v4021
    %v4023 = vpop.f32.mrb[0].mxu0
    %4024 = vdwg.mxu0
    %4025 = vmatprep.subr.mxu0 0.0
    %v4026 = vand.u32 %v3572, 4294901760
    %v4027 = vsub.f32 %v3572, %v4026
    %v4028 = vand.u32 %v4027, 4294901760
    %4029 = vmatpush1.msra.mxu0 %v4028
    %4030 = vmatprep.subr.mxu0 0.0
    %v4031 = vand.u32 %v3573, 4294901760
    %v4032 = vsub.f32 %v3573, %v4031
    %v4033 = vand.u32 %v4032, 4294901760
    %4034 = vmatpush1.msra.mxu0 %v4033
    %4035 = vmatprep.subr.mxu0 0.0
    %v4036 = vand.u32 %v3574, 4294901760
    %v4037 = vsub.f32 %v3574, %v4036
    %v4038 = vand.u32 %v4037, 4294901760
    %4039 = vmatpush1.msra.mxu0 %v4038
    %4040 = vmatprep.subr.mxu0 0.0
    %v4041 = vand.u32 %v3575, 4294901760
    %v4042 = vsub.f32 %v3575, %v4041
    %v4043 = vand.u32 %v4042, 4294901760
    %4044 = vmatpush1.msra.mxu0 %v4043
    %4045 = vmatprep.subr.mxu0 0.0
    %v4046 = vand.u32 %v3576, 4294901760
    %v4047 = vsub.f32 %v3576, %v4046
    %v4048 = vand.u32 %v4047, 4294901760
    %4049 = vmatpush1.msra.mxu0 %v4048
    %4050 = vmatprep.subr.mxu0 0.0
    %v4051 = vand.u32 %v3577, 4294901760
    %v4052 = vsub.f32 %v3577, %v4051
    %v4053 = vand.u32 %v4052, 4294901760
    %4054 = vmatpush1.msra.mxu0 %v4053
    %4055 = vmatprep.subr.mxu0 0.0
    %v4056 = vand.u32 %v3578, 4294901760
    %v4057 = vsub.f32 %v3578, %v4056
    %v4058 = vand.u32 %v4057, 4294901760
    %4059 = vmatpush1.msra.mxu0 %v4058
    %4060 = vmatprep.subr.mxu0 0.0
    %v4061 = vand.u32 %v3579, 4294901760
    %v4062 = vsub.f32 %v3579, %v4061
    %v4063 = vand.u32 %v4062, 4294901760
    %4064 = vmatpush1.msra.mxu0 %v4063
    %4065 = vmatprep.subr.mxu0 0.0
    %v4066 = vand.u32 %v3580, 4294901760
    %v4067 = vsub.f32 %v3580, %v4066
    %v4068 = vand.u32 %v4067, 4294901760
    %4069 = vmatpush1.msra.mxu0 %v4068
    %4070 = vmatprep.subr.mxu0 0.0
    %v4071 = vand.u32 %v3581, 4294901760
    %v4072 = vsub.f32 %v3581, %v4071
    %v4073 = vand.u32 %v4072, 4294901760
    %4074 = vmatpush1.msra.mxu0 %v4073
    %4075 = vmatprep.subr.mxu0 0.0
    %v4076 = vand.u32 %v3582, 4294901760
    %v4077 = vsub.f32 %v3582, %v4076
    %v4078 = vand.u32 %v4077, 4294901760
    %4079 = vmatpush1.msra.mxu0 %v4078
    %4080 = vmatprep.subr.mxu0 0.0
    %v4081 = vand.u32 %v3583, 4294901760
    %v4082 = vsub.f32 %v3583, %v4081
    %v4083 = vand.u32 %v4082, 4294901760
    %4084 = vmatpush1.msra.mxu0 %v4083
    %4085 = vmatprep.subr.mxu0 0.0
    %v4086 = vand.u32 %v3584, 4294901760
    %v4087 = vsub.f32 %v3584, %v4086
    %v4088 = vand.u32 %v4087, 4294901760
    %4089 = vmatpush1.msra.mxu0 %v4088
    %4090 = vmatprep.subr.mxu0 0.0
    %v4091 = vand.u32 %v3585, 4294901760
    %v4092 = vsub.f32 %v3585, %v4091
    %v4093 = vand.u32 %v4092, 4294901760
    %4094 = vmatpush1.msra.mxu0 %v4093
    %4095 = vmatprep.subr.mxu0 0.0
    %v4096 = vand.u32 %v3586, 4294901760
    %v4097 = vsub.f32 %v3586, %v4096
    %v4098 = vand.u32 %v4097, 4294901760
    %4099 = vmatpush1.msra.mxu0 %v4098
    %4100 = vmatprep.subr.mxu0 0.0
    %v4101 = vand.u32 %v3587, 4294901760
    %v4102 = vsub.f32 %v3587, %v4101
    %v4103 = vand.u32 %v4102, 4294901760
    %4104 = vmatpush1.msra.mxu0 %v4103
    %4105 = vmatprep.subr.mxu0 0.0
    %4106 = vmatpush1.msra.mxu0 0.0
    %4107 = vmatprep.subr.mxu0 0.0
    %4108 = vmatpush1.msra.mxu0 0.0
    %4109 = vmatprep.subr.mxu0 0.0
    %4110 = vmatpush1.msra.mxu0 0.0
    %4111 = vmatprep.subr.mxu0 0.0
    %4112 = vmatpush1.msra.mxu0 0.0
    %4113 = vmatprep.subr.mxu0 0.0
    %4114 = vmatpush1.msra.mxu0 0.0
    %4115 = vmatprep.subr.mxu0 0.0
    %4116 = vmatpush1.msra.mxu0 0.0
    %4117 = vmatprep.subr.mxu0 0.0
    %4118 = vmatpush1.msra.mxu0 0.0
    %4119 = vmatprep.subr.mxu0 0.0
    %4120 = vmatpush1.msra.mxu0 0.0
    %4121 = vmatprep.subr.mxu0 0.0
    %4122 = vmatpush1.msra.mxu0 0.0
    %4123 = vmatprep.subr.mxu0 0.0
    %4124 = vmatpush1.msra.mxu0 0.0
    %4125 = vmatprep.subr.mxu0 0.0
    %4126 = vmatpush1.msra.mxu0 0.0
    %4127 = vmatprep.subr.mxu0 0.0
    %4128 = vmatpush1.msra.mxu0 0.0
    %4129 = vmatprep.subr.mxu0 0.0
    %4130 = vmatpush1.msra.mxu0 0.0
    %4131 = vmatprep.subr.mxu0 0.0
    %4132 = vmatpush1.msra.mxu0 0.0
    %4133 = vmatprep.subr.mxu0 0.0
    %4134 = vmatpush1.msra.mxu0 0.0
    %4135 = vmatprep.subr.mxu0 0.0
    %4136 = vmatpush1.msra.mxu0 0.0
    %4137 = vmatprep.mubr.f32.mxu0 0.0
    %v4138 = vand.u32 %v3589, 4294901760
    %4139 = vmatmul.mubr.f32.gmra.mrb[0].mxu0 %v4138
    %v4140 = vpop.f32.mrb[0].mxu0
    %v4141 = vadd.f32 %v4022, %v4140
    %v4142 = vpop.f32.mrb[0].mxu0
    %4143 = vdwg.mxu0
    %4144 = vmatprep.subr.mxu0 0.0
    %v4145 = vand.u32 %v3572, 4294901760
    %4146 = vmatpush1.msra.mxu0 %v4145
    %4147 = vmatprep.subr.mxu0 0.0
    %v4148 = vand.u32 %v3573, 4294901760
    %4149 = vmatpush1.msra.mxu0 %v4148
    %4150 = vmatprep.subr.mxu0 0.0
    %v4151 = vand.u32 %v3574, 4294901760
    %4152 = vmatpush1.msra.mxu0 %v4151
    %4153 = vmatprep.subr.mxu0 0.0
    %v4154 = vand.u32 %v3575, 4294901760
    %4155 = vmatpush1.msra.mxu0 %v4154
    %4156 = vmatprep.subr.mxu0 0.0
    %v4157 = vand.u32 %v3576, 4294901760
    %4158 = vmatpush1.msra.mxu0 %v4157
    %4159 = vmatprep.subr.mxu0 0.0
    %v4160 = vand.u32 %v3577, 4294901760
    %4161 = vmatpush1.msra.mxu0 %v4160
    %4162 = vmatprep.subr.mxu0 0.0
    %v4163 = vand.u32 %v3578, 4294901760
    %4164 = vmatpush1.msra.mxu0 %v4163
    %4165 = vmatprep.subr.mxu0 0.0
    %v4166 = vand.u32 %v3579, 4294901760
    %4167 = vmatpush1.msra.mxu0 %v4166
    %4168 = vmatprep.subr.mxu0 0.0
    %v4169 = vand.u32 %v3580, 4294901760
    %4170 = vmatpush1.msra.mxu0 %v4169
    %4171 = vmatprep.subr.mxu0 0.0
    %v4172 = vand.u32 %v3581, 4294901760
    %4173 = vmatpush1.msra.mxu0 %v4172
    %4174 = vmatprep.subr.mxu0 0.0
    %v4175 = vand.u32 %v3582, 4294901760
    %4176 = vmatpush1.msra.mxu0 %v4175
    %4177 = vmatprep.subr.mxu0 0.0
    %v4178 = vand.u32 %v3583, 4294901760
    %4179 = vmatpush1.msra.mxu0 %v4178
    %4180 = vmatprep.subr.mxu0 0.0
    %v4181 = vand.u32 %v3584, 4294901760
    %4182 = vmatpush1.msra.mxu0 %v4181
    %4183 = vmatprep.subr.mxu0 0.0
    %v4184 = vand.u32 %v3585, 4294901760
    %4185 = vmatpush1.msra.mxu0 %v4184
    %4186 = vmatprep.subr.mxu0 0.0
    %v4187 = vand.u32 %v3586, 4294901760
    %4188 = vmatpush1.msra.mxu0 %v4187
    %4189 = vmatprep.subr.mxu0 0.0
    %v4190 = vand.u32 %v3587, 4294901760
    %4191 = vmatpush1.msra.mxu0 %v4190
    %4192 = vmatprep.subr.mxu0 0.0
    %4193 = vmatpush1.msra.mxu0 0.0
    %4194 = vmatprep.subr.mxu0 0.0
    %4195 = vmatpush1.msra.mxu0 0.0
    %4196 = vmatprep.subr.mxu0 0.0
    %4197 = vmatpush1.msra.mxu0 0.0
    %4198 = vmatprep.subr.mxu0 0.0
    %4199 = vmatpush1.msra.mxu0 0.0
    %4200 = vmatprep.subr.mxu0 0.0
    %4201 = vmatpush1.msra.mxu0 0.0
    %4202 = vmatprep.subr.mxu0 0.0
    %4203 = vmatpush1.msra.mxu0 0.0
    %4204 = vmatprep.subr.mxu0 0.0
    %4205 = vmatpush1.msra.mxu0 0.0
    %4206 = vmatprep.subr.mxu0 0.0
    %4207 = vmatpush1.msra.mxu0 0.0
    %4208 = vmatprep.subr.mxu0 0.0
    %4209 = vmatpush1.msra.mxu0 0.0
    %4210 = vmatprep.subr.mxu0 0.0
    %4211 = vmatpush1.msra.mxu0 0.0
    %4212 = vmatprep.subr.mxu0 0.0
    %4213 = vmatpush1.msra.mxu0 0.0
    %4214 = vmatprep.subr.mxu0 0.0
    %4215 = vmatpush1.msra.mxu0 0.0
    %4216 = vmatprep.subr.mxu0 0.0
    %4217 = vmatpush1.msra.mxu0 0.0
    %4218 = vmatprep.subr.mxu0 0.0
    %4219 = vmatpush1.msra.mxu0 0.0
    %4220 = vmatprep.subr.mxu0 0.0
    %4221 = vmatpush1.msra.mxu0 0.0
    %4222 = vmatprep.subr.mxu0 0.0
    %4223 = vmatpush1.msra.mxu0 0.0
    %4224 = vmatprep.mubr.f32.mxu0 0.0
    %v4225 = vand.u32 %v3589, 4294901760
    %4226 = vmatmul.mubr.f32.gmra.mrb[0].mxu0 %v4225
    %v4227 = vpop.f32.mrb[0].mxu0
    %v4228 = vadd.f32 %v4141, %v4227
    %v4229 = vpop.f32.mrb[0].mxu0
    %4230 = vdwg.mxu0
    %v4231 = vadd.f32 %v3534, %v4228
    %v4232 = vld [vmem:[%s0 + $0x6] sm:$0x1]
    %v4233 = vlaneseq
    %v4234 = vshrl.u32 %v4233, 7
    %v4235 = vsub.s32 0, %v4234
    %v4236 = vrot.slane %v4232, %v4235
    %vm4237 = vcmp.eq.s32.totalorder %v36, %v4236
    %vm4238 = vcmp.eq.s32.totalorder %v37, %v4236
    %vm4239 = vcmp.eq.s32.totalorder %v38, %v4236
    %vm4240 = vcmp.eq.s32.totalorder %v39, %v4236
    %vm4241 = vcmp.eq.s32.totalorder %v40, %v4236
    %vm4242 = vcmp.eq.s32.totalorder %v41, %v4236
    %vm4243 = vcmp.eq.s32.totalorder %v42, %v4236
    %vm4244 = vcmp.eq.s32.totalorder %v43, %v4236
    %vm4245 = vcmp.eq.s32.totalorder %v44, %v4236
    %vm4246 = vcmp.eq.s32.totalorder %v45, %v4236
    %vm4247 = vcmp.eq.s32.totalorder %v46, %v4236
    %vm4248 = vcmp.eq.s32.totalorder %v47, %v4236
    %vm4249 = vcmp.eq.s32.totalorder %v48, %v4236
    %vm4250 = vcmp.eq.s32.totalorder %v49, %v4236
    %vm4251 = vcmp.eq.s32.totalorder %v50, %v4236
    %vm4252 = vcmp.eq.s32.totalorder %v51, %v4236
    %v4253 = vsel %vm4237, 1, 0
    %v4254 = vsel %vm4238, 1, 0
    %v4255 = vsel %vm4239, 1, 0
    %v4256 = vsel %vm4240, 1, 0
    %v4257 = vsel %vm4241, 1, 0
    %v4258 = vsel %vm4242, 1, 0
    %v4259 = vsel %vm4243, 1, 0
    %v4260 = vsel %vm4244, 1, 0
    %v4261 = vsel %vm4245, 1, 0
    %v4262 = vsel %vm4246, 1, 0
    %v4263 = vsel %vm4247, 1, 0
    %v4264 = vsel %vm4248, 1, 0
    %v4265 = vsel %vm4249, 1, 0
    %v4266 = vsel %vm4250, 1, 0
    %v4267 = vsel %vm4251, 1, 0
    %v4268 = vsel %vm4252, 1, 0
    %v4269 = vcvt.s32.f32 %v4253
    %v4270 = vcvt.s32.f32 %v4254
    %v4271 = vcvt.s32.f32 %v4255
    %v4272 = vcvt.s32.f32 %v4256
    %v4273 = vcvt.s32.f32 %v4257
    %v4274 = vcvt.s32.f32 %v4258
    %v4275 = vcvt.s32.f32 %v4259
    %v4276 = vcvt.s32.f32 %v4260
    %v4277 = vcvt.s32.f32 %v4261
    %v4278 = vcvt.s32.f32 %v4262
    %v4279 = vcvt.s32.f32 %v4263
    %v4280 = vcvt.s32.f32 %v4264
    %v4281 = vcvt.s32.f32 %v4265
    %v4282 = vcvt.s32.f32 %v4266
    %v4283 = vcvt.s32.f32 %v4267
    %v4284 = vcvt.s32.f32 %v4268
    %s4285 = scalar_lea.vmem [#allocation2], 48
    %v4286 = vld [vmem:[%s4285] sm:$0xff]
    %4287 = vmatprep.subr.mxu0 0.0
    %v4288 = vand.u32 %v4269, 4294901760
    %4289 = vmatpush1.msra.mxu0 %v4288
    %4290 = vmatprep.subr.mxu0 0.0
    %v4291 = vand.u32 %v4270, 4294901760
    %4292 = vmatpush1.msra.mxu0 %v4291
    %4293 = vmatprep.subr.mxu0 0.0
    %v4294 = vand.u32 %v4271, 4294901760
    %4295 = vmatpush1.msra.mxu0 %v4294
    %4296 = vmatprep.subr.mxu0 0.0
    %v4297 = vand.u32 %v4272, 4294901760
    %4298 = vmatpush1.msra.mxu0 %v4297
    %4299 = vmatprep.subr.mxu0 0.0
    %v4300 = vand.u32 %v4273, 4294901760
    %4301 = vmatpush1.msra.mxu0 %v4300
    %4302 = vmatprep.subr.mxu0 0.0
    %v4303 = vand.u32 %v4274, 4294901760
    %4304 = vmatpush1.msra.mxu0 %v4303
    %4305 = vmatprep.subr.mxu0 0.0
    %v4306 = vand.u32 %v4275, 4294901760
    %4307 = vmatpush1.msra.mxu0 %v4306
    %4308 = vmatprep.subr.mxu0 0.0
    %v4309 = vand.u32 %v4276, 4294901760
    %4310 = vmatpush1.msra.mxu0 %v4309
    %4311 = vmatprep.subr.mxu0 0.0
    %v4312 = vand.u32 %v4277, 4294901760
    %4313 = vmatpush1.msra.mxu0 %v4312
    %4314 = vmatprep.subr.mxu0 0.0
    %v4315 = vand.u32 %v4278, 4294901760
    %4316 = vmatpush1.msra.mxu0 %v4315
    %4317 = vmatprep.subr.mxu0 0.0
    %v4318 = vand.u32 %v4279, 4294901760
    %4319 = vmatpush1.msra.mxu0 %v4318
    %4320 = vmatprep.subr.mxu0 0.0
    %v4321 = vand.u32 %v4280, 4294901760
    %4322 = vmatpush1.msra.mxu0 %v4321
    %4323 = vmatprep.subr.mxu0 0.0
    %v4324 = vand.u32 %v4281, 4294901760
    %4325 = vmatpush1.msra.mxu0 %v4324
    %4326 = vmatprep.subr.mxu0 0.0
    %v4327 = vand.u32 %v4282, 4294901760
    %4328 = vmatpush1.msra.mxu0 %v4327
    %4329 = vmatprep.subr.mxu0 0.0
    %v4330 = vand.u32 %v4283, 4294901760
    %4331 = vmatpush1.msra.mxu0 %v4330
    %4332 = vmatprep.subr.mxu0 0.0
    %v4333 = vand.u32 %v4284, 4294901760
    %4334 = vmatpush1.msra.mxu0 %v4333
    %4335 = vmatprep.subr.mxu0 0.0
    %4336 = vmatpush1.msra.mxu0 0.0
    %4337 = vmatprep.subr.mxu0 0.0
    %4338 = vmatpush1.msra.mxu0 0.0
    %4339 = vmatprep.subr.mxu0 0.0
    %4340 = vmatpush1.msra.mxu0 0.0
    %4341 = vmatprep.subr.mxu0 0.0
    %4342 = vmatpush1.msra.mxu0 0.0
    %4343 = vmatprep.subr.mxu0 0.0
    %4344 = vmatpush1.msra.mxu0 0.0
    %4345 = vmatprep.subr.mxu0 0.0
    %4346 = vmatpush1.msra.mxu0 0.0
    %4347 = vmatprep.subr.mxu0 0.0
    %4348 = vmatpush1.msra.mxu0 0.0
    %4349 = vmatprep.subr.mxu0 0.0
    %4350 = vmatpush1.msra.mxu0 0.0
    %4351 = vmatprep.subr.mxu0 0.0
    %4352 = vmatpush1.msra.mxu0 0.0
    %4353 = vmatprep.subr.mxu0 0.0
    %4354 = vmatpush1.msra.mxu0 0.0
    %4355 = vmatprep.subr.mxu0 0.0
    %4356 = vmatpush1.msra.mxu0 0.0
    %4357 = vmatprep.subr.mxu0 0.0
    %4358 = vmatpush1.msra.mxu0 0.0
    %4359 = vmatprep.subr.mxu0 0.0
    %4360 = vmatpush1.msra.mxu0 0.0
    %4361 = vmatprep.subr.mxu0 0.0
    %4362 = vmatpush1.msra.mxu0 0.0
    %4363 = vmatprep.subr.mxu0 0.0
    %4364 = vmatpush1.msra.mxu0 0.0
    %4365 = vmatprep.subr.mxu0 0.0
    %4366 = vmatpush1.msra.mxu0 0.0
    %4367 = vmatprep.mubr.f32.mxu0 0.0
    %v4368 = vand.u32 %v4286, 4294901760
    %v4369 = vsub.f32 %v4286, %v4368
    %v4370 = vand.u32 %v4369, 4294901760
    %v4371 = vsub.f32 %v4369, %v4370
    %v4372 = vand.u32 %v4371, 4294901760
    %4373 = vmatmul.mubr.f32.gmra.mrb[0].mxu0 %v4372
    %v4374 = vpop.f32.mrb[0].mxu0
    %v4375 = vadd.f32 0.0, %v4374
    %v4376 = vpop.f32.mrb[0].mxu0
    %4377 = vdwg.mxu0
    %4378 = vmatprep.subr.mxu0 0.0
    %v4379 = vand.u32 %v4269, 4294901760
    %v4380 = vsub.f32 %v4269, %v4379
    %v4381 = vand.u32 %v4380, 4294901760
    %v4382 = vsub.f32 %v4380, %v4381
    %v4383 = vand.u32 %v4382, 4294901760
    %4384 = vmatpush1.msra.mxu0 %v4383
    %4385 = vmatprep.subr.mxu0 0.0
    %v4386 = vand.u32 %v4270, 4294901760
    %v4387 = vsub.f32 %v4270, %v4386
    %v4388 = vand.u32 %v4387, 4294901760
    %v4389 = vsub.f32 %v4387, %v4388
    %v4390 = vand.u32 %v4389, 4294901760
    %4391 = vmatpush1.msra.mxu0 %v4390
    %4392 = vmatprep.subr.mxu0 0.0
    %v4393 = vand.u32 %v4271, 4294901760
    %v4394 = vsub.f32 %v4271, %v4393
    %v4395 = vand.u32 %v4394, 4294901760
    %v4396 = vsub.f32 %v4394, %v4395
    %v4397 = vand.u32 %v4396, 4294901760
    %4398 = vmatpush1.msra.mxu0 %v4397
    %4399 = vmatprep.subr.mxu0 0.0
    %v4400 = vand.u32 %v4272, 4294901760
    %v4401 = vsub.f32 %v4272, %v4400
    %v4402 = vand.u32 %v4401, 4294901760
    %v4403 = vsub.f32 %v4401, %v4402
    %v4404 = vand.u32 %v4403, 4294901760
    %4405 = vmatpush1.msra.mxu0 %v4404
    %4406 = vmatprep.subr.mxu0 0.0
    %v4407 = vand.u32 %v4273, 4294901760
    %v4408 = vsub.f32 %v4273, %v4407
    %v4409 = vand.u32 %v4408, 4294901760
    %v4410 = vsub.f32 %v4408, %v4409
    %v4411 = vand.u32 %v4410, 4294901760
    %4412 = vmatpush1.msra.mxu0 %v4411
    %4413 = vmatprep.subr.mxu0 0.0
    %v4414 = vand.u32 %v4274, 4294901760
    %v4415 = vsub.f32 %v4274, %v4414
    %v4416 = vand.u32 %v4415, 4294901760
    %v4417 = vsub.f32 %v4415, %v4416
    %v4418 = vand.u32 %v4417, 4294901760
    %4419 = vmatpush1.msra.mxu0 %v4418
    %4420 = vmatprep.subr.mxu0 0.0
    %v4421 = vand.u32 %v4275, 4294901760
    %v4422 = vsub.f32 %v4275, %v4421
    %v4423 = vand.u32 %v4422, 4294901760
    %v4424 = vsub.f32 %v4422, %v4423
    %v4425 = vand.u32 %v4424, 4294901760
    %4426 = vmatpush1.msra.mxu0 %v4425
    %4427 = vmatprep.subr.mxu0 0.0
    %v4428 = vand.u32 %v4276, 4294901760
    %v4429 = vsub.f32 %v4276, %v4428
    %v4430 = vand.u32 %v4429, 4294901760
    %v4431 = vsub.f32 %v4429, %v4430
    %v4432 = vand.u32 %v4431, 4294901760
    %4433 = vmatpush1.msra.mxu0 %v4432
    %4434 = vmatprep.subr.mxu0 0.0
    %v4435 = vand.u32 %v4277, 4294901760
    %v4436 = vsub.f32 %v4277, %v4435
    %v4437 = vand.u32 %v4436, 4294901760
    %v4438 = vsub.f32 %v4436, %v4437
    %v4439 = vand.u32 %v4438, 4294901760
    %4440 = vmatpush1.msra.mxu0 %v4439
    %4441 = vmatprep.subr.mxu0 0.0
    %v4442 = vand.u32 %v4278, 4294901760
    %v4443 = vsub.f32 %v4278, %v4442
    %v4444 = vand.u32 %v4443, 4294901760
    %v4445 = vsub.f32 %v4443, %v4444
    %v4446 = vand.u32 %v4445, 4294901760
    %4447 = vmatpush1.msra.mxu0 %v4446
    %4448 = vmatprep.subr.mxu0 0.0
    %v4449 = vand.u32 %v4279, 4294901760
    %v4450 = vsub.f32 %v4279, %v4449
    %v4451 = vand.u32 %v4450, 4294901760
    %v4452 = vsub.f32 %v4450, %v4451
    %v4453 = vand.u32 %v4452, 4294901760
    %4454 = vmatpush1.msra.mxu0 %v4453
    %4455 = vmatprep.subr.mxu0 0.0
    %v4456 = vand.u32 %v4280, 4294901760
    %v4457 = vsub.f32 %v4280, %v4456
    %v4458 = vand.u32 %v4457, 4294901760
    %v4459 = vsub.f32 %v4457, %v4458
    %v4460 = vand.u32 %v4459, 4294901760
    %4461 = vmatpush1.msra.mxu0 %v4460
    %4462 = vmatprep.subr.mxu0 0.0
    %v4463 = vand.u32 %v4281, 4294901760
    %v4464 = vsub.f32 %v4281, %v4463
    %v4465 = vand.u32 %v4464, 4294901760
    %v4466 = vsub.f32 %v4464, %v4465
    %v4467 = vand.u32 %v4466, 4294901760
    %4468 = vmatpush1.msra.mxu0 %v4467
    %4469 = vmatprep.subr.mxu0 0.0
    %v4470 = vand.u32 %v4282, 4294901760
    %v4471 = vsub.f32 %v4282, %v4470
    %v4472 = vand.u32 %v4471, 4294901760
    %v4473 = vsub.f32 %v4471, %v4472
    %v4474 = vand.u32 %v4473, 4294901760
    %4475 = vmatpush1.msra.mxu0 %v4474
    %4476 = vmatprep.subr.mxu0 0.0
    %v4477 = vand.u32 %v4283, 4294901760
    %v4478 = vsub.f32 %v4283, %v4477
    %v4479 = vand.u32 %v4478, 4294901760
    %v4480 = vsub.f32 %v4478, %v4479
    %v4481 = vand.u32 %v4480, 4294901760
    %4482 = vmatpush1.msra.mxu0 %v4481
    %4483 = vmatprep.subr.mxu0 0.0
    %v4484 = vand.u32 %v4284, 4294901760
    %v4485 = vsub.f32 %v4284, %v4484
    %v4486 = vand.u32 %v4485, 4294901760
    %v4487 = vsub.f32 %v4485, %v4486
    %v4488 = vand.u32 %v4487, 4294901760
    %4489 = vmatpush1.msra.mxu0 %v4488
    %4490 = vmatprep.subr.mxu0 0.0
    %4491 = vmatpush1.msra.mxu0 0.0
    %4492 = vmatprep.subr.mxu0 0.0
    %4493 = vmatpush1.msra.mxu0 0.0
    %4494 = vmatprep.subr.mxu0 0.0
    %4495 = vmatpush1.msra.mxu0 0.0
    %4496 = vmatprep.subr.mxu0 0.0
    %4497 = vmatpush1.msra.mxu0 0.0
    %4498 = vmatprep.subr.mxu0 0.0
    %4499 = vmatpush1.msra.mxu0 0.0
    %4500 = vmatprep.subr.mxu0 0.0
    %4501 = vmatpush1.msra.mxu0 0.0
    %4502 = vmatprep.subr.mxu0 0.0
    %4503 = vmatpush1.msra.mxu0 0.0
    %4504 = vmatprep.subr.mxu0 0.0
    %4505 = vmatpush1.msra.mxu0 0.0
    %4506 = vmatprep.subr.mxu0 0.0
    %4507 = vmatpush1.msra.mxu0 0.0
    %4508 = vmatprep.subr.mxu0 0.0
    %4509 = vmatpush1.msra.mxu0 0.0
    %4510 = vmatprep.subr.mxu0 0.0
    %4511 = vmatpush1.msra.mxu0 0.0
    %4512 = vmatprep.subr.mxu0 0.0
    %4513 = vmatpush1.msra.mxu0 0.0
    %4514 = vmatprep.subr.mxu0 0.0
    %4515 = vmatpush1.msra.mxu0 0.0
    %4516 = vmatprep.subr.mxu0 0.0
    %4517 = vmatpush1.msra.mxu0 0.0
    %4518 = vmatprep.subr.mxu0 0.0
    %4519 = vmatpush1.msra.mxu0 0.0
    %4520 = vmatprep.subr.mxu0 0.0
    %4521 = vmatpush1.msra.mxu0 0.0
    %4522 = vmatprep.mubr.f32.mxu0 0.0
    %v4523 = vand.u32 %v4286, 4294901760
    %4524 = vmatmul.mubr.f32.gmra.mrb[0].mxu0 %v4523
    %v4525 = vpop.f32.mrb[0].mxu0
    %v4526 = vadd.f32 %v4375, %v4525
    %v4527 = vpop.f32.mrb[0].mxu0
    %4528 = vdwg.mxu0
    %4529 = vmatprep.subr.mxu0 0.0
    %v4530 = vand.u32 %v4269, 4294901760
    %v4531 = vsub.f32 %v4269, %v4530
    %4532 = vmatpush1.msra.mxu0 %v4531
    %4533 = vmatprep.subr.mxu0 0.0
    %v4534 = vand.u32 %v4270, 4294901760
    %v4535 = vsub.f32 %v4270, %v4534
    %4536 = vmatpush1.msra.mxu0 %v4535
    %4537 = vmatprep.subr.mxu0 0.0
    %v4538 = vand.u32 %v4271, 4294901760
    %v4539 = vsub.f32 %v4271, %v4538
    %4540 = vmatpush1.msra.mxu0 %v4539
    %4541 = vmatprep.subr.mxu0 0.0
    %v4542 = vand.u32 %v4272, 4294901760
    %v4543 = vsub.f32 %v4272, %v4542
    %4544 = vmatpush1.msra.mxu0 %v4543
    %4545 = vmatprep.subr.mxu0 0.0
    %v4546 = vand.u32 %v4273, 4294901760
    %v4547 = vsub.f32 %v4273, %v4546
    %4548 = vmatpush1.msra.mxu0 %v4547
    %4549 = vmatprep.subr.mxu0 0.0
    %v4550 = vand.u32 %v4274, 4294901760
    %v4551 = vsub.f32 %v4274, %v4550
    %4552 = vmatpush1.msra.mxu0 %v4551
    %4553 = vmatprep.subr.mxu0 0.0
    %v4554 = vand.u32 %v4275, 4294901760
    %v4555 = vsub.f32 %v4275, %v4554
    %4556 = vmatpush1.msra.mxu0 %v4555
    %4557 = vmatprep.subr.mxu0 0.0
    %v4558 = vand.u32 %v4276, 4294901760
    %v4559 = vsub.f32 %v4276, %v4558
    %4560 = vmatpush1.msra.mxu0 %v4559
    %4561 = vmatprep.subr.mxu0 0.0
    %v4562 = vand.u32 %v4277, 4294901760
    %v4563 = vsub.f32 %v4277, %v4562
    %4564 = vmatpush1.msra.mxu0 %v4563
    %4565 = vmatprep.subr.mxu0 0.0
    %v4566 = vand.u32 %v4278, 4294901760
    %v4567 = vsub.f32 %v4278, %v4566
    %4568 = vmatpush1.msra.mxu0 %v4567
    %4569 = vmatprep.subr.mxu0 0.0
    %v4570 = vand.u32 %v4279, 4294901760
    %v4571 = vsub.f32 %v4279, %v4570
    %4572 = vmatpush1.msra.mxu0 %v4571
    %4573 = vmatprep.subr.mxu0 0.0
    %v4574 = vand.u32 %v4280, 4294901760
    %v4575 = vsub.f32 %v4280, %v4574
    %4576 = vmatpush1.msra.mxu0 %v4575
    %4577 = vmatprep.subr.mxu0 0.0
    %v4578 = vand.u32 %v4281, 4294901760
    %v4579 = vsub.f32 %v4281, %v4578
    %4580 = vmatpush1.msra.mxu0 %v4579
    %4581 = vmatprep.subr.mxu0 0.0
    %v4582 = vand.u32 %v4282, 4294901760
    %v4583 = vsub.f32 %v4282, %v4582
    %4584 = vmatpush1.msra.mxu0 %v4583
    %4585 = vmatprep.subr.mxu0 0.0
    %v4586 = vand.u32 %v4283, 4294901760
    %v4587 = vsub.f32 %v4283, %v4586
    %4588 = vmatpush1.msra.mxu0 %v4587
    %4589 = vmatprep.subr.mxu0 0.0
    %v4590 = vand.u32 %v4284, 4294901760
    %v4591 = vsub.f32 %v4284, %v4590
    %4592 = vmatpush1.msra.mxu0 %v4591
    %4593 = vmatprep.subr.mxu0 0.0
    %4594 = vmatpush1.msra.mxu0 0.0
    %4595 = vmatprep.subr.mxu0 0.0
    %4596 = vmatpush1.msra.mxu0 0.0
    %4597 = vmatprep.subr.mxu0 0.0
    %4598 = vmatpush1.msra.mxu0 0.0
    %4599 = vmatprep.subr.mxu0 0.0
    %4600 = vmatpush1.msra.mxu0 0.0
    %4601 = vmatprep.subr.mxu0 0.0
    %4602 = vmatpush1.msra.mxu0 0.0
    %4603 = vmatprep.subr.mxu0 0.0
    %4604 = vmatpush1.msra.mxu0 0.0
    %4605 = vmatprep.subr.mxu0 0.0
    %4606 = vmatpush1.msra.mxu0 0.0
    %4607 = vmatprep.subr.mxu0 0.0
    %4608 = vmatpush1.msra.mxu0 0.0
    %4609 = vmatprep.subr.mxu0 0.0
    %4610 = vmatpush1.msra.mxu0 0.0
    %4611 = vmatprep.subr.mxu0 0.0
    %4612 = vmatpush1.msra.mxu0 0.0
    %4613 = vmatprep.subr.mxu0 0.0
    %4614 = vmatpush1.msra.mxu0 0.0
    %4615 = vmatprep.subr.mxu0 0.0
    %4616 = vmatpush1.msra.mxu0 0.0
    %4617 = vmatprep.subr.mxu0 0.0
    %4618 = vmatpush1.msra.mxu0 0.0
    %4619 = vmatprep.subr.mxu0 0.0
    %4620 = vmatpush1.msra.mxu0 0.0
    %4621 = vmatprep.subr.mxu0 0.0
    %4622 = vmatpush1.msra.mxu0 0.0
    %4623 = vmatprep.subr.mxu0 0.0
    %4624 = vmatpush1.msra.mxu0 0.0
    %4625 = vmatprep.mubr.f32.mxu0 0.0
    %v4626 = vand.u32 %v4286, 4294901760
    %v4627 = vsub.f32 %v4286, %v4626
    %4628 = vmatmul.mubr.f32.gmra.mrb[0].mxu0 %v4627
    %v4629 = vpop.f32.mrb[0].mxu0
    %v4630 = vadd.f32 %v4526, %v4629
    %v4631 = vpop.f32.mrb[0].mxu0
    %4632 = vdwg.mxu0
    %4633 = vmatprep.subr.mxu0 0.0
    %v4634 = vand.u32 %v4269, 4294901760
    %4635 = vmatpush1.msra.mxu0 %v4634
    %4636 = vmatprep.subr.mxu0 0.0
    %v4637 = vand.u32 %v4270, 4294901760
    %4638 = vmatpush1.msra.mxu0 %v4637
    %4639 = vmatprep.subr.mxu0 0.0
    %v4640 = vand.u32 %v4271, 4294901760
    %4641 = vmatpush1.msra.mxu0 %v4640
    %4642 = vmatprep.subr.mxu0 0.0
    %v4643 = vand.u32 %v4272, 4294901760
    %4644 = vmatpush1.msra.mxu0 %v4643
    %4645 = vmatprep.subr.mxu0 0.0
    %v4646 = vand.u32 %v4273, 4294901760
    %4647 = vmatpush1.msra.mxu0 %v4646
    %4648 = vmatprep.subr.mxu0 0.0
    %v4649 = vand.u32 %v4274, 4294901760
    %4650 = vmatpush1.msra.mxu0 %v4649
    %4651 = vmatprep.subr.mxu0 0.0
    %v4652 = vand.u32 %v4275, 4294901760
    %4653 = vmatpush1.msra.mxu0 %v4652
    %4654 = vmatprep.subr.mxu0 0.0
    %v4655 = vand.u32 %v4276, 4294901760
    %4656 = vmatpush1.msra.mxu0 %v4655
    %4657 = vmatprep.subr.mxu0 0.0
    %v4658 = vand.u32 %v4277, 4294901760
    %4659 = vmatpush1.msra.mxu0 %v4658
    %4660 = vmatprep.subr.mxu0 0.0
    %v4661 = vand.u32 %v4278, 4294901760
    %4662 = vmatpush1.msra.mxu0 %v4661
    %4663 = vmatprep.subr.mxu0 0.0
    %v4664 = vand.u32 %v4279, 4294901760
    %4665 = vmatpush1.msra.mxu0 %v4664
    %4666 = vmatprep.subr.mxu0 0.0
    %v4667 = vand.u32 %v4280, 4294901760
    %4668 = vmatpush1.msra.mxu0 %v4667
    %4669 = vmatprep.subr.mxu0 0.0
    %v4670 = vand.u32 %v4281, 4294901760
    %4671 = vmatpush1.msra.mxu0 %v4670
    %4672 = vmatprep.subr.mxu0 0.0
    %v4673 = vand.u32 %v4282, 4294901760
    %4674 = vmatpush1.msra.mxu0 %v4673
    %4675 = vmatprep.subr.mxu0 0.0
    %v4676 = vand.u32 %v4283, 4294901760
    %4677 = vmatpush1.msra.mxu0 %v4676
    %4678 = vmatprep.subr.mxu0 0.0
    %v4679 = vand.u32 %v4284, 4294901760
    %4680 = vmatpush1.msra.mxu0 %v4679
    %4681 = vmatprep.subr.mxu0 0.0
    %4682 = vmatpush1.msra.mxu0 0.0
    %4683 = vmatprep.subr.mxu0 0.0
    %4684 = vmatpush1.msra.mxu0 0.0
    %4685 = vmatprep.subr.mxu0 0.0
    %4686 = vmatpush1.msra.mxu0 0.0
    %4687 = vmatprep.subr.mxu0 0.0
    %4688 = vmatpush1.msra.mxu0 0.0
    %4689 = vmatprep.subr.mxu0 0.0
    %4690 = vmatpush1.msra.mxu0 0.0
    %4691 = vmatprep.subr.mxu0 0.0
    %4692 = vmatpush1.msra.mxu0 0.0
    %4693 = vmatprep.subr.mxu0 0.0
    %4694 = vmatpush1.msra.mxu0 0.0
    %4695 = vmatprep.subr.mxu0 0.0
    %4696 = vmatpush1.msra.mxu0 0.0
    %4697 = vmatprep.subr.mxu0 0.0
    %4698 = vmatpush1.msra.mxu0 0.0
    %4699 = vmatprep.subr.mxu0 0.0
    %4700 = vmatpush1.msra.mxu0 0.0
    %4701 = vmatprep.subr.mxu0 0.0
    %4702 = vmatpush1.msra.mxu0 0.0
    %4703 = vmatprep.subr.mxu0 0.0
    %4704 = vmatpush1.msra.mxu0 0.0
    %4705 = vmatprep.subr.mxu0 0.0
    %4706 = vmatpush1.msra.mxu0 0.0
    %4707 = vmatprep.subr.mxu0 0.0
    %4708 = vmatpush1.msra.mxu0 0.0
    %4709 = vmatprep.subr.mxu0 0.0
    %4710 = vmatpush1.msra.mxu0 0.0
    %4711 = vmatprep.subr.mxu0 0.0
    %4712 = vmatpush1.msra.mxu0 0.0
    %4713 = vmatprep.mubr.f32.mxu0 0.0
    %v4714 = vand.u32 %v4286, 4294901760
    %v4715 = vsub.f32 %v4286, %v4714
    %v4716 = vand.u32 %v4715, 4294901760
    %4717 = vmatmul.mubr.f32.gmra.mrb[0].mxu0 %v4716
    %v4718 = vpop.f32.mrb[0].mxu0
    %v4719 = vadd.f32 %v4630, %v4718
    %v4720 = vpop.f32.mrb[0].mxu0
    %4721 = vdwg.mxu0
    %4722 = vmatprep.subr.mxu0 0.0
    %v4723 = vand.u32 %v4269, 4294901760
    %v4724 = vsub.f32 %v4269, %v4723
    %v4725 = vand.u32 %v4724, 4294901760
    %4726 = vmatpush1.msra.mxu0 %v4725
    %4727 = vmatprep.subr.mxu0 0.0
    %v4728 = vand.u32 %v4270, 4294901760
    %v4729 = vsub.f32 %v4270, %v4728
    %v4730 = vand.u32 %v4729, 4294901760
    %4731 = vmatpush1.msra.mxu0 %v4730
    %4732 = vmatprep.subr.mxu0 0.0
    %v4733 = vand.u32 %v4271, 4294901760
    %v4734 = vsub.f32 %v4271, %v4733
    %v4735 = vand.u32 %v4734, 4294901760
    %4736 = vmatpush1.msra.mxu0 %v4735
    %4737 = vmatprep.subr.mxu0 0.0
    %v4738 = vand.u32 %v4272, 4294901760
    %v4739 = vsub.f32 %v4272, %v4738
    %v4740 = vand.u32 %v4739, 4294901760
    %4741 = vmatpush1.msra.mxu0 %v4740
    %4742 = vmatprep.subr.mxu0 0.0
    %v4743 = vand.u32 %v4273, 4294901760
    %v4744 = vsub.f32 %v4273, %v4743
    %v4745 = vand.u32 %v4744, 4294901760
    %4746 = vmatpush1.msra.mxu0 %v4745
    %4747 = vmatprep.subr.mxu0 0.0
    %v4748 = vand.u32 %v4274, 4294901760
    %v4749 = vsub.f32 %v4274, %v4748
    %v4750 = vand.u32 %v4749, 4294901760
    %4751 = vmatpush1.msra.mxu0 %v4750
    %4752 = vmatprep.subr.mxu0 0.0
    %v4753 = vand.u32 %v4275, 4294901760
    %v4754 = vsub.f32 %v4275, %v4753
    %v4755 = vand.u32 %v4754, 4294901760
    %4756 = vmatpush1.msra.mxu0 %v4755
    %4757 = vmatprep.subr.mxu0 0.0
    %v4758 = vand.u32 %v4276, 4294901760
    %v4759 = vsub.f32 %v4276, %v4758
    %v4760 = vand.u32 %v4759, 4294901760
    %4761 = vmatpush1.msra.mxu0 %v4760
    %4762 = vmatprep.subr.mxu0 0.0
    %v4763 = vand.u32 %v4277, 4294901760
    %v4764 = vsub.f32 %v4277, %v4763
    %v4765 = vand.u32 %v4764, 4294901760
    %4766 = vmatpush1.msra.mxu0 %v4765
    %4767 = vmatprep.subr.mxu0 0.0
    %v4768 = vand.u32 %v4278, 4294901760
    %v4769 = vsub.f32 %v4278, %v4768
    %v4770 = vand.u32 %v4769, 4294901760
    %4771 = vmatpush1.msra.mxu0 %v4770
    %4772 = vmatprep.subr.mxu0 0.0
    %v4773 = vand.u32 %v4279, 4294901760
    %v4774 = vsub.f32 %v4279, %v4773
    %v4775 = vand.u32 %v4774, 4294901760
    %4776 = vmatpush1.msra.mxu0 %v4775
    %4777 = vmatprep.subr.mxu0 0.0
    %v4778 = vand.u32 %v4280, 4294901760
    %v4779 = vsub.f32 %v4280, %v4778
    %v4780 = vand.u32 %v4779, 4294901760
    %4781 = vmatpush1.msra.mxu0 %v4780
    %4782 = vmatprep.subr.mxu0 0.0
    %v4783 = vand.u32 %v4281, 4294901760
    %v4784 = vsub.f32 %v4281, %v4783
    %v4785 = vand.u32 %v4784, 4294901760
    %4786 = vmatpush1.msra.mxu0 %v4785
    %4787 = vmatprep.subr.mxu0 0.0
    %v4788 = vand.u32 %v4282, 4294901760
    %v4789 = vsub.f32 %v4282, %v4788
    %v4790 = vand.u32 %v4789, 4294901760
    %4791 = vmatpush1.msra.mxu0 %v4790
    %4792 = vmatprep.subr.mxu0 0.0
    %v4793 = vand.u32 %v4283, 4294901760
    %v4794 = vsub.f32 %v4283, %v4793
    %v4795 = vand.u32 %v4794, 4294901760
    %4796 = vmatpush1.msra.mxu0 %v4795
    %4797 = vmatprep.subr.mxu0 0.0
    %v4798 = vand.u32 %v4284, 4294901760
    %v4799 = vsub.f32 %v4284, %v4798
    %v4800 = vand.u32 %v4799, 4294901760
    %4801 = vmatpush1.msra.mxu0 %v4800
    %4802 = vmatprep.subr.mxu0 0.0
    %4803 = vmatpush1.msra.mxu0 0.0
    %4804 = vmatprep.subr.mxu0 0.0
    %4805 = vmatpush1.msra.mxu0 0.0
    %4806 = vmatprep.subr.mxu0 0.0
    %4807 = vmatpush1.msra.mxu0 0.0
    %4808 = vmatprep.subr.mxu0 0.0
    %4809 = vmatpush1.msra.mxu0 0.0
    %4810 = vmatprep.subr.mxu0 0.0
    %4811 = vmatpush1.msra.mxu0 0.0
    %4812 = vmatprep.subr.mxu0 0.0
    %4813 = vmatpush1.msra.mxu0 0.0
    %4814 = vmatprep.subr.mxu0 0.0
    %4815 = vmatpush1.msra.mxu0 0.0
    %4816 = vmatprep.subr.mxu0 0.0
    %4817 = vmatpush1.msra.mxu0 0.0
    %4818 = vmatprep.subr.mxu0 0.0
    %4819 = vmatpush1.msra.mxu0 0.0
    %4820 = vmatprep.subr.mxu0 0.0
    %4821 = vmatpush1.msra.mxu0 0.0
    %4822 = vmatprep.subr.mxu0 0.0
    %4823 = vmatpush1.msra.mxu0 0.0
    %4824 = vmatprep.subr.mxu0 0.0
    %4825 = vmatpush1.msra.mxu0 0.0
    %4826 = vmatprep.subr.mxu0 0.0
    %4827 = vmatpush1.msra.mxu0 0.0
    %4828 = vmatprep.subr.mxu0 0.0
    %4829 = vmatpush1.msra.mxu0 0.0
    %4830 = vmatprep.subr.mxu0 0.0
    %4831 = vmatpush1.msra.mxu0 0.0
    %4832 = vmatprep.subr.mxu0 0.0
    %4833 = vmatpush1.msra.mxu0 0.0
    %4834 = vmatprep.mubr.f32.mxu0 0.0
    %v4835 = vand.u32 %v4286, 4294901760
    %4836 = vmatmul.mubr.f32.gmra.mrb[0].mxu0 %v4835
    %v4837 = vpop.f32.mrb[0].mxu0
    %v4838 = vadd.f32 %v4719, %v4837
    %v4839 = vpop.f32.mrb[0].mxu0
    %4840 = vdwg.mxu0
    %4841 = vmatprep.subr.mxu0 0.0
    %v4842 = vand.u32 %v4269, 4294901760
    %4843 = vmatpush1.msra.mxu0 %v4842
    %4844 = vmatprep.subr.mxu0 0.0
    %v4845 = vand.u32 %v4270, 4294901760
    %4846 = vmatpush1.msra.mxu0 %v4845
    %4847 = vmatprep.subr.mxu0 0.0
    %v4848 = vand.u32 %v4271, 4294901760
    %4849 = vmatpush1.msra.mxu0 %v4848
    %4850 = vmatprep.subr.mxu0 0.0
    %v4851 = vand.u32 %v4272, 4294901760
    %4852 = vmatpush1.msra.mxu0 %v4851
    %4853 = vmatprep.subr.mxu0 0.0
    %v4854 = vand.u32 %v4273, 4294901760
    %4855 = vmatpush1.msra.mxu0 %v4854
    %4856 = vmatprep.subr.mxu0 0.0
    %v4857 = vand.u32 %v4274, 4294901760
    %4858 = vmatpush1.msra.mxu0 %v4857
    %4859 = vmatprep.subr.mxu0 0.0
    %v4860 = vand.u32 %v4275, 4294901760
    %4861 = vmatpush1.msra.mxu0 %v4860
    %4862 = vmatprep.subr.mxu0 0.0
    %v4863 = vand.u32 %v4276, 4294901760
    %4864 = vmatpush1.msra.mxu0 %v4863
    %4865 = vmatprep.subr.mxu0 0.0
    %v4866 = vand.u32 %v4277, 4294901760
    %4867 = vmatpush1.msra.mxu0 %v4866
    %4868 = vmatprep.subr.mxu0 0.0
    %v4869 = vand.u32 %v4278, 4294901760
    %4870 = vmatpush1.msra.mxu0 %v4869
    %4871 = vmatprep.subr.mxu0 0.0
    %v4872 = vand.u32 %v4279, 4294901760
    %4873 = vmatpush1.msra.mxu0 %v4872
    %4874 = vmatprep.subr.mxu0 0.0
    %v4875 = vand.u32 %v4280, 4294901760
    %4876 = vmatpush1.msra.mxu0 %v4875
    %4877 = vmatprep.subr.mxu0 0.0
    %v4878 = vand.u32 %v4281, 4294901760
    %4879 = vmatpush1.msra.mxu0 %v4878
    %4880 = vmatprep.subr.mxu0 0.0
    %v4881 = vand.u32 %v4282, 4294901760
    %4882 = vmatpush1.msra.mxu0 %v4881
    %4883 = vmatprep.subr.mxu0 0.0
    %v4884 = vand.u32 %v4283, 4294901760
    %4885 = vmatpush1.msra.mxu0 %v4884
    %4886 = vmatprep.subr.mxu0 0.0
    %v4887 = vand.u32 %v4284, 4294901760
    %4888 = vmatpush1.msra.mxu0 %v4887
    %4889 = vmatprep.subr.mxu0 0.0
    %4890 = vmatpush1.msra.mxu0 0.0
    %4891 = vmatprep.subr.mxu0 0.0
    %4892 = vmatpush1.msra.mxu0 0.0
    %4893 = vmatprep.subr.mxu0 0.0
    %4894 = vmatpush1.msra.mxu0 0.0
    %4895 = vmatprep.subr.mxu0 0.0
    %4896 = vmatpush1.msra.mxu0 0.0
    %4897 = vmatprep.subr.mxu0 0.0
    %4898 = vmatpush1.msra.mxu0 0.0
    %4899 = vmatprep.subr.mxu0 0.0
    %4900 = vmatpush1.msra.mxu0 0.0
    %4901 = vmatprep.subr.mxu0 0.0
    %4902 = vmatpush1.msra.mxu0 0.0
    %4903 = vmatprep.subr.mxu0 0.0
    %4904 = vmatpush1.msra.mxu0 0.0
    %4905 = vmatprep.subr.mxu0 0.0
    %4906 = vmatpush1.msra.mxu0 0.0
    %4907 = vmatprep.subr.mxu0 0.0
    %4908 = vmatpush1.msra.mxu0 0.0
    %4909 = vmatprep.subr.mxu0 0.0
    %4910 = vmatpush1.msra.mxu0 0.0
    %4911 = vmatprep.subr.mxu0 0.0
    %4912 = vmatpush1.msra.mxu0 0.0
    %4913 = vmatprep.subr.mxu0 0.0
    %4914 = vmatpush1.msra.mxu0 0.0
    %4915 = vmatprep.subr.mxu0 0.0
    %4916 = vmatpush1.msra.mxu0 0.0
    %4917 = vmatprep.subr.mxu0 0.0
    %4918 = vmatpush1.msra.mxu0 0.0
    %4919 = vmatprep.subr.mxu0 0.0
    %4920 = vmatpush1.msra.mxu0 0.0
    %4921 = vmatprep.mubr.f32.mxu0 0.0
    %v4922 = vand.u32 %v4286, 4294901760
    %4923 = vmatmul.mubr.f32.gmra.mrb[0].mxu0 %v4922
    %v4924 = vpop.f32.mrb[0].mxu0
    %v4925 = vadd.f32 %v4838, %v4924
    %v4926 = vpop.f32.mrb[0].mxu0
    %4927 = vdwg.mxu0
    %v4928 = vadd.f32 %v4231, %v4925
    %v4929 = vld [vmem:[%s0 + $0x7] sm:$0x1]
    %v4930 = vlaneseq
    %v4931 = vshrl.u32 %v4930, 7
    %v4932 = vsub.s32 0, %v4931
    %v4933 = vrot.slane %v4929, %v4932
    %vm4934 = vcmp.eq.s32.totalorder %v36, %v4933
    %vm4935 = vcmp.eq.s32.totalorder %v37, %v4933
    %vm4936 = vcmp.eq.s32.totalorder %v38, %v4933
    %vm4937 = vcmp.eq.s32.totalorder %v39, %v4933
    %vm4938 = vcmp.eq.s32.totalorder %v40, %v4933
    %vm4939 = vcmp.eq.s32.totalorder %v41, %v4933
    %vm4940 = vcmp.eq.s32.totalorder %v42, %v4933
    %vm4941 = vcmp.eq.s32.totalorder %v43, %v4933
    %vm4942 = vcmp.eq.s32.totalorder %v44, %v4933
    %vm4943 = vcmp.eq.s32.totalorder %v45, %v4933
    %vm4944 = vcmp.eq.s32.totalorder %v46, %v4933
    %vm4945 = vcmp.eq.s32.totalorder %v47, %v4933
    %vm4946 = vcmp.eq.s32.totalorder %v48, %v4933
    %vm4947 = vcmp.eq.s32.totalorder %v49, %v4933
    %vm4948 = vcmp.eq.s32.totalorder %v50, %v4933
    %vm4949 = vcmp.eq.s32.totalorder %v51, %v4933
    %v4950 = vsel %vm4934, 1, 0
    %v4951 = vsel %vm4935, 1, 0
    %v4952 = vsel %vm4936, 1, 0
    %v4953 = vsel %vm4937, 1, 0
    %v4954 = vsel %vm4938, 1, 0
    %v4955 = vsel %vm4939, 1, 0
    %v4956 = vsel %vm4940, 1, 0
    %v4957 = vsel %vm4941, 1, 0
    %v4958 = vsel %vm4942, 1, 0
    %v4959 = vsel %vm4943, 1, 0
    %v4960 = vsel %vm4944, 1, 0
    %v4961 = vsel %vm4945, 1, 0
    %v4962 = vsel %vm4946, 1, 0
    %v4963 = vsel %vm4947, 1, 0
    %v4964 = vsel %vm4948, 1, 0
    %v4965 = vsel %vm4949, 1, 0
    %v4966 = vcvt.s32.f32 %v4950
    %v4967 = vcvt.s32.f32 %v4951
    %v4968 = vcvt.s32.f32 %v4952
    %v4969 = vcvt.s32.f32 %v4953
    %v4970 = vcvt.s32.f32 %v4954
    %v4971 = vcvt.s32.f32 %v4955
    %v4972 = vcvt.s32.f32 %v4956
    %v4973 = vcvt.s32.f32 %v4957
    %v4974 = vcvt.s32.f32 %v4958
    %v4975 = vcvt.s32.f32 %v4959
    %v4976 = vcvt.s32.f32 %v4960
    %v4977 = vcvt.s32.f32 %v4961
    %v4978 = vcvt.s32.f32 %v4962
    %v4979 = vcvt.s32.f32 %v4963
    %v4980 = vcvt.s32.f32 %v4964
    %v4981 = vcvt.s32.f32 %v4965
    %s4982 = scalar_lea.vmem [#allocation2], 56
    %v4983 = vld [vmem:[%s4982] sm:$0xff]
    %4984 = vmatprep.subr.mxu0 0.0
    %v4985 = vand.u32 %v4966, 4294901760
    %4986 = vmatpush1.msra.mxu0 %v4985
    %4987 = vmatprep.subr.mxu0 0.0
    %v4988 = vand.u32 %v4967, 4294901760
    %4989 = vmatpush1.msra.mxu0 %v4988
    %4990 = vmatprep.subr.mxu0 0.0
    %v4991 = vand.u32 %v4968, 4294901760
    %4992 = vmatpush1.msra.mxu0 %v4991
    %4993 = vmatprep.subr.mxu0 0.0
    %v4994 = vand.u32 %v4969, 4294901760
    %4995 = vmatpush1.msra.mxu0 %v4994
    %4996 = vmatprep.subr.mxu0 0.0
    %v4997 = vand.u32 %v4970, 4294901760
    %4998 = vmatpush1.msra.mxu0 %v4997
    %4999 = vmatprep.subr.mxu0 0.0
    %v5000 = vand.u32 %v4971, 4294901760
    %5001 = vmatpush1.msra.mxu0 %v5000
    %5002 = vmatprep.subr.mxu0 0.0
    %v5003 = vand.u32 %v4972, 4294901760
    %5004 = vmatpush1.msra.mxu0 %v5003
    %5005 = vmatprep.subr.mxu0 0.0
    %v5006 = vand.u32 %v4973, 4294901760
    %5007 = vmatpush1.msra.mxu0 %v5006
    %5008 = vmatprep.subr.mxu0 0.0
    %v5009 = vand.u32 %v4974, 4294901760
    %5010 = vmatpush1.msra.mxu0 %v5009
    %5011 = vmatprep.subr.mxu0 0.0
    %v5012 = vand.u32 %v4975, 4294901760
    %5013 = vmatpush1.msra.mxu0 %v5012
    %5014 = vmatprep.subr.mxu0 0.0
    %v5015 = vand.u32 %v4976, 4294901760
    %5016 = vmatpush1.msra.mxu0 %v5015
    %5017 = vmatprep.subr.mxu0 0.0
    %v5018 = vand.u32 %v4977, 4294901760
    %5019 = vmatpush1.msra.mxu0 %v5018
    %5020 = vmatprep.subr.mxu0 0.0
    %v5021 = vand.u32 %v4978, 4294901760
    %5022 = vmatpush1.msra.mxu0 %v5021
    %5023 = vmatprep.subr.mxu0 0.0
    %v5024 = vand.u32 %v4979, 4294901760
    %5025 = vmatpush1.msra.mxu0 %v5024
    %5026 = vmatprep.subr.mxu0 0.0
    %v5027 = vand.u32 %v4980, 4294901760
    %5028 = vmatpush1.msra.mxu0 %v5027
    %5029 = vmatprep.subr.mxu0 0.0
    %v5030 = vand.u32 %v4981, 4294901760
    %5031 = vmatpush1.msra.mxu0 %v5030
    %5032 = vmatprep.subr.mxu0 0.0
    %5033 = vmatpush1.msra.mxu0 0.0
    %5034 = vmatprep.subr.mxu0 0.0
    %5035 = vmatpush1.msra.mxu0 0.0
    %5036 = vmatprep.subr.mxu0 0.0
    %5037 = vmatpush1.msra.mxu0 0.0
    %5038 = vmatprep.subr.mxu0 0.0
    %5039 = vmatpush1.msra.mxu0 0.0
    %5040 = vmatprep.subr.mxu0 0.0
    %5041 = vmatpush1.msra.mxu0 0.0
    %5042 = vmatprep.subr.mxu0 0.0
    %5043 = vmatpush1.msra.mxu0 0.0
    %5044 = vmatprep.subr.mxu0 0.0
    %5045 = vmatpush1.msra.mxu0 0.0
    %5046 = vmatprep.subr.mxu0 0.0
    %5047 = vmatpush1.msra.mxu0 0.0
    %5048 = vmatprep.subr.mxu0 0.0
    %5049 = vmatpush1.msra.mxu0 0.0
    %5050 = vmatprep.subr.mxu0 0.0
    %5051 = vmatpush1.msra.mxu0 0.0
    %5052 = vmatprep.subr.mxu0 0.0
    %5053 = vmatpush1.msra.mxu0 0.0
    %5054 = vmatprep.subr.mxu0 0.0
    %5055 = vmatpush1.msra.mxu0 0.0
    %5056 = vmatprep.subr.mxu0 0.0
    %5057 = vmatpush1.msra.mxu0 0.0
    %5058 = vmatprep.subr.mxu0 0.0
    %5059 = vmatpush1.msra.mxu0 0.0
    %5060 = vmatprep.subr.mxu0 0.0
    %5061 = vmatpush1.msra.mxu0 0.0
    %5062 = vmatprep.subr.mxu0 0.0
    %5063 = vmatpush1.msra.mxu0 0.0
    %5064 = vmatprep.mubr.f32.mxu0 0.0
    %v5065 = vand.u32 %v4983, 4294901760
    %v5066 = vsub.f32 %v4983, %v5065
    %v5067 = vand.u32 %v5066, 4294901760
    %v5068 = vsub.f32 %v5066, %v5067
    %v5069 = vand.u32 %v5068, 4294901760
    %5070 = vmatmul.mubr.f32.gmra.mrb[0].mxu0 %v5069
    %v5071 = vpop.f32.mrb[0].mxu0
    %v5072 = vadd.f32 0.0, %v5071
    %v5073 = vpop.f32.mrb[0].mxu0
    %5074 = vdwg.mxu0
    %5075 = vmatprep.subr.mxu0 0.0
    %v5076 = vand.u32 %v4966, 4294901760
    %v5077 = vsub.f32 %v4966, %v5076
    %v5078 = vand.u32 %v5077, 4294901760
    %v5079 = vsub.f32 %v5077, %v5078
    %v5080 = vand.u32 %v5079, 4294901760
    %5081 = vmatpush1.msra.mxu0 %v5080
    %5082 = vmatprep.subr.mxu0 0.0
    %v5083 = vand.u32 %v4967, 4294901760
    %v5084 = vsub.f32 %v4967, %v5083
    %v5085 = vand.u32 %v5084, 4294901760
    %v5086 = vsub.f32 %v5084, %v5085
    %v5087 = vand.u32 %v5086, 4294901760
    %5088 = vmatpush1.msra.mxu0 %v5087
    %5089 = vmatprep.subr.mxu0 0.0
    %v5090 = vand.u32 %v4968, 4294901760
    %v5091 = vsub.f32 %v4968, %v5090
    %v5092 = vand.u32 %v5091, 4294901760
    %v5093 = vsub.f32 %v5091, %v5092
    %v5094 = vand.u32 %v5093, 4294901760
    %5095 = vmatpush1.msra.mxu0 %v5094
    %5096 = vmatprep.subr.mxu0 0.0
    %v5097 = vand.u32 %v4969, 4294901760
    %v5098 = vsub.f32 %v4969, %v5097
    %v5099 = vand.u32 %v5098, 4294901760
    %v5100 = vsub.f32 %v5098, %v5099
    %v5101 = vand.u32 %v5100, 4294901760
    %5102 = vmatpush1.msra.mxu0 %v5101
    %5103 = vmatprep.subr.mxu0 0.0
    %v5104 = vand.u32 %v4970, 4294901760
    %v5105 = vsub.f32 %v4970, %v5104
    %v5106 = vand.u32 %v5105, 4294901760
    %v5107 = vsub.f32 %v5105, %v5106
    %v5108 = vand.u32 %v5107, 4294901760
    %5109 = vmatpush1.msra.mxu0 %v5108
    %5110 = vmatprep.subr.mxu0 0.0
    %v5111 = vand.u32 %v4971, 4294901760
    %v5112 = vsub.f32 %v4971, %v5111
    %v5113 = vand.u32 %v5112, 4294901760
    %v5114 = vsub.f32 %v5112, %v5113
    %v5115 = vand.u32 %v5114, 4294901760
    %5116 = vmatpush1.msra.mxu0 %v5115
    %5117 = vmatprep.subr.mxu0 0.0
    %v5118 = vand.u32 %v4972, 4294901760
    %v5119 = vsub.f32 %v4972, %v5118
    %v5120 = vand.u32 %v5119, 4294901760
    %v5121 = vsub.f32 %v5119, %v5120
    %v5122 = vand.u32 %v5121, 4294901760
    %5123 = vmatpush1.msra.mxu0 %v5122
    %5124 = vmatprep.subr.mxu0 0.0
    %v5125 = vand.u32 %v4973, 4294901760
    %v5126 = vsub.f32 %v4973, %v5125
    %v5127 = vand.u32 %v5126, 4294901760
    %v5128 = vsub.f32 %v5126, %v5127
    %v5129 = vand.u32 %v5128, 4294901760
    %5130 = vmatpush1.msra.mxu0 %v5129
    %5131 = vmatprep.subr.mxu0 0.0
    %v5132 = vand.u32 %v4974, 4294901760
    %v5133 = vsub.f32 %v4974, %v5132
    %v5134 = vand.u32 %v5133, 4294901760
    %v5135 = vsub.f32 %v5133, %v5134
    %v5136 = vand.u32 %v5135, 4294901760
    %5137 = vmatpush1.msra.mxu0 %v5136
    %5138 = vmatprep.subr.mxu0 0.0
    %v5139 = vand.u32 %v4975, 4294901760
    %v5140 = vsub.f32 %v4975, %v5139
    %v5141 = vand.u32 %v5140, 4294901760
    %v5142 = vsub.f32 %v5140, %v5141
    %v5143 = vand.u32 %v5142, 4294901760
    %5144 = vmatpush1.msra.mxu0 %v5143
    %5145 = vmatprep.subr.mxu0 0.0
    %v5146 = vand.u32 %v4976, 4294901760
    %v5147 = vsub.f32 %v4976, %v5146
    %v5148 = vand.u32 %v5147, 4294901760
    %v5149 = vsub.f32 %v5147, %v5148
    %v5150 = vand.u32 %v5149, 4294901760
    %5151 = vmatpush1.msra.mxu0 %v5150
    %5152 = vmatprep.subr.mxu0 0.0
    %v5153 = vand.u32 %v4977, 4294901760
    %v5154 = vsub.f32 %v4977, %v5153
    %v5155 = vand.u32 %v5154, 4294901760
    %v5156 = vsub.f32 %v5154, %v5155
    %v5157 = vand.u32 %v5156, 4294901760
    %5158 = vmatpush1.msra.mxu0 %v5157
    %5159 = vmatprep.subr.mxu0 0.0
    %v5160 = vand.u32 %v4978, 4294901760
    %v5161 = vsub.f32 %v4978, %v5160
    %v5162 = vand.u32 %v5161, 4294901760
    %v5163 = vsub.f32 %v5161, %v5162
    %v5164 = vand.u32 %v5163, 4294901760
    %5165 = vmatpush1.msra.mxu0 %v5164
    %5166 = vmatprep.subr.mxu0 0.0
    %v5167 = vand.u32 %v4979, 4294901760
    %v5168 = vsub.f32 %v4979, %v5167
    %v5169 = vand.u32 %v5168, 4294901760
    %v5170 = vsub.f32 %v5168, %v5169
    %v5171 = vand.u32 %v5170, 4294901760
    %5172 = vmatpush1.msra.mxu0 %v5171
    %5173 = vmatprep.subr.mxu0 0.0
    %v5174 = vand.u32 %v4980, 4294901760
    %v5175 = vsub.f32 %v4980, %v5174
    %v5176 = vand.u32 %v5175, 4294901760
    %v5177 = vsub.f32 %v5175, %v5176
    %v5178 = vand.u32 %v5177, 4294901760
    %5179 = vmatpush1.msra.mxu0 %v5178
    %5180 = vmatprep.subr.mxu0 0.0
    %v5181 = vand.u32 %v4981, 4294901760
    %v5182 = vsub.f32 %v4981, %v5181
    %v5183 = vand.u32 %v5182, 4294901760
    %v5184 = vsub.f32 %v5182, %v5183
    %v5185 = vand.u32 %v5184, 4294901760
    %5186 = vmatpush1.msra.mxu0 %v5185
    %5187 = vmatprep.subr.mxu0 0.0
    %5188 = vmatpush1.msra.mxu0 0.0
    %5189 = vmatprep.subr.mxu0 0.0
    %5190 = vmatpush1.msra.mxu0 0.0
    %5191 = vmatprep.subr.mxu0 0.0
    %5192 = vmatpush1.msra.mxu0 0.0
    %5193 = vmatprep.subr.mxu0 0.0
    %5194 = vmatpush1.msra.mxu0 0.0
    %5195 = vmatprep.subr.mxu0 0.0
    %5196 = vmatpush1.msra.mxu0 0.0
    %5197 = vmatprep.subr.mxu0 0.0
    %5198 = vmatpush1.msra.mxu0 0.0
    %5199 = vmatprep.subr.mxu0 0.0
    %5200 = vmatpush1.msra.mxu0 0.0
    %5201 = vmatprep.subr.mxu0 0.0
    %5202 = vmatpush1.msra.mxu0 0.0
    %5203 = vmatprep.subr.mxu0 0.0
    %5204 = vmatpush1.msra.mxu0 0.0
    %5205 = vmatprep.subr.mxu0 0.0
    %5206 = vmatpush1.msra.mxu0 0.0
    %5207 = vmatprep.subr.mxu0 0.0
    %5208 = vmatpush1.msra.mxu0 0.0
    %5209 = vmatprep.subr.mxu0 0.0
    %5210 = vmatpush1.msra.mxu0 0.0
    %5211 = vmatprep.subr.mxu0 0.0
    %5212 = vmatpush1.msra.mxu0 0.0
    %5213 = vmatprep.subr.mxu0 0.0
    %5214 = vmatpush1.msra.mxu0 0.0
    %5215 = vmatprep.subr.mxu0 0.0
    %5216 = vmatpush1.msra.mxu0 0.0
    %5217 = vmatprep.subr.mxu0 0.0
    %5218 = vmatpush1.msra.mxu0 0.0
    %5219 = vmatprep.mubr.f32.mxu0 0.0
    %v5220 = vand.u32 %v4983, 4294901760
    %5221 = vmatmul.mubr.f32.gmra.mrb[0].mxu0 %v5220
    %v5222 = vpop.f32.mrb[0].mxu0
    %v5223 = vadd.f32 %v5072, %v5222
    %v5224 = vpop.f32.mrb[0].mxu0
    %5225 = vdwg.mxu0
    %5226 = vmatprep.subr.mxu0 0.0
    %v5227 = vand.u32 %v4966, 4294901760
    %v5228 = vsub.f32 %v4966, %v5227
    %5229 = vmatpush1.msra.mxu0 %v5228
    %5230 = vmatprep.subr.mxu0 0.0
    %v5231 = vand.u32 %v4967, 4294901760
    %v5232 = vsub.f32 %v4967, %v5231
    %5233 = vmatpush1.msra.mxu0 %v5232
    %5234 = vmatprep.subr.mxu0 0.0
    %v5235 = vand.u32 %v4968, 4294901760
    %v5236 = vsub.f32 %v4968, %v5235
    %5237 = vmatpush1.msra.mxu0 %v5236
    %5238 = vmatprep.subr.mxu0 0.0
    %v5239 = vand.u32 %v4969, 4294901760
    %v5240 = vsub.f32 %v4969, %v5239
    %5241 = vmatpush1.msra.mxu0 %v5240
    %5242 = vmatprep.subr.mxu0 0.0
    %v5243 = vand.u32 %v4970, 4294901760
    %v5244 = vsub.f32 %v4970, %v5243
    %5245 = vmatpush1.msra.mxu0 %v5244
    %5246 = vmatprep.subr.mxu0 0.0
    %v5247 = vand.u32 %v4971, 4294901760
    %v5248 = vsub.f32 %v4971, %v5247
    %5249 = vmatpush1.msra.mxu0 %v5248
    %5250 = vmatprep.subr.mxu0 0.0
    %v5251 = vand.u32 %v4972, 4294901760
    %v5252 = vsub.f32 %v4972, %v5251
    %5253 = vmatpush1.msra.mxu0 %v5252
    %5254 = vmatprep.subr.mxu0 0.0
    %v5255 = vand.u32 %v4973, 4294901760
    %v5256 = vsub.f32 %v4973, %v5255
    %5257 = vmatpush1.msra.mxu0 %v5256
    %5258 = vmatprep.subr.mxu0 0.0
    %v5259 = vand.u32 %v4974, 4294901760
    %v5260 = vsub.f32 %v4974, %v5259
    %5261 = vmatpush1.msra.mxu0 %v5260
    %5262 = vmatprep.subr.mxu0 0.0
    %v5263 = vand.u32 %v4975, 4294901760
    %v5264 = vsub.f32 %v4975, %v5263
    %5265 = vmatpush1.msra.mxu0 %v5264
    %5266 = vmatprep.subr.mxu0 0.0
    %v5267 = vand.u32 %v4976, 4294901760
    %v5268 = vsub.f32 %v4976, %v5267
    %5269 = vmatpush1.msra.mxu0 %v5268
    %5270 = vmatprep.subr.mxu0 0.0
    %v5271 = vand.u32 %v4977, 4294901760
    %v5272 = vsub.f32 %v4977, %v5271
    %5273 = vmatpush1.msra.mxu0 %v5272
    %5274 = vmatprep.subr.mxu0 0.0
    %v5275 = vand.u32 %v4978, 4294901760
    %v5276 = vsub.f32 %v4978, %v5275
    %5277 = vmatpush1.msra.mxu0 %v5276
    %5278 = vmatprep.subr.mxu0 0.0
    %v5279 = vand.u32 %v4979, 4294901760
    %v5280 = vsub.f32 %v4979, %v5279
    %5281 = vmatpush1.msra.mxu0 %v5280
    %5282 = vmatprep.subr.mxu0 0.0
    %v5283 = vand.u32 %v4980, 4294901760
    %v5284 = vsub.f32 %v4980, %v5283
    %5285 = vmatpush1.msra.mxu0 %v5284
    %5286 = vmatprep.subr.mxu0 0.0
    %v5287 = vand.u32 %v4981, 4294901760
    %v5288 = vsub.f32 %v4981, %v5287
    %5289 = vmatpush1.msra.mxu0 %v5288
    %5290 = vmatprep.subr.mxu0 0.0
    %5291 = vmatpush1.msra.mxu0 0.0
    %5292 = vmatprep.subr.mxu0 0.0
    %5293 = vmatpush1.msra.mxu0 0.0
    %5294 = vmatprep.subr.mxu0 0.0
    %5295 = vmatpush1.msra.mxu0 0.0
    %5296 = vmatprep.subr.mxu0 0.0
    %5297 = vmatpush1.msra.mxu0 0.0
    %5298 = vmatprep.subr.mxu0 0.0
    %5299 = vmatpush1.msra.mxu0 0.0
    %5300 = vmatprep.subr.mxu0 0.0
    %5301 = vmatpush1.msra.mxu0 0.0
    %5302 = vmatprep.subr.mxu0 0.0
    %5303 = vmatpush1.msra.mxu0 0.0
    %5304 = vmatprep.subr.mxu0 0.0
    %5305 = vmatpush1.msra.mxu0 0.0
    %5306 = vmatprep.subr.mxu0 0.0
    %5307 = vmatpush1.msra.mxu0 0.0
    %5308 = vmatprep.subr.mxu0 0.0
    %5309 = vmatpush1.msra.mxu0 0.0
    %5310 = vmatprep.subr.mxu0 0.0
    %5311 = vmatpush1.msra.mxu0 0.0
    %5312 = vmatprep.subr.mxu0 0.0
    %5313 = vmatpush1.msra.mxu0 0.0
    %5314 = vmatprep.subr.mxu0 0.0
    %5315 = vmatpush1.msra.mxu0 0.0
    %5316 = vmatprep.subr.mxu0 0.0
    %5317 = vmatpush1.msra.mxu0 0.0
    %5318 = vmatprep.subr.mxu0 0.0
    %5319 = vmatpush1.msra.mxu0 0.0
    %5320 = vmatprep.subr.mxu0 0.0
    %5321 = vmatpush1.msra.mxu0 0.0
    %5322 = vmatprep.mubr.f32.mxu0 0.0
    %v5323 = vand.u32 %v4983, 4294901760
    %v5324 = vsub.f32 %v4983, %v5323
    %5325 = vmatmul.mubr.f32.gmra.mrb[0].mxu0 %v5324
    %v5326 = vpop.f32.mrb[0].mxu0
    %v5327 = vadd.f32 %v5223, %v5326
    %v5328 = vpop.f32.mrb[0].mxu0
    %5329 = vdwg.mxu0
    %5330 = vmatprep.subr.mxu0 0.0
    %v5331 = vand.u32 %v4966, 4294901760
    %5332 = vmatpush1.msra.mxu0 %v5331
    %5333 = vmatprep.subr.mxu0 0.0
    %v5334 = vand.u32 %v4967, 4294901760
    %5335 = vmatpush1.msra.mxu0 %v5334
    %5336 = vmatprep.subr.mxu0 0.0
    %v5337 = vand.u32 %v4968, 4294901760
    %5338 = vmatpush1.msra.mxu0 %v5337
    %5339 = vmatprep.subr.mxu0 0.0
    %v5340 = vand.u32 %v4969, 4294901760
    %5341 = vmatpush1.msra.mxu0 %v5340
    %5342 = vmatprep.subr.mxu0 0.0
    %v5343 = vand.u32 %v4970, 4294901760
    %5344 = vmatpush1.msra.mxu0 %v5343
    %5345 = vmatprep.subr.mxu0 0.0
    %v5346 = vand.u32 %v4971, 4294901760
    %5347 = vmatpush1.msra.mxu0 %v5346
    %5348 = vmatprep.subr.mxu0 0.0
    %v5349 = vand.u32 %v4972, 4294901760
    %5350 = vmatpush1.msra.mxu0 %v5349
    %5351 = vmatprep.subr.mxu0 0.0
    %v5352 = vand.u32 %v4973, 4294901760
    %5353 = vmatpush1.msra.mxu0 %v5352
    %5354 = vmatprep.subr.mxu0 0.0
    %v5355 = vand.u32 %v4974, 4294901760
    %5356 = vmatpush1.msra.mxu0 %v5355
    %5357 = vmatprep.subr.mxu0 0.0
    %v5358 = vand.u32 %v4975, 4294901760
    %5359 = vmatpush1.msra.mxu0 %v5358
    %5360 = vmatprep.subr.mxu0 0.0
    %v5361 = vand.u32 %v4976, 4294901760
    %5362 = vmatpush1.msra.mxu0 %v5361
    %5363 = vmatprep.subr.mxu0 0.0
    %v5364 = vand.u32 %v4977, 4294901760
    %5365 = vmatpush1.msra.mxu0 %v5364
    %5366 = vmatprep.subr.mxu0 0.0
    %v5367 = vand.u32 %v4978, 4294901760
    %5368 = vmatpush1.msra.mxu0 %v5367
    %5369 = vmatprep.subr.mxu0 0.0
    %v5370 = vand.u32 %v4979, 4294901760
    %5371 = vmatpush1.msra.mxu0 %v5370
    %5372 = vmatprep.subr.mxu0 0.0
    %v5373 = vand.u32 %v4980, 4294901760
    %5374 = vmatpush1.msra.mxu0 %v5373
    %5375 = vmatprep.subr.mxu0 0.0
    %v5376 = vand.u32 %v4981, 4294901760
    %5377 = vmatpush1.msra.mxu0 %v5376
    %5378 = vmatprep.subr.mxu0 0.0
    %5379 = vmatpush1.msra.mxu0 0.0
    %5380 = vmatprep.subr.mxu0 0.0
    %5381 = vmatpush1.msra.mxu0 0.0
    %5382 = vmatprep.subr.mxu0 0.0
    %5383 = vmatpush1.msra.mxu0 0.0
    %5384 = vmatprep.subr.mxu0 0.0
    %5385 = vmatpush1.msra.mxu0 0.0
    %5386 = vmatprep.subr.mxu0 0.0
    %5387 = vmatpush1.msra.mxu0 0.0
    %5388 = vmatprep.subr.mxu0 0.0
    %5389 = vmatpush1.msra.mxu0 0.0
    %5390 = vmatprep.subr.mxu0 0.0
    %5391 = vmatpush1.msra.mxu0 0.0
    %5392 = vmatprep.subr.mxu0 0.0
    %5393 = vmatpush1.msra.mxu0 0.0
    %5394 = vmatprep.subr.mxu0 0.0
    %5395 = vmatpush1.msra.mxu0 0.0
    %5396 = vmatprep.subr.mxu0 0.0
    %5397 = vmatpush1.msra.mxu0 0.0
    %5398 = vmatprep.subr.mxu0 0.0
    %5399 = vmatpush1.msra.mxu0 0.0
    %5400 = vmatprep.subr.mxu0 0.0
    %5401 = vmatpush1.msra.mxu0 0.0
    %5402 = vmatprep.subr.mxu0 0.0
    %5403 = vmatpush1.msra.mxu0 0.0
    %5404 = vmatprep.subr.mxu0 0.0
    %5405 = vmatpush1.msra.mxu0 0.0
    %5406 = vmatprep.subr.mxu0 0.0
    %5407 = vmatpush1.msra.mxu0 0.0
    %5408 = vmatprep.subr.mxu0 0.0
    %5409 = vmatpush1.msra.mxu0 0.0
    %5410 = vmatprep.mubr.f32.mxu0 0.0
    %v5411 = vand.u32 %v4983, 4294901760
    %v5412 = vsub.f32 %v4983, %v5411
    %v5413 = vand.u32 %v5412, 4294901760
    %5414 = vmatmul.mubr.f32.gmra.mrb[0].mxu0 %v5413
    %v5415 = vpop.f32.mrb[0].mxu0
    %v5416 = vadd.f32 %v5327, %v5415
    %v5417 = vpop.f32.mrb[0].mxu0
    %5418 = vdwg.mxu0
    %5419 = vmatprep.subr.mxu0 0.0
    %v5420 = vand.u32 %v4966, 4294901760
    %v5421 = vsub.f32 %v4966, %v5420
    %v5422 = vand.u32 %v5421, 4294901760
    %5423 = vmatpush1.msra.mxu0 %v5422
    %5424 = vmatprep.subr.mxu0 0.0
    %v5425 = vand.u32 %v4967, 4294901760
    %v5426 = vsub.f32 %v4967, %v5425
    %v5427 = vand.u32 %v5426, 4294901760
    %5428 = vmatpush1.msra.mxu0 %v5427
    %5429 = vmatprep.subr.mxu0 0.0
    %v5430 = vand.u32 %v4968, 4294901760
    %v5431 = vsub.f32 %v4968, %v5430
    %v5432 = vand.u32 %v5431, 4294901760
    %5433 = vmatpush1.msra.mxu0 %v5432
    %5434 = vmatprep.subr.mxu0 0.0
    %v5435 = vand.u32 %v4969, 4294901760
    %v5436 = vsub.f32 %v4969, %v5435
    %v5437 = vand.u32 %v5436, 4294901760
    %5438 = vmatpush1.msra.mxu0 %v5437
    %5439 = vmatprep.subr.mxu0 0.0
    %v5440 = vand.u32 %v4970, 4294901760
    %v5441 = vsub.f32 %v4970, %v5440
    %v5442 = vand.u32 %v5441, 4294901760
    %5443 = vmatpush1.msra.mxu0 %v5442
    %5444 = vmatprep.subr.mxu0 0.0
    %v5445 = vand.u32 %v4971, 4294901760
    %v5446 = vsub.f32 %v4971, %v5445
    %v5447 = vand.u32 %v5446, 4294901760
    %5448 = vmatpush1.msra.mxu0 %v5447
    %5449 = vmatprep.subr.mxu0 0.0
    %v5450 = vand.u32 %v4972, 4294901760
    %v5451 = vsub.f32 %v4972, %v5450
    %v5452 = vand.u32 %v5451, 4294901760
    %5453 = vmatpush1.msra.mxu0 %v5452
    %5454 = vmatprep.subr.mxu0 0.0
    %v5455 = vand.u32 %v4973, 4294901760
    %v5456 = vsub.f32 %v4973, %v5455
    %v5457 = vand.u32 %v5456, 4294901760
    %5458 = vmatpush1.msra.mxu0 %v5457
    %5459 = vmatprep.subr.mxu0 0.0
    %v5460 = vand.u32 %v4974, 4294901760
    %v5461 = vsub.f32 %v4974, %v5460
    %v5462 = vand.u32 %v5461, 4294901760
    %5463 = vmatpush1.msra.mxu0 %v5462
    %5464 = vmatprep.subr.mxu0 0.0
    %v5465 = vand.u32 %v4975, 4294901760
    %v5466 = vsub.f32 %v4975, %v5465
    %v5467 = vand.u32 %v5466, 4294901760
    %5468 = vmatpush1.msra.mxu0 %v5467
    %5469 = vmatprep.subr.mxu0 0.0
    %v5470 = vand.u32 %v4976, 4294901760
    %v5471 = vsub.f32 %v4976, %v5470
    %v5472 = vand.u32 %v5471, 4294901760
    %5473 = vmatpush1.msra.mxu0 %v5472
    %5474 = vmatprep.subr.mxu0 0.0
    %v5475 = vand.u32 %v4977, 4294901760
    %v5476 = vsub.f32 %v4977, %v5475
    %v5477 = vand.u32 %v5476, 4294901760
    %5478 = vmatpush1.msra.mxu0 %v5477
    %5479 = vmatprep.subr.mxu0 0.0
    %v5480 = vand.u32 %v4978, 4294901760
    %v5481 = vsub.f32 %v4978, %v5480
    %v5482 = vand.u32 %v5481, 4294901760
    %5483 = vmatpush1.msra.mxu0 %v5482
    %5484 = vmatprep.subr.mxu0 0.0
    %v5485 = vand.u32 %v4979, 4294901760
    %v5486 = vsub.f32 %v4979, %v5485
    %v5487 = vand.u32 %v5486, 4294901760
    %5488 = vmatpush1.msra.mxu0 %v5487
    %5489 = vmatprep.subr.mxu0 0.0
    %v5490 = vand.u32 %v4980, 4294901760
    %v5491 = vsub.f32 %v4980, %v5490
    %v5492 = vand.u32 %v5491, 4294901760
    %5493 = vmatpush1.msra.mxu0 %v5492
    %5494 = vmatprep.subr.mxu0 0.0
    %v5495 = vand.u32 %v4981, 4294901760
    %v5496 = vsub.f32 %v4981, %v5495
    %v5497 = vand.u32 %v5496, 4294901760
    %5498 = vmatpush1.msra.mxu0 %v5497
    %5499 = vmatprep.subr.mxu0 0.0
    %5500 = vmatpush1.msra.mxu0 0.0
    %5501 = vmatprep.subr.mxu0 0.0
    %5502 = vmatpush1.msra.mxu0 0.0
    %5503 = vmatprep.subr.mxu0 0.0
    %5504 = vmatpush1.msra.mxu0 0.0
    %5505 = vmatprep.subr.mxu0 0.0
    %5506 = vmatpush1.msra.mxu0 0.0
    %5507 = vmatprep.subr.mxu0 0.0
    %5508 = vmatpush1.msra.mxu0 0.0
    %5509 = vmatprep.subr.mxu0 0.0
    %5510 = vmatpush1.msra.mxu0 0.0
    %5511 = vmatprep.subr.mxu0 0.0
    %5512 = vmatpush1.msra.mxu0 0.0
    %5513 = vmatprep.subr.mxu0 0.0
    %5514 = vmatpush1.msra.mxu0 0.0
    %5515 = vmatprep.subr.mxu0 0.0
    %5516 = vmatpush1.msra.mxu0 0.0
    %5517 = vmatprep.subr.mxu0 0.0
    %5518 = vmatpush1.msra.mxu0 0.0
    %5519 = vmatprep.subr.mxu0 0.0
    %5520 = vmatpush1.msra.mxu0 0.0
    %5521 = vmatprep.subr.mxu0 0.0
    %5522 = vmatpush1.msra.mxu0 0.0
    %5523 = vmatprep.subr.mxu0 0.0
    %5524 = vmatpush1.msra.mxu0 0.0
    %5525 = vmatprep.subr.mxu0 0.0
    %5526 = vmatpush1.msra.mxu0 0.0
    %5527 = vmatprep.subr.mxu0 0.0
    %5528 = vmatpush1.msra.mxu0 0.0
    %5529 = vmatprep.subr.mxu0 0.0
    %5530 = vmatpush1.msra.mxu0 0.0
    %5531 = vmatprep.mubr.f32.mxu0 0.0
    %v5532 = vand.u32 %v4983, 4294901760
    %5533 = vmatmul.mubr.f32.gmra.mrb[0].mxu0 %v5532
    %v5534 = vpop.f32.mrb[0].mxu0
    %v5535 = vadd.f32 %v5416, %v5534
    %v5536 = vpop.f32.mrb[0].mxu0
    %5537 = vdwg.mxu0
    %5538 = vmatprep.subr.mxu0 0.0
    %v5539 = vand.u32 %v4966, 4294901760
    %5540 = vmatpush1.msra.mxu0 %v5539
    %5541 = vmatprep.subr.mxu0 0.0
    %v5542 = vand.u32 %v4967, 4294901760
    %5543 = vmatpush1.msra.mxu0 %v5542
    %5544 = vmatprep.subr.mxu0 0.0
    %v5545 = vand.u32 %v4968, 4294901760
    %5546 = vmatpush1.msra.mxu0 %v5545
    %5547 = vmatprep.subr.mxu0 0.0
    %v5548 = vand.u32 %v4969, 4294901760
    %5549 = vmatpush1.msra.mxu0 %v5548
    %5550 = vmatprep.subr.mxu0 0.0
    %v5551 = vand.u32 %v4970, 4294901760
    %5552 = vmatpush1.msra.mxu0 %v5551
    %5553 = vmatprep.subr.mxu0 0.0
    %v5554 = vand.u32 %v4971, 4294901760
    %5555 = vmatpush1.msra.mxu0 %v5554
    %5556 = vmatprep.subr.mxu0 0.0
    %v5557 = vand.u32 %v4972, 4294901760
    %5558 = vmatpush1.msra.mxu0 %v5557
    %5559 = vmatprep.subr.mxu0 0.0
    %v5560 = vand.u32 %v4973, 4294901760
    %5561 = vmatpush1.msra.mxu0 %v5560
    %5562 = vmatprep.subr.mxu0 0.0
    %v5563 = vand.u32 %v4974, 4294901760
    %5564 = vmatpush1.msra.mxu0 %v5563
    %5565 = vmatprep.subr.mxu0 0.0
    %v5566 = vand.u32 %v4975, 4294901760
    %5567 = vmatpush1.msra.mxu0 %v5566
    %5568 = vmatprep.subr.mxu0 0.0
    %v5569 = vand.u32 %v4976, 4294901760
    %5570 = vmatpush1.msra.mxu0 %v5569
    %5571 = vmatprep.subr.mxu0 0.0
    %v5572 = vand.u32 %v4977, 4294901760
    %5573 = vmatpush1.msra.mxu0 %v5572
    %5574 = vmatprep.subr.mxu0 0.0
    %v5575 = vand.u32 %v4978, 4294901760
    %5576 = vmatpush1.msra.mxu0 %v5575
    %5577 = vmatprep.subr.mxu0 0.0
    %v5578 = vand.u32 %v4979, 4294901760
    %5579 = vmatpush1.msra.mxu0 %v5578
    %5580 = vmatprep.subr.mxu0 0.0
    %v5581 = vand.u32 %v4980, 4294901760
    %5582 = vmatpush1.msra.mxu0 %v5581
    %5583 = vmatprep.subr.mxu0 0.0
    %v5584 = vand.u32 %v4981, 4294901760
    %5585 = vmatpush1.msra.mxu0 %v5584
    %5586 = vmatprep.subr.mxu0 0.0
    %5587 = vmatpush1.msra.mxu0 0.0
    %5588 = vmatprep.subr.mxu0 0.0
    %5589 = vmatpush1.msra.mxu0 0.0
    %5590 = vmatprep.subr.mxu0 0.0
    %5591 = vmatpush1.msra.mxu0 0.0
    %5592 = vmatprep.subr.mxu0 0.0
    %5593 = vmatpush1.msra.mxu0 0.0
    %5594 = vmatprep.subr.mxu0 0.0
    %5595 = vmatpush1.msra.mxu0 0.0
    %5596 = vmatprep.subr.mxu0 0.0
    %5597 = vmatpush1.msra.mxu0 0.0
    %5598 = vmatprep.subr.mxu0 0.0
    %5599 = vmatpush1.msra.mxu0 0.0
    %5600 = vmatprep.subr.mxu0 0.0
    %5601 = vmatpush1.msra.mxu0 0.0
    %5602 = vmatprep.subr.mxu0 0.0
    %5603 = vmatpush1.msra.mxu0 0.0
    %5604 = vmatprep.subr.mxu0 0.0
    %5605 = vmatpush1.msra.mxu0 0.0
    %5606 = vmatprep.subr.mxu0 0.0
    %5607 = vmatpush1.msra.mxu0 0.0
    %5608 = vmatprep.subr.mxu0 0.0
    %5609 = vmatpush1.msra.mxu0 0.0
    %5610 = vmatprep.subr.mxu0 0.0
    %5611 = vmatpush1.msra.mxu0 0.0
    %5612 = vmatprep.subr.mxu0 0.0
    %5613 = vmatpush1.msra.mxu0 0.0
    %5614 = vmatprep.subr.mxu0 0.0
    %5615 = vmatpush1.msra.mxu0 0.0
    %5616 = vmatprep.subr.mxu0 0.0
    %5617 = vmatpush1.msra.mxu0 0.0
    %5618 = vmatprep.mubr.f32.mxu0 0.0
    %v5619 = vand.u32 %v4983, 4294901760
    %5620 = vmatmul.mubr.f32.gmra.mrb[0].mxu0 %v5619
    %v5621 = vpop.f32.mrb[0].mxu0
    %v5622 = vadd.f32 %v5535, %v5621
    %v5623 = vpop.f32.mrb[0].mxu0
    %5624 = vdwg.mxu0
    %v5625 = vadd.f32 %v4928, %v5622
    %5626 = vst [vmem:[%s3] sm:$0xff] %v5625
    // Predicated region
    $region18: #{linear_forward.1} parent=1 // pred_check
      _
    $region19: #{linear_forward.1} parent=1 // pred_check_branch
      %5628 = sbr.rel (0) target = $region21
    $region20: #{linear_forward.1} parent=1 // pred_region
      _
    $region21: #{linear_forward.1} parent=1 // pred_fallthru
      _
    // Predicated region
    $region22: #{linear_forward.1} parent=1 // pred_check
      _
    $region23: #{linear_forward.1} parent=1 // pred_check_branch
      %5630 = sbr.rel (0) target = $region25
    $region24: #{linear_forward.1} parent=1 // pred_region
      _
    $region25: #{linear_forward.1} parent=1 // pred_fallthru
      _
    %5631 = vsyncpa [#allocation3], 1

</llo_original>
